<compile_context>
chip_gen: v7x
topology: tpu7x:2x2x1
jax: 0.10.0
libtpu: 0.0.40
codegen_flags: <defaults>
</compile_context>

<pallas_src>
import functools

import jax
import jax.numpy as jnp
from jax.experimental import pallas as pl
from jax.experimental.pallas import tpu as pltpu

# --------------------------------------------------------------------------
# Small synthetic BERT config (shapes scaled down; structure identical).
# --------------------------------------------------------------------------
VOCAB_SIZE = 100
TYPE_VOCAB_SIZE = 2
MAX_POS = 32
HIDDEN = 32            # bert.config.hidden_size
NUM_HEADS = 4
HEAD_DIM = HIDDEN // NUM_HEADS
INTERMEDIATE = 64
NUM_LAYERS = 2
FC_HIDDEN = 16         # classifier hidden_size (256 in the original)
NUM_CLASSES = 6        # num_articles (depends on CSV in the original)
LN_EPS = 1e-12

BATCH = 2
SEQ = 8

_vmem = pl.BlockSpec(memory_space=pltpu.MemorySpace.VMEM)

# Per-layer parameter ordering inside the flat kernel argument list.
_LAYER_KEYS = ("wqkv", "bqkv", "wo", "bo", "attn_ln_g", "attn_ln_b",
               "w_inter", "b_inter", "w_out", "b_out", "ffn_ln_g", "ffn_ln_b")
_N_LAYER_PARAMS = len(_LAYER_KEYS)   # 12


# --------------------------------------------------------------------------
# In-kernel helpers (traced inside the Pallas kernel body)
# --------------------------------------------------------------------------
def _mm(a, b):
    """MXU matmul: bf16 operands, f32 accumulation."""
    return jnp.dot(a.astype(jnp.bfloat16), b.astype(jnp.bfloat16),
                   preferred_element_type=jnp.float32)


def _bmm(eq, a, b):
    """Batched (3-D) MXU einsum: bf16 operands, f32 accumulation."""
    return jnp.einsum(eq, a.astype(jnp.bfloat16), b.astype(jnp.bfloat16),
                      preferred_element_type=jnp.float32)


def _ln(x, g, b, eps=LN_EPS):
    """LayerNorm over the last dim, f32 math (v5e-safe: no bf16 vector math)."""
    x = x.astype(jnp.float32)
    mu = jnp.mean(x, axis=-1, keepdims=True)
    var = jnp.mean(jnp.square(x - mu), axis=-1, keepdims=True)
    return ((x - mu) * jax.lax.rsqrt(var + eps) * g.astype(jnp.float32)
            + b.astype(jnp.float32))


def _attn_softmax(s):
    """Numerically-stable softmax over the last dim; approx reciprocal on EUP."""
    s = s - jnp.max(s, axis=-1, keepdims=True)
    p = jnp.exp(s)
    return p * pl.reciprocal(jnp.sum(p, axis=-1, keepdims=True), approx=True)


def _ffn_ln(x, wi, bi, w2, b2, ln2g, ln2b):
    """FFN (GELU) + residual-add + LayerNorm."""
    # TODO(synk): HF BERT uses exact erf-GELU; tanh approximation used here
    #             (erf is not guaranteed to lower in Mosaic).
    inter = jax.nn.gelu(_mm(x, wi) + bi.astype(jnp.float32), approximate=True)
    ffn = _mm(inter, w2) + b2.astype(jnp.float32)
    return _ln(ffn + x, ln2g, ln2b)


def _full_layer(x, maskb3, refs, *, batch, seq, hidden, num_heads):
    """Full encoder layer over all B*S rows. x: (B*S, H) f32 -> (B*S, H) f32."""
    B, S, H, nH = batch, seq, hidden, num_heads
    d = H // nH
    (wqkv_r, bqkv_r, wo_r, bo_r, ln1g_r, ln1b_r,
     wi_r, bi_r, w2_r, b2_r, ln2g_r, ln2b_r) = refs

    # Fused QKV projection; 1/sqrt(head_dim) is pre-folded into the Q columns.
    qkv = _mm(x, wqkv_r[...]) + bqkv_r[...].astype(jnp.float32)      # (B*S, 3H)

    # Per-head attention with 3-D einsums; hoisted mask broadcast; contexts are
    # concatenated along the lane dim so the output projection is ONE matmul.
    ctx_heads = []
    for h in range(nH):
        q = qkv[:, h * d:(h + 1) * d].reshape(B, S, d)
        k = qkv[:, H + h * d:H + (h + 1) * d].reshape(B, S, d)
        v = qkv[:, 2 * H + h * d:2 * H + (h + 1) * d].reshape(B, S, d)
        p = _attn_softmax(_bmm("bqd,bkd->bqk", q, k) + maskb3)       # (B, S, S)
        ctx_heads.append(_bmm("bqk,bkd->bqd", p, v).reshape(B * S, d))
    ctx = jnp.concatenate(ctx_heads, axis=-1)                        # (B*S, H)

    attn = _mm(ctx, wo_r[...]) + bo_r[...].astype(jnp.float32)
    x = _ln(attn + x, ln1g_r[...], ln1b_r[...])                      # residual + LN
    return _ffn_ln(x, wi_r[...], bi_r[...], w2_r[...], b2_r[...],
                   ln2g_r[...], ln2b_r[...])


def _cls_layer(x, maskb3, refs, *, batch, seq, hidden, num_heads):
    """Last encoder layer: K/V for all rows, everything else only for CLS rows.

    x: (B*S, H) f32 -> (B, H) f32 (the final-layer CLS hidden states).
    """
    B, S, H, nH = batch, seq, hidden, num_heads
    d = H // nH
    (wqkv_r, bqkv_r, wo_r, bo_r, ln1g_r, ln1b_r,
     wi_r, bi_r, w2_r, b2_r, ln2g_r, ln2b_r) = refs

    wqkv = wqkv_r[...]                                               # (H, 3H) bf16
    bqkv = bqkv_r[...].astype(jnp.float32)                           # (1, 3H)

    x_cls = x.reshape(B, S, H)[:, 0, :]                              # (B, H) CLS rows

    # K/V projection for all rows; Q projection only for CLS rows.
    kv = _mm(x, wqkv[:, H:]) + bqkv[:, H:]                           # (B*S, 2H)
    q_cls = _mm(x_cls, wqkv[:, :H]) + bqkv[:, :H]                    # (B, H), scale folded

    ctx_heads = []
    for h in range(nH):
        q = q_cls[:, h * d:(h + 1) * d].reshape(B, 1, d)
        k = kv[:, h * d:(h + 1) * d].reshape(B, S, d)
        v = kv[:, H + h * d:H + (h + 1) * d].reshape(B, S, d)
        p = _attn_softmax(_bmm("bqd,bkd->bqk", q, k) + maskb3)       # (B, 1, S)
        ctx_heads.append(_bmm("bqk,bkd->bqd", p, v).reshape(B, d))
    ctx = jnp.concatenate(ctx_heads, axis=-1)                        # (B, H)

    attn = _mm(ctx, wo_r[...]) + bo_r[...].astype(jnp.float32)
    xc = _ln(attn + x_cls, ln1g_r[...], ln1b_r[...])
    return _ffn_ln(xc, wi_r[...], bi_r[...], w2_r[...], b2_r[...],
                   ln2g_r[...], ln2b_r[...])                         # (B, H)


# --------------------------------------------------------------------------
# The single fused Pallas kernel: embedding LN -> N encoder layers -> head.
# --------------------------------------------------------------------------
def _fused_forward_kernel(emb_ref, maskb_ref, emb_ln_g_ref, emb_ln_b_ref, *rest,
                          batch, seq, hidden, num_heads, num_layers):
    o_ref = rest[-1]
    layer_refs = rest[:num_layers * _N_LAYER_PARAMS]
    fc1w_ref, fc1b_ref, fc2w_ref, fc2b_ref = rest[num_layers * _N_LAYER_PARAMS:-1]

    # (B, 1, S) additive attention bias, broadcast hoisted out of all loops.
    maskb3 = maskb_ref[...].astype(jnp.float32)[:, None, :]

    # Embedding LayerNorm fused in (no standalone pallas_call, no HBM round-trip).
    x = _ln(emb_ref[...], emb_ln_g_ref[...], emb_ln_b_ref[...])     # (B*S, H) f32

    for li in range(num_layers):
        refs = layer_refs[li * _N_LAYER_PARAMS:(li + 1) * _N_LAYER_PARAMS]
        if li < num_layers - 1:
            x = _full_layer(x, maskb3, refs, batch=batch, seq=seq,
                            hidden=hidden, num_heads=num_heads)      # (B*S, H)
        else:
            cls = _cls_layer(x, maskb3, refs, batch=batch, seq=seq,
                             hidden=hidden, num_heads=num_heads)     # (B, H)

    # Classifier head on CLS rows only. dropout(0.3) is identity at inference.
    h1 = jnp.maximum(_mm(cls, fc1w_ref[...]) + fc1b_ref[...].astype(jnp.float32), 0.0)
    logits = _mm(h1, fc2w_ref[...]) + fc2b_ref[...].astype(jnp.float32)
    logits = logits - jnp.max(logits, axis=-1, keepdims=True)
    e = jnp.exp(logits)
    probs = e / jnp.sum(e, axis=-1, keepdims=True)   # exact divide: rows sum to 1
    o_ref[...] = probs.astype(o_ref.dtype)


# --------------------------------------------------------------------------
# Deterministic parameter init (synthetic; no checkpoint loading).
# Matmul weights stored bf16; biases / LN params f32.
# --------------------------------------------------------------------------
def init_params(key):
    params = {}

    def normal_bf16(key, shape, scale=0.02):
        return (scale * jax.random.normal(key, shape)).astype(jnp.bfloat16)

    def normal_f32(key, shape, scale=0.02):
        return (scale * jax.random.normal(key, shape)).astype(jnp.float32)

    keys = iter(jax.random.split(key, 256))
    q_scale = 1.0 / float(HEAD_DIM) ** 0.5

    params["word_emb"] = normal_f32(next(keys), (VOCAB_SIZE, HIDDEN))
    params["pos_emb"] = normal_f32(next(keys), (MAX_POS, HIDDEN))
    params["type_emb"] = normal_f32(next(keys), (TYPE_VOCAB_SIZE, HIDDEN))
    params["emb_ln_g"] = jnp.ones((1, HIDDEN), jnp.float32)
    params["emb_ln_b"] = jnp.zeros((1, HIDDEN), jnp.float32)

    layers = []
    for _ in range(NUM_LAYERS):
        wq = normal_f32(next(keys), (HIDDEN, HIDDEN))
        wk = normal_f32(next(keys), (HIDDEN, HIDDEN))
        wv = normal_f32(next(keys), (HIDDEN, HIDDEN))
        bq = jnp.zeros((1, HIDDEN), jnp.float32)
        bk = jnp.zeros((1, HIDDEN), jnp.float32)
        bv = jnp.zeros((1, HIDDEN), jnp.float32)
        lp = {
            # Fused QKV weight/bias; 1/sqrt(head_dim) folded into the Q slice (in f32,
            # before the bf16 cast) so the kernel never scales the SxS score tile.
            "wqkv": jnp.concatenate([wq * q_scale, wk, wv], axis=1).astype(jnp.bfloat16),
            "bqkv": jnp.concatenate([bq * q_scale, bk, bv], axis=1),        # (1, 3H) f32
            "wo": normal_bf16(next(keys), (HIDDEN, HIDDEN)),
            "bo": jnp.zeros((1, HIDDEN), jnp.float32),
            "attn_ln_g": jnp.ones((1, HIDDEN), jnp.float32),
            "attn_ln_b": jnp.zeros((1, HIDDEN), jnp.float32),
            "w_inter": normal_bf16(next(keys), (HIDDEN, INTERMEDIATE)),
            "b_inter": jnp.zeros((1, INTERMEDIATE), jnp.float32),
            "w_out": normal_bf16(next(keys), (INTERMEDIATE, HIDDEN)),
            "b_out": jnp.zeros((1, HIDDEN), jnp.float32),
            "ffn_ln_g": jnp.ones((1, HIDDEN), jnp.float32),
            "ffn_ln_b": jnp.zeros((1, HIDDEN), jnp.float32),
        }
        layers.append(lp)
    params["layers"] = layers

    # classifier head (fc1: H -> FC_HIDDEN, fc2: FC_HIDDEN -> NUM_CLASSES)
    params["fc1_w"] = normal_bf16(next(keys), (HIDDEN, FC_HIDDEN))
    params["fc1_b"] = jnp.zeros((1, FC_HIDDEN), jnp.float32)
    params["fc2_w"] = normal_bf16(next(keys), (FC_HIDDEN, NUM_CLASSES))
    params["fc2_b"] = jnp.zeros((1, NUM_CLASSES), jnp.float32)
    return params


# --------------------------------------------------------------------------
# Forward pass: embedding gather in XLA glue, then ONE pallas_call.
# --------------------------------------------------------------------------
def bert_article_classifier_forward(params, input_ids, attention_mask):
    B, S = input_ids.shape
    H = HIDDEN

    # ---- embedding sum (gather stays in XLA glue; LN happens inside the kernel) ----
    # TODO(synk): token_type_ids are assumed all-zero (matches the reference usage).
    pos_ids = jnp.arange(S, dtype=jnp.int32)
    emb = (jnp.take(params["word_emb"], input_ids, axis=0)
           + jnp.take(params["pos_emb"], pos_ids, axis=0)[None, :, :]
           + params["type_emb"][0][None, None, :])                    # (B, S, H) f32
    emb2d = emb.reshape(B * S, H)

    # ---- tiny (B, S) additive attention bias; broadcast happens once in-kernel ----
    mask_bias = (1.0 - attention_mask.astype(jnp.float32)) * -10000.0  # (B, S)

    args = [emb2d, mask_bias, params["emb_ln_g"], params["emb_ln_b"]]
    for lp in params["layers"]:
        args += [lp[k] for k in _LAYER_KEYS]
    args += [params["fc1_w"], params["fc1_b"], params["fc2_w"], params["fc2_b"]]

    kern = functools.partial(_fused_forward_kernel, batch=B, seq=S, hidden=H,
                             num_heads=NUM_HEADS, num_layers=len(params["layers"]))
    return pl.pallas_call(
        kern,
        out_shape=jax.ShapeDtypeStruct((B, NUM_CLASSES), jnp.float32),
        in_specs=[_vmem] * len(args),
        out_specs=_vmem,
    )(*args)


# --------------------------------------------------------------------------
if __name__ == "__main__":
    key = jax.random.PRNGKey(0)
    k_params, k_ids, k_len = jax.random.split(key, 3)

    params = init_params(k_params)

    input_ids = jax.random.randint(k_ids, (BATCH, SEQ), 0, VOCAB_SIZE, dtype=jnp.int32)
    # simple padding mask: last two tokens of batch element 1 are padding
    attention_mask = jnp.ones((BATCH, SEQ), jnp.int32).at[1, SEQ - 2:].set(0)

    probs = bert_article_classifier_forward(params, input_ids, attention_mask)
    probs = jax.block_until_ready(probs)

    assert probs.shape == (BATCH, NUM_CLASSES)
    assert bool(jnp.all(jnp.isfinite(probs)))
    # softmax rows must sum to 1
    assert bool(jnp.allclose(jnp.sum(probs, axis=1), 1.0, atol=1e-5))

    print("KERNEL_OK")
</pallas_src>

<mosaic_0001>
module attributes {stable_mosaic.version = 11 : i64} {
  func.func @_fused_forward_kernel(%arg0: memref<16x32xf32, #tpu.memory_space<vmem>>, %arg1: memref<2x8xf32, #tpu.memory_space<vmem>>, %arg2: memref<1x32xf32, #tpu.memory_space<vmem>>, %arg3: memref<1x32xf32, #tpu.memory_space<vmem>>, %arg4: memref<32x96xbf16, #tpu.memory_space<vmem>>, %arg5: memref<1x96xf32, #tpu.memory_space<vmem>>, %arg6: memref<32x32xbf16, #tpu.memory_space<vmem>>, %arg7: memref<1x32xf32, #tpu.memory_space<vmem>>, %arg8: memref<1x32xf32, #tpu.memory_space<vmem>>, %arg9: memref<1x32xf32, #tpu.memory_space<vmem>>, %arg10: memref<32x64xbf16, #tpu.memory_space<vmem>>, %arg11: memref<1x64xf32, #tpu.memory_space<vmem>>, %arg12: memref<64x32xbf16, #tpu.memory_space<vmem>>, %arg13: memref<1x32xf32, #tpu.memory_space<vmem>>, %arg14: memref<1x32xf32, #tpu.memory_space<vmem>>, %arg15: memref<1x32xf32, #tpu.memory_space<vmem>>, %arg16: memref<32x96xbf16, #tpu.memory_space<vmem>>, %arg17: memref<1x96xf32, #tpu.memory_space<vmem>>, %arg18: memref<32x32xbf16, #tpu.memory_space<vmem>>, %arg19: memref<1x32xf32, #tpu.memory_space<vmem>>, %arg20: memref<1x32xf32, #tpu.memory_space<vmem>>, %arg21: memref<1x32xf32, #tpu.memory_space<vmem>>, %arg22: memref<32x64xbf16, #tpu.memory_space<vmem>>, %arg23: memref<1x64xf32, #tpu.memory_space<vmem>>, %arg24: memref<64x32xbf16, #tpu.memory_space<vmem>>, %arg25: memref<1x32xf32, #tpu.memory_space<vmem>>, %arg26: memref<1x32xf32, #tpu.memory_space<vmem>>, %arg27: memref<1x32xf32, #tpu.memory_space<vmem>>, %arg28: memref<32x16xbf16, #tpu.memory_space<vmem>>, %arg29: memref<1x16xf32, #tpu.memory_space<vmem>>, %arg30: memref<16x6xbf16, #tpu.memory_space<vmem>>, %arg31: memref<1x6xf32, #tpu.memory_space<vmem>>, %arg32: memref<2x6xf32, #tpu.memory_space<vmem>>) attributes {dimension_semantics = [], scalar_prefetch = 0 : i64, scratch_operands = 0 : i64, tpu.core_type = #tpu.core_type<tc>} {
    %c0 = arith.constant 0 : index
    %c0_0 = arith.constant 0 : index
    %0 = vector.load %arg1[%c0, %c0_0] : memref<2x8xf32, #tpu.memory_space<vmem>>, vector<2x8xf32>
    %1 = vector.shape_cast %0 : vector<2x8xf32> to vector<2x1x8xf32>
    %c0_1 = arith.constant 0 : index
    %c0_2 = arith.constant 0 : index
    %2 = vector.load %arg0[%c0_1, %c0_2] : memref<16x32xf32, #tpu.memory_space<vmem>>, vector<16x32xf32>
    %c0_3 = arith.constant 0 : index
    %c0_4 = arith.constant 0 : index
    %3 = vector.load %arg2[%c0_3, %c0_4] : memref<1x32xf32, #tpu.memory_space<vmem>>, vector<1x32xf32>
    %c0_5 = arith.constant 0 : index
    %c0_6 = arith.constant 0 : index
    %4 = vector.load %arg3[%c0_5, %c0_6] : memref<1x32xf32, #tpu.memory_space<vmem>>, vector<1x32xf32>
    %cst = arith.constant dense<0.000000e+00> : vector<16xf32>
    %5 = vector.multi_reduction <add>, %2, %cst [1] : vector<16x32xf32> to vector<16xf32>
    %6 = vector.shape_cast %5 : vector<16xf32> to vector<16x1xf32>
    %cst_7 = arith.constant 3.200000e+01 : f32
    %7 = vector.broadcast %cst_7 : f32 to vector<16x1xf32>
    %8 = arith.divf %6, %7 : vector<16x1xf32>
    %9 = vector.broadcast %8 : vector<16x1xf32> to vector<16x32xf32>
    %10 = arith.subf %2, %9 : vector<16x32xf32>
    %11 = arith.mulf %10, %10 : vector<16x32xf32>
    %cst_8 = arith.constant dense<0.000000e+00> : vector<16xf32>
    %12 = vector.multi_reduction <add>, %11, %cst_8 [1] : vector<16x32xf32> to vector<16xf32>
    %13 = vector.shape_cast %12 : vector<16xf32> to vector<16x1xf32>
    %cst_9 = arith.constant 3.200000e+01 : f32
    %14 = vector.broadcast %cst_9 : f32 to vector<16x1xf32>
    %15 = arith.divf %13, %14 : vector<16x1xf32>
    %16 = vector.broadcast %8 : vector<16x1xf32> to vector<16x32xf32>
    %17 = arith.subf %2, %16 : vector<16x32xf32>
    %cst_10 = arith.constant 9.99999996E-13 : f32
    %18 = vector.broadcast %cst_10 : f32 to vector<16x1xf32>
    %19 = arith.addf %15, %18 : vector<16x1xf32>
    %20 = math.rsqrt %19 : vector<16x1xf32>
    %21 = vector.broadcast %20 : vector<16x1xf32> to vector<16x32xf32>
    %22 = arith.mulf %17, %21 : vector<16x32xf32>
    %23 = vector.broadcast %3 : vector<1x32xf32> to vector<16x32xf32>
    %24 = arith.mulf %22, %23 : vector<16x32xf32>
    %25 = vector.broadcast %4 : vector<1x32xf32> to vector<16x32xf32>
    %26 = arith.addf %24, %25 : vector<16x32xf32>
    %c0_11 = arith.constant 0 : index
    %c0_12 = arith.constant 0 : index
    %27 = vector.load %arg4[%c0_11, %c0_12] : memref<32x96xbf16, #tpu.memory_space<vmem>>, vector<32x96xbf16>
    %28 = arith.truncf %26 : vector<16x32xf32> to vector<16x32xbf16>
    %cst_13 = arith.constant dense<0.000000e+00> : vector<16x96xf32>
    %29 = tpu.matmul %28, %27, %cst_13 {dimension_numbers = #tpu.dot_dimension_numbers<[1], [0], [0], [1], [0, 0, 1, 1], [], []>} : vector<16x32xbf16>, vector<32x96xbf16>, vector<16x96xf32> -> vector<16x96xf32>
    %c0_14 = arith.constant 0 : index
    %c0_15 = arith.constant 0 : index
    %30 = vector.load %arg5[%c0_14, %c0_15] : memref<1x96xf32, #tpu.memory_space<vmem>>, vector<1x96xf32>
    %31 = vector.broadcast %30 : vector<1x96xf32> to vector<16x96xf32>
    %32 = arith.addf %29, %31 : vector<16x96xf32>
    %33 = vector.extract_strided_slice %32 {offsets = [0, 0], sizes = [16, 8], strides = [1, 1]} : vector<16x96xf32> to vector<16x8xf32>
    %34 = vector.shape_cast %33 : vector<16x8xf32> to vector<2x8x8xf32>
    %35 = vector.extract_strided_slice %32 {offsets = [0, 32], sizes = [16, 8], strides = [1, 1]} : vector<16x96xf32> to vector<16x8xf32>
    %36 = vector.shape_cast %35 : vector<16x8xf32> to vector<2x8x8xf32>
    %37 = vector.extract_strided_slice %32 {offsets = [0, 64], sizes = [16, 8], strides = [1, 1]} : vector<16x96xf32> to vector<16x8xf32>
    %38 = vector.shape_cast %37 : vector<16x8xf32> to vector<2x8x8xf32>
    %39 = arith.truncf %34 : vector<2x8x8xf32> to vector<2x8x8xbf16>
    %40 = arith.truncf %36 : vector<2x8x8xf32> to vector<2x8x8xbf16>
    "tpu.trace_start"() <{level = 10 : i32, message = "bqd,bkd->bqk"}> : () -> ()
    %cst_16 = arith.constant dense<0.000000e+00> : vector<2x8x8xf32>
    %41 = tpu.matmul %39, %40, %cst_16 {dimension_numbers = #tpu.dot_dimension_numbers<[2], [2], [1], [1], [0, 0, 0, 1, 1, 1], [0], [0]>} : vector<2x8x8xbf16>, vector<2x8x8xbf16>, vector<2x8x8xf32> -> vector<2x8x8xf32>
    "tpu.trace_stop"() : () -> ()
    %42 = vector.broadcast %1 : vector<2x1x8xf32> to vector<2x8x8xf32>
    %43 = arith.addf %41, %42 : vector<2x8x8xf32>
    %cst_17 = arith.constant dense<0xFF800000> : vector<2x8xf32>
    %44 = vector.multi_reduction <maximumf>, %43, %cst_17 [2] : vector<2x8x8xf32> to vector<2x8xf32>
    %45 = vector.shape_cast %44 : vector<2x8xf32> to vector<2x8x1xf32>
    %46 = vector.broadcast %45 : vector<2x8x1xf32> to vector<2x8x8xf32>
    %47 = arith.subf %43, %46 : vector<2x8x8xf32>
    %48 = math.exp %47 : vector<2x8x8xf32>
    %cst_18 = arith.constant dense<0.000000e+00> : vector<2x8xf32>
    %49 = vector.multi_reduction <add>, %48, %cst_18 [2] : vector<2x8x8xf32> to vector<2x8xf32>
    %50 = vector.shape_cast %49 : vector<2x8xf32> to vector<2x8x1xf32>
    %51 = tpu.reciprocal %50 {approx = true} : vector<2x8x1xf32> -> vector<2x8x1xf32>
    %52 = vector.broadcast %51 : vector<2x8x1xf32> to vector<2x8x8xf32>
    %53 = arith.mulf %48, %52 : vector<2x8x8xf32>
    %54 = arith.truncf %53 : vector<2x8x8xf32> to vector<2x8x8xbf16>
    %55 = arith.truncf %38 : vector<2x8x8xf32> to vector<2x8x8xbf16>
    "tpu.trace_start"() <{level = 10 : i32, message = "bqk,bkd->bqd"}> : () -> ()
    %cst_19 = arith.constant dense<0.000000e+00> : vector<2x8x8xf32>
    %56 = tpu.matmul %54, %55, %cst_19 {dimension_numbers = #tpu.dot_dimension_numbers<[2], [1], [1], [2], [0, 0, 0, 1, 1, 2], [0], [0]>} : vector<2x8x8xbf16>, vector<2x8x8xbf16>, vector<2x8x8xf32> -> vector<2x8x8xf32>
    "tpu.trace_stop"() : () -> ()
    %57 = vector.shape_cast %56 : vector<2x8x8xf32> to vector<16x8xf32>
    %58 = vector.extract_strided_slice %32 {offsets = [0, 8], sizes = [16, 8], strides = [1, 1]} : vector<16x96xf32> to vector<16x8xf32>
    %59 = vector.shape_cast %58 : vector<16x8xf32> to vector<2x8x8xf32>
    %60 = vector.extract_strided_slice %32 {offsets = [0, 40], sizes = [16, 8], strides = [1, 1]} : vector<16x96xf32> to vector<16x8xf32>
    %61 = vector.shape_cast %60 : vector<16x8xf32> to vector<2x8x8xf32>
    %62 = vector.extract_strided_slice %32 {offsets = [0, 72], sizes = [16, 8], strides = [1, 1]} : vector<16x96xf32> to vector<16x8xf32>
    %63 = vector.shape_cast %62 : vector<16x8xf32> to vector<2x8x8xf32>
    %64 = arith.truncf %59 : vector<2x8x8xf32> to vector<2x8x8xbf16>
    %65 = arith.truncf %61 : vector<2x8x8xf32> to vector<2x8x8xbf16>
    "tpu.trace_start"() <{level = 10 : i32, message = "bqd,bkd->bqk"}> : () -> ()
    %cst_20 = arith.constant dense<0.000000e+00> : vector<2x8x8xf32>
    %66 = tpu.matmul %64, %65, %cst_20 {dimension_numbers = #tpu.dot_dimension_numbers<[2], [2], [1], [1], [0, 0, 0, 1, 1, 1], [0], [0]>} : vector<2x8x8xbf16>, vector<2x8x8xbf16>, vector<2x8x8xf32> -> vector<2x8x8xf32>
    "tpu.trace_stop"() : () -> ()
    %67 = vector.broadcast %1 : vector<2x1x8xf32> to vector<2x8x8xf32>
    %68 = arith.addf %66, %67 : vector<2x8x8xf32>
    %cst_21 = arith.constant dense<0xFF800000> : vector<2x8xf32>
    %69 = vector.multi_reduction <maximumf>, %68, %cst_21 [2] : vector<2x8x8xf32> to vector<2x8xf32>
    %70 = vector.shape_cast %69 : vector<2x8xf32> to vector<2x8x1xf32>
    %71 = vector.broadcast %70 : vector<2x8x1xf32> to vector<2x8x8xf32>
    %72 = arith.subf %68, %71 : vector<2x8x8xf32>
    %73 = math.exp %72 : vector<2x8x8xf32>
    %cst_22 = arith.constant dense<0.000000e+00> : vector<2x8xf32>
    %74 = vector.multi_reduction <add>, %73, %cst_22 [2] : vector<2x8x8xf32> to vector<2x8xf32>
    %75 = vector.shape_cast %74 : vector<2x8xf32> to vector<2x8x1xf32>
    %76 = tpu.reciprocal %75 {approx = true} : vector<2x8x1xf32> -> vector<2x8x1xf32>
    %77 = vector.broadcast %76 : vector<2x8x1xf32> to vector<2x8x8xf32>
    %78 = arith.mulf %73, %77 : vector<2x8x8xf32>
    %79 = arith.truncf %78 : vector<2x8x8xf32> to vector<2x8x8xbf16>
    %80 = arith.truncf %63 : vector<2x8x8xf32> to vector<2x8x8xbf16>
    "tpu.trace_start"() <{level = 10 : i32, message = "bqk,bkd->bqd"}> : () -> ()
    %cst_23 = arith.constant dense<0.000000e+00> : vector<2x8x8xf32>
    %81 = tpu.matmul %79, %80, %cst_23 {dimension_numbers = #tpu.dot_dimension_numbers<[2], [1], [1], [2], [0, 0, 0, 1, 1, 2], [0], [0]>} : vector<2x8x8xbf16>, vector<2x8x8xbf16>, vector<2x8x8xf32> -> vector<2x8x8xf32>
    "tpu.trace_stop"() : () -> ()
    %82 = vector.shape_cast %81 : vector<2x8x8xf32> to vector<16x8xf32>
    %83 = vector.extract_strided_slice %32 {offsets = [0, 16], sizes = [16, 8], strides = [1, 1]} : vector<16x96xf32> to vector<16x8xf32>
    %84 = vector.shape_cast %83 : vector<16x8xf32> to vector<2x8x8xf32>
    %85 = vector.extract_strided_slice %32 {offsets = [0, 48], sizes = [16, 8], strides = [1, 1]} : vector<16x96xf32> to vector<16x8xf32>
    %86 = vector.shape_cast %85 : vector<16x8xf32> to vector<2x8x8xf32>
    %87 = vector.extract_strided_slice %32 {offsets = [0, 80], sizes = [16, 8], strides = [1, 1]} : vector<16x96xf32> to vector<16x8xf32>
    %88 = vector.shape_cast %87 : vector<16x8xf32> to vector<2x8x8xf32>
    %89 = arith.truncf %84 : vector<2x8x8xf32> to vector<2x8x8xbf16>
    %90 = arith.truncf %86 : vector<2x8x8xf32> to vector<2x8x8xbf16>
    "tpu.trace_start"() <{level = 10 : i32, message = "bqd,bkd->bqk"}> : () -> ()
    %cst_24 = arith.constant dense<0.000000e+00> : vector<2x8x8xf32>
    %91 = tpu.matmul %89, %90, %cst_24 {dimension_numbers = #tpu.dot_dimension_numbers<[2], [2], [1], [1], [0, 0, 0, 1, 1, 1], [0], [0]>} : vector<2x8x8xbf16>, vector<2x8x8xbf16>, vector<2x8x8xf32> -> vector<2x8x8xf32>
    "tpu.trace_stop"() : () -> ()
    %92 = vector.broadcast %1 : vector<2x1x8xf32> to vector<2x8x8xf32>
    %93 = arith.addf %91, %92 : vector<2x8x8xf32>
    %cst_25 = arith.constant dense<0xFF800000> : vector<2x8xf32>
    %94 = vector.multi_reduction <maximumf>, %93, %cst_25 [2] : vector<2x8x8xf32> to vector<2x8xf32>
    %95 = vector.shape_cast %94 : vector<2x8xf32> to vector<2x8x1xf32>
    %96 = vector.broadcast %95 : vector<2x8x1xf32> to vector<2x8x8xf32>
    %97 = arith.subf %93, %96 : vector<2x8x8xf32>
    %98 = math.exp %97 : vector<2x8x8xf32>
    %cst_26 = arith.constant dense<0.000000e+00> : vector<2x8xf32>
    %99 = vector.multi_reduction <add>, %98, %cst_26 [2] : vector<2x8x8xf32> to vector<2x8xf32>
    %100 = vector.shape_cast %99 : vector<2x8xf32> to vector<2x8x1xf32>
    %101 = tpu.reciprocal %100 {approx = true} : vector<2x8x1xf32> -> vector<2x8x1xf32>
    %102 = vector.broadcast %101 : vector<2x8x1xf32> to vector<2x8x8xf32>
    %103 = arith.mulf %98, %102 : vector<2x8x8xf32>
    %104 = arith.truncf %103 : vector<2x8x8xf32> to vector<2x8x8xbf16>
    %105 = arith.truncf %88 : vector<2x8x8xf32> to vector<2x8x8xbf16>
    "tpu.trace_start"() <{level = 10 : i32, message = "bqk,bkd->bqd"}> : () -> ()
    %cst_27 = arith.constant dense<0.000000e+00> : vector<2x8x8xf32>
    %106 = tpu.matmul %104, %105, %cst_27 {dimension_numbers = #tpu.dot_dimension_numbers<[2], [1], [1], [2], [0, 0, 0, 1, 1, 2], [0], [0]>} : vector<2x8x8xbf16>, vector<2x8x8xbf16>, vector<2x8x8xf32> -> vector<2x8x8xf32>
    "tpu.trace_stop"() : () -> ()
    %107 = vector.shape_cast %106 : vector<2x8x8xf32> to vector<16x8xf32>
    %108 = vector.extract_strided_slice %32 {offsets = [0, 24], sizes = [16, 8], strides = [1, 1]} : vector<16x96xf32> to vector<16x8xf32>
    %109 = vector.shape_cast %108 : vector<16x8xf32> to vector<2x8x8xf32>
    %110 = vector.extract_strided_slice %32 {offsets = [0, 56], sizes = [16, 8], strides = [1, 1]} : vector<16x96xf32> to vector<16x8xf32>
    %111 = vector.shape_cast %110 : vector<16x8xf32> to vector<2x8x8xf32>
    %112 = vector.extract_strided_slice %32 {offsets = [0, 88], sizes = [16, 8], strides = [1, 1]} : vector<16x96xf32> to vector<16x8xf32>
    %113 = vector.shape_cast %112 : vector<16x8xf32> to vector<2x8x8xf32>
    %114 = arith.truncf %109 : vector<2x8x8xf32> to vector<2x8x8xbf16>
    %115 = arith.truncf %111 : vector<2x8x8xf32> to vector<2x8x8xbf16>
    "tpu.trace_start"() <{level = 10 : i32, message = "bqd,bkd->bqk"}> : () -> ()
    %cst_28 = arith.constant dense<0.000000e+00> : vector<2x8x8xf32>
    %116 = tpu.matmul %114, %115, %cst_28 {dimension_numbers = #tpu.dot_dimension_numbers<[2], [2], [1], [1], [0, 0, 0, 1, 1, 1], [0], [0]>} : vector<2x8x8xbf16>, vector<2x8x8xbf16>, vector<2x8x8xf32> -> vector<2x8x8xf32>
    "tpu.trace_stop"() : () -> ()
    %117 = vector.broadcast %1 : vector<2x1x8xf32> to vector<2x8x8xf32>
    %118 = arith.addf %116, %117 : vector<2x8x8xf32>
    %cst_29 = arith.constant dense<0xFF800000> : vector<2x8xf32>
    %119 = vector.multi_reduction <maximumf>, %118, %cst_29 [2] : vector<2x8x8xf32> to vector<2x8xf32>
    %120 = vector.shape_cast %119 : vector<2x8xf32> to vector<2x8x1xf32>
    %121 = vector.broadcast %120 : vector<2x8x1xf32> to vector<2x8x8xf32>
    %122 = arith.subf %118, %121 : vector<2x8x8xf32>
    %123 = math.exp %122 : vector<2x8x8xf32>
    %cst_30 = arith.constant dense<0.000000e+00> : vector<2x8xf32>
    %124 = vector.multi_reduction <add>, %123, %cst_30 [2] : vector<2x8x8xf32> to vector<2x8xf32>
    %125 = vector.shape_cast %124 : vector<2x8xf32> to vector<2x8x1xf32>
    %126 = tpu.reciprocal %125 {approx = true} : vector<2x8x1xf32> -> vector<2x8x1xf32>
    %127 = vector.broadcast %126 : vector<2x8x1xf32> to vector<2x8x8xf32>
    %128 = arith.mulf %123, %127 : vector<2x8x8xf32>
    %129 = arith.truncf %128 : vector<2x8x8xf32> to vector<2x8x8xbf16>
    %130 = arith.truncf %113 : vector<2x8x8xf32> to vector<2x8x8xbf16>
    "tpu.trace_start"() <{level = 10 : i32, message = "bqk,bkd->bqd"}> : () -> ()
    %cst_31 = arith.constant dense<0.000000e+00> : vector<2x8x8xf32>
    %131 = tpu.matmul %129, %130, %cst_31 {dimension_numbers = #tpu.dot_dimension_numbers<[2], [1], [1], [2], [0, 0, 0, 1, 1, 2], [0], [0]>} : vector<2x8x8xbf16>, vector<2x8x8xbf16>, vector<2x8x8xf32> -> vector<2x8x8xf32>
    "tpu.trace_stop"() : () -> ()
    %132 = vector.shape_cast %131 : vector<2x8x8xf32> to vector<16x8xf32>
    %133 = tpu.concatenate %57, %82, %107, %132 in 1 : vector<16x8xf32>, vector<16x8xf32>, vector<16x8xf32>, vector<16x8xf32> -> vector<16x32xf32>
    %c0_32 = arith.constant 0 : index
    %c0_33 = arith.constant 0 : index
    %134 = vector.load %arg6[%c0_32, %c0_33] : memref<32x32xbf16, #tpu.memory_space<vmem>>, vector<32x32xbf16>
    %135 = arith.truncf %133 : vector<16x32xf32> to vector<16x32xbf16>
    %cst_34 = arith.constant dense<0.000000e+00> : vector<16x32xf32>
    %136 = tpu.matmul %135, %134, %cst_34 {dimension_numbers = #tpu.dot_dimension_numbers<[1], [0], [0], [1], [0, 0, 1, 1], [], []>} : vector<16x32xbf16>, vector<32x32xbf16>, vector<16x32xf32> -> vector<16x32xf32>
    %c0_35 = arith.constant 0 : index
    %c0_36 = arith.constant 0 : index
    %137 = vector.load %arg7[%c0_35, %c0_36] : memref<1x32xf32, #tpu.memory_space<vmem>>, vector<1x32xf32>
    %138 = vector.broadcast %137 : vector<1x32xf32> to vector<16x32xf32>
    %139 = arith.addf %136, %138 : vector<16x32xf32>
    %140 = arith.addf %139, %26 : vector<16x32xf32>
    %c0_37 = arith.constant 0 : index
    %c0_38 = arith.constant 0 : index
    %141 = vector.load %arg8[%c0_37, %c0_38] : memref<1x32xf32, #tpu.memory_space<vmem>>, vector<1x32xf32>
    %c0_39 = arith.constant 0 : index
    %c0_40 = arith.constant 0 : index
    %142 = vector.load %arg9[%c0_39, %c0_40] : memref<1x32xf32, #tpu.memory_space<vmem>>, vector<1x32xf32>
    %cst_41 = arith.constant dense<0.000000e+00> : vector<16xf32>
    %143 = vector.multi_reduction <add>, %140, %cst_41 [1] : vector<16x32xf32> to vector<16xf32>
    %144 = vector.shape_cast %143 : vector<16xf32> to vector<16x1xf32>
    %cst_42 = arith.constant 3.200000e+01 : f32
    %145 = vector.broadcast %cst_42 : f32 to vector<16x1xf32>
    %146 = arith.divf %144, %145 : vector<16x1xf32>
    %147 = vector.broadcast %146 : vector<16x1xf32> to vector<16x32xf32>
    %148 = arith.subf %140, %147 : vector<16x32xf32>
    %149 = arith.mulf %148, %148 : vector<16x32xf32>
    %cst_43 = arith.constant dense<0.000000e+00> : vector<16xf32>
    %150 = vector.multi_reduction <add>, %149, %cst_43 [1] : vector<16x32xf32> to vector<16xf32>
    %151 = vector.shape_cast %150 : vector<16xf32> to vector<16x1xf32>
    %cst_44 = arith.constant 3.200000e+01 : f32
    %152 = vector.broadcast %cst_44 : f32 to vector<16x1xf32>
    %153 = arith.divf %151, %152 : vector<16x1xf32>
    %154 = vector.broadcast %146 : vector<16x1xf32> to vector<16x32xf32>
    %155 = arith.subf %140, %154 : vector<16x32xf32>
    %cst_45 = arith.constant 9.99999996E-13 : f32
    %156 = vector.broadcast %cst_45 : f32 to vector<16x1xf32>
    %157 = arith.addf %153, %156 : vector<16x1xf32>
    %158 = math.rsqrt %157 : vector<16x1xf32>
    %159 = vector.broadcast %158 : vector<16x1xf32> to vector<16x32xf32>
    %160 = arith.mulf %155, %159 : vector<16x32xf32>
    %161 = vector.broadcast %141 : vector<1x32xf32> to vector<16x32xf32>
    %162 = arith.mulf %160, %161 : vector<16x32xf32>
    %163 = vector.broadcast %142 : vector<1x32xf32> to vector<16x32xf32>
    %164 = arith.addf %162, %163 : vector<16x32xf32>
    %c0_46 = arith.constant 0 : index
    %c0_47 = arith.constant 0 : index
    %165 = vector.load %arg10[%c0_46, %c0_47] : memref<32x64xbf16, #tpu.memory_space<vmem>>, vector<32x64xbf16>
    %c0_48 = arith.constant 0 : index
    %c0_49 = arith.constant 0 : index
    %166 = vector.load %arg11[%c0_48, %c0_49] : memref<1x64xf32, #tpu.memory_space<vmem>>, vector<1x64xf32>
    %c0_50 = arith.constant 0 : index
    %c0_51 = arith.constant 0 : index
    %167 = vector.load %arg12[%c0_50, %c0_51] : memref<64x32xbf16, #tpu.memory_space<vmem>>, vector<64x32xbf16>
    %c0_52 = arith.constant 0 : index
    %c0_53 = arith.constant 0 : index
    %168 = vector.load %arg13[%c0_52, %c0_53] : memref<1x32xf32, #tpu.memory_space<vmem>>, vector<1x32xf32>
    %c0_54 = arith.constant 0 : index
    %c0_55 = arith.constant 0 : index
    %169 = vector.load %arg14[%c0_54, %c0_55] : memref<1x32xf32, #tpu.memory_space<vmem>>, vector<1x32xf32>
    %c0_56 = arith.constant 0 : index
    %c0_57 = arith.constant 0 : index
    %170 = vector.load %arg15[%c0_56, %c0_57] : memref<1x32xf32, #tpu.memory_space<vmem>>, vector<1x32xf32>
    %171 = arith.truncf %164 : vector<16x32xf32> to vector<16x32xbf16>
    %cst_58 = arith.constant dense<0.000000e+00> : vector<16x64xf32>
    %172 = tpu.matmul %171, %165, %cst_58 {dimension_numbers = #tpu.dot_dimension_numbers<[1], [0], [0], [1], [0, 0, 1, 1], [], []>} : vector<16x32xbf16>, vector<32x64xbf16>, vector<16x64xf32> -> vector<16x64xf32>
    %173 = vector.broadcast %166 : vector<1x64xf32> to vector<16x64xf32>
    %174 = arith.addf %172, %173 : vector<16x64xf32>
    %175 = arith.mulf %174, %174 : vector<16x64xf32>
    %176 = arith.mulf %174, %175 : vector<16x64xf32>
    %cst_59 = arith.constant 4.471500e-02 : f32
    %177 = vector.broadcast %cst_59 : f32 to vector<16x64xf32>
    %178 = arith.mulf %177, %176 : vector<16x64xf32>
    %179 = arith.addf %174, %178 : vector<16x64xf32>
    %cst_60 = arith.constant 0.797884583 : f32
    %180 = vector.broadcast %cst_60 : f32 to vector<16x64xf32>
    %181 = arith.mulf %180, %179 : vector<16x64xf32>
    %182 = math.tanh %181 : vector<16x64xf32>
    %cst_61 = arith.constant 1.000000e+00 : f32
    %183 = vector.broadcast %cst_61 : f32 to vector<16x64xf32>
    %184 = arith.addf %183, %182 : vector<16x64xf32>
    %cst_62 = arith.constant 5.000000e-01 : f32
    %185 = vector.broadcast %cst_62 : f32 to vector<16x64xf32>
    %186 = arith.mulf %185, %184 : vector<16x64xf32>
    %187 = arith.mulf %174, %186 : vector<16x64xf32>
    %188 = arith.truncf %187 : vector<16x64xf32> to vector<16x64xbf16>
    %cst_63 = arith.constant dense<0.000000e+00> : vector<16x32xf32>
    %189 = tpu.matmul %188, %167, %cst_63 {dimension_numbers = #tpu.dot_dimension_numbers<[1], [0], [0], [1], [0, 0, 1, 1], [], []>} : vector<16x64xbf16>, vector<64x32xbf16>, vector<16x32xf32> -> vector<16x32xf32>
    %190 = vector.broadcast %168 : vector<1x32xf32> to vector<16x32xf32>
    %191 = arith.addf %189, %190 : vector<16x32xf32>
    %192 = arith.addf %191, %164 : vector<16x32xf32>
    %cst_64 = arith.constant dense<0.000000e+00> : vector<16xf32>
    %193 = vector.multi_reduction <add>, %192, %cst_64 [1] : vector<16x32xf32> to vector<16xf32>
    %194 = vector.shape_cast %193 : vector<16xf32> to vector<16x1xf32>
    %cst_65 = arith.constant 3.200000e+01 : f32
    %195 = vector.broadcast %cst_65 : f32 to vector<16x1xf32>
    %196 = arith.divf %194, %195 : vector<16x1xf32>
    %197 = vector.broadcast %196 : vector<16x1xf32> to vector<16x32xf32>
    %198 = arith.subf %192, %197 : vector<16x32xf32>
    %199 = arith.mulf %198, %198 : vector<16x32xf32>
    %cst_66 = arith.constant dense<0.000000e+00> : vector<16xf32>
    %200 = vector.multi_reduction <add>, %199, %cst_66 [1] : vector<16x32xf32> to vector<16xf32>
    %201 = vector.shape_cast %200 : vector<16xf32> to vector<16x1xf32>
    %cst_67 = arith.constant 3.200000e+01 : f32
    %202 = vector.broadcast %cst_67 : f32 to vector<16x1xf32>
    %203 = arith.divf %201, %202 : vector<16x1xf32>
    %204 = vector.broadcast %196 : vector<16x1xf32> to vector<16x32xf32>
    %205 = arith.subf %192, %204 : vector<16x32xf32>
    %cst_68 = arith.constant 9.99999996E-13 : f32
    %206 = vector.broadcast %cst_68 : f32 to vector<16x1xf32>
    %207 = arith.addf %203, %206 : vector<16x1xf32>
    %208 = math.rsqrt %207 : vector<16x1xf32>
    %209 = vector.broadcast %208 : vector<16x1xf32> to vector<16x32xf32>
    %210 = arith.mulf %205, %209 : vector<16x32xf32>
    %211 = vector.broadcast %169 : vector<1x32xf32> to vector<16x32xf32>
    %212 = arith.mulf %210, %211 : vector<16x32xf32>
    %213 = vector.broadcast %170 : vector<1x32xf32> to vector<16x32xf32>
    %214 = arith.addf %212, %213 : vector<16x32xf32>
    %c0_69 = arith.constant 0 : index
    %c0_70 = arith.constant 0 : index
    %215 = vector.load %arg16[%c0_69, %c0_70] : memref<32x96xbf16, #tpu.memory_space<vmem>>, vector<32x96xbf16>
    %c0_71 = arith.constant 0 : index
    %c0_72 = arith.constant 0 : index
    %216 = vector.load %arg17[%c0_71, %c0_72] : memref<1x96xf32, #tpu.memory_space<vmem>>, vector<1x96xf32>
    %217 = vector.shape_cast %214 : vector<16x32xf32> to vector<2x8x32xf32>
    %218 = vector.extract_strided_slice %217 {offsets = [0, 0, 0], sizes = [2, 1, 32], strides = [1, 1, 1]} : vector<2x8x32xf32> to vector<2x1x32xf32>
    %219 = vector.shape_cast %218 : vector<2x1x32xf32> to vector<2x32xf32>
    %220 = vector.extract_strided_slice %215 {offsets = [0, 32], sizes = [32, 64], strides = [1, 1]} : vector<32x96xbf16> to vector<32x64xbf16>
    %221 = arith.truncf %214 : vector<16x32xf32> to vector<16x32xbf16>
    %cst_73 = arith.constant dense<0.000000e+00> : vector<16x64xf32>
    %222 = tpu.matmul %221, %220, %cst_73 {dimension_numbers = #tpu.dot_dimension_numbers<[1], [0], [0], [1], [0, 0, 1, 1], [], []>} : vector<16x32xbf16>, vector<32x64xbf16>, vector<16x64xf32> -> vector<16x64xf32>
    %223 = vector.extract_strided_slice %216 {offsets = [0, 32], sizes = [1, 64], strides = [1, 1]} : vector<1x96xf32> to vector<1x64xf32>
    %224 = vector.broadcast %223 : vector<1x64xf32> to vector<16x64xf32>
    %225 = arith.addf %222, %224 : vector<16x64xf32>
    %226 = vector.extract_strided_slice %215 {offsets = [0, 0], sizes = [32, 32], strides = [1, 1]} : vector<32x96xbf16> to vector<32x32xbf16>
    %227 = arith.truncf %219 : vector<2x32xf32> to vector<2x32xbf16>
    %cst_74 = arith.constant dense<0.000000e+00> : vector<2x32xf32>
    %228 = tpu.matmul %227, %226, %cst_74 {dimension_numbers = #tpu.dot_dimension_numbers<[1], [0], [0], [1], [0, 0, 1, 1], [], []>} : vector<2x32xbf16>, vector<32x32xbf16>, vector<2x32xf32> -> vector<2x32xf32>
    %229 = vector.extract_strided_slice %216 {offsets = [0, 0], sizes = [1, 32], strides = [1, 1]} : vector<1x96xf32> to vector<1x32xf32>
    %230 = vector.broadcast %229 : vector<1x32xf32> to vector<2x32xf32>
    %231 = arith.addf %228, %230 : vector<2x32xf32>
    %232 = vector.extract_strided_slice %231 {offsets = [0, 0], sizes = [2, 8], strides = [1, 1]} : vector<2x32xf32> to vector<2x8xf32>
    %233 = vector.shape_cast %232 : vector<2x8xf32> to vector<2x1x8xf32>
    %234 = vector.extract_strided_slice %225 {offsets = [0, 0], sizes = [16, 8], strides = [1, 1]} : vector<16x64xf32> to vector<16x8xf32>
    %235 = vector.shape_cast %234 : vector<16x8xf32> to vector<2x8x8xf32>
    %236 = vector.extract_strided_slice %225 {offsets = [0, 32], sizes = [16, 8], strides = [1, 1]} : vector<16x64xf32> to vector<16x8xf32>
    %237 = vector.shape_cast %236 : vector<16x8xf32> to vector<2x8x8xf32>
    %238 = arith.truncf %233 : vector<2x1x8xf32> to vector<2x1x8xbf16>
    %239 = arith.truncf %235 : vector<2x8x8xf32> to vector<2x8x8xbf16>
    "tpu.trace_start"() <{level = 10 : i32, message = "bqd,bkd->bqk"}> : () -> ()
    %cst_75 = arith.constant dense<0.000000e+00> : vector<2x1x8xf32>
    %240 = tpu.matmul %238, %239, %cst_75 {dimension_numbers = #tpu.dot_dimension_numbers<[2], [2], [1], [1], [0, 0, 0, 1, 1, 1], [0], [0]>} : vector<2x1x8xbf16>, vector<2x8x8xbf16>, vector<2x1x8xf32> -> vector<2x1x8xf32>
    "tpu.trace_stop"() : () -> ()
    %241 = arith.addf %240, %1 : vector<2x1x8xf32>
    %cst_76 = arith.constant dense<0xFF800000> : vector<2x1xf32>
    %242 = vector.multi_reduction <maximumf>, %241, %cst_76 [2] : vector<2x1x8xf32> to vector<2x1xf32>
    %243 = vector.shape_cast %242 : vector<2x1xf32> to vector<2x1x1xf32>
    %244 = vector.broadcast %243 : vector<2x1x1xf32> to vector<2x1x8xf32>
    %245 = arith.subf %241, %244 : vector<2x1x8xf32>
    %246 = math.exp %245 : vector<2x1x8xf32>
    %cst_77 = arith.constant dense<0.000000e+00> : vector<2x1xf32>
    %247 = vector.multi_reduction <add>, %246, %cst_77 [2] : vector<2x1x8xf32> to vector<2x1xf32>
    %248 = vector.shape_cast %247 : vector<2x1xf32> to vector<2x1x1xf32>
    %249 = tpu.reciprocal %248 {approx = true} : vector<2x1x1xf32> -> vector<2x1x1xf32>
    %250 = vector.broadcast %249 : vector<2x1x1xf32> to vector<2x1x8xf32>
    %251 = arith.mulf %246, %250 : vector<2x1x8xf32>
    %252 = arith.truncf %251 : vector<2x1x8xf32> to vector<2x1x8xbf16>
    %253 = arith.truncf %237 : vector<2x8x8xf32> to vector<2x8x8xbf16>
    "tpu.trace_start"() <{level = 10 : i32, message = "bqk,bkd->bqd"}> : () -> ()
    %cst_78 = arith.constant dense<0.000000e+00> : vector<2x1x8xf32>
    %254 = tpu.matmul %252, %253, %cst_78 {dimension_numbers = #tpu.dot_dimension_numbers<[2], [1], [1], [2], [0, 0, 0, 1, 1, 2], [0], [0]>} : vector<2x1x8xbf16>, vector<2x8x8xbf16>, vector<2x1x8xf32> -> vector<2x1x8xf32>
    "tpu.trace_stop"() : () -> ()
    %255 = vector.shape_cast %254 : vector<2x1x8xf32> to vector<2x8xf32>
    %256 = vector.extract_strided_slice %231 {offsets = [0, 8], sizes = [2, 8], strides = [1, 1]} : vector<2x32xf32> to vector<2x8xf32>
    %257 = vector.shape_cast %256 : vector<2x8xf32> to vector<2x1x8xf32>
    %258 = vector.extract_strided_slice %225 {offsets = [0, 8], sizes = [16, 8], strides = [1, 1]} : vector<16x64xf32> to vector<16x8xf32>
    %259 = vector.shape_cast %258 : vector<16x8xf32> to vector<2x8x8xf32>
    %260 = vector.extract_strided_slice %225 {offsets = [0, 40], sizes = [16, 8], strides = [1, 1]} : vector<16x64xf32> to vector<16x8xf32>
    %261 = vector.shape_cast %260 : vector<16x8xf32> to vector<2x8x8xf32>
    %262 = arith.truncf %257 : vector<2x1x8xf32> to vector<2x1x8xbf16>
    %263 = arith.truncf %259 : vector<2x8x8xf32> to vector<2x8x8xbf16>
    "tpu.trace_start"() <{level = 10 : i32, message = "bqd,bkd->bqk"}> : () -> ()
    %cst_79 = arith.constant dense<0.000000e+00> : vector<2x1x8xf32>
    %264 = tpu.matmul %262, %263, %cst_79 {dimension_numbers = #tpu.dot_dimension_numbers<[2], [2], [1], [1], [0, 0, 0, 1, 1, 1], [0], [0]>} : vector<2x1x8xbf16>, vector<2x8x8xbf16>, vector<2x1x8xf32> -> vector<2x1x8xf32>
    "tpu.trace_stop"() : () -> ()
    %265 = arith.addf %264, %1 : vector<2x1x8xf32>
    %cst_80 = arith.constant dense<0xFF800000> : vector<2x1xf32>
    %266 = vector.multi_reduction <maximumf>, %265, %cst_80 [2] : vector<2x1x8xf32> to vector<2x1xf32>
    %267 = vector.shape_cast %266 : vector<2x1xf32> to vector<2x1x1xf32>
    %268 = vector.broadcast %267 : vector<2x1x1xf32> to vector<2x1x8xf32>
    %269 = arith.subf %265, %268 : vector<2x1x8xf32>
    %270 = math.exp %269 : vector<2x1x8xf32>
    %cst_81 = arith.constant dense<0.000000e+00> : vector<2x1xf32>
    %271 = vector.multi_reduction <add>, %270, %cst_81 [2] : vector<2x1x8xf32> to vector<2x1xf32>
    %272 = vector.shape_cast %271 : vector<2x1xf32> to vector<2x1x1xf32>
    %273 = tpu.reciprocal %272 {approx = true} : vector<2x1x1xf32> -> vector<2x1x1xf32>
    %274 = vector.broadcast %273 : vector<2x1x1xf32> to vector<2x1x8xf32>
    %275 = arith.mulf %270, %274 : vector<2x1x8xf32>
    %276 = arith.truncf %275 : vector<2x1x8xf32> to vector<2x1x8xbf16>
    %277 = arith.truncf %261 : vector<2x8x8xf32> to vector<2x8x8xbf16>
    "tpu.trace_start"() <{level = 10 : i32, message = "bqk,bkd->bqd"}> : () -> ()
    %cst_82 = arith.constant dense<0.000000e+00> : vector<2x1x8xf32>
    %278 = tpu.matmul %276, %277, %cst_82 {dimension_numbers = #tpu.dot_dimension_numbers<[2], [1], [1], [2], [0, 0, 0, 1, 1, 2], [0], [0]>} : vector<2x1x8xbf16>, vector<2x8x8xbf16>, vector<2x1x8xf32> -> vector<2x1x8xf32>
    "tpu.trace_stop"() : () -> ()
    %279 = vector.shape_cast %278 : vector<2x1x8xf32> to vector<2x8xf32>
    %280 = vector.extract_strided_slice %231 {offsets = [0, 16], sizes = [2, 8], strides = [1, 1]} : vector<2x32xf32> to vector<2x8xf32>
    %281 = vector.shape_cast %280 : vector<2x8xf32> to vector<2x1x8xf32>
    %282 = vector.extract_strided_slice %225 {offsets = [0, 16], sizes = [16, 8], strides = [1, 1]} : vector<16x64xf32> to vector<16x8xf32>
    %283 = vector.shape_cast %282 : vector<16x8xf32> to vector<2x8x8xf32>
    %284 = vector.extract_strided_slice %225 {offsets = [0, 48], sizes = [16, 8], strides = [1, 1]} : vector<16x64xf32> to vector<16x8xf32>
    %285 = vector.shape_cast %284 : vector<16x8xf32> to vector<2x8x8xf32>
    %286 = arith.truncf %281 : vector<2x1x8xf32> to vector<2x1x8xbf16>
    %287 = arith.truncf %283 : vector<2x8x8xf32> to vector<2x8x8xbf16>
    "tpu.trace_start"() <{level = 10 : i32, message = "bqd,bkd->bqk"}> : () -> ()
    %cst_83 = arith.constant dense<0.000000e+00> : vector<2x1x8xf32>
    %288 = tpu.matmul %286, %287, %cst_83 {dimension_numbers = #tpu.dot_dimension_numbers<[2], [2], [1], [1], [0, 0, 0, 1, 1, 1], [0], [0]>} : vector<2x1x8xbf16>, vector<2x8x8xbf16>, vector<2x1x8xf32> -> vector<2x1x8xf32>
    "tpu.trace_stop"() : () -> ()
    %289 = arith.addf %288, %1 : vector<2x1x8xf32>
    %cst_84 = arith.constant dense<0xFF800000> : vector<2x1xf32>
    %290 = vector.multi_reduction <maximumf>, %289, %cst_84 [2] : vector<2x1x8xf32> to vector<2x1xf32>
    %291 = vector.shape_cast %290 : vector<2x1xf32> to vector<2x1x1xf32>
    %292 = vector.broadcast %291 : vector<2x1x1xf32> to vector<2x1x8xf32>
    %293 = arith.subf %289, %292 : vector<2x1x8xf32>
    %294 = math.exp %293 : vector<2x1x8xf32>
    %cst_85 = arith.constant dense<0.000000e+00> : vector<2x1xf32>
    %295 = vector.multi_reduction <add>, %294, %cst_85 [2] : vector<2x1x8xf32> to vector<2x1xf32>
    %296 = vector.shape_cast %295 : vector<2x1xf32> to vector<2x1x1xf32>
    %297 = tpu.reciprocal %296 {approx = true} : vector<2x1x1xf32> -> vector<2x1x1xf32>
    %298 = vector.broadcast %297 : vector<2x1x1xf32> to vector<2x1x8xf32>
    %299 = arith.mulf %294, %298 : vector<2x1x8xf32>
    %300 = arith.truncf %299 : vector<2x1x8xf32> to vector<2x1x8xbf16>
    %301 = arith.truncf %285 : vector<2x8x8xf32> to vector<2x8x8xbf16>
    "tpu.trace_start"() <{level = 10 : i32, message = "bqk,bkd->bqd"}> : () -> ()
    %cst_86 = arith.constant dense<0.000000e+00> : vector<2x1x8xf32>
    %302 = tpu.matmul %300, %301, %cst_86 {dimension_numbers = #tpu.dot_dimension_numbers<[2], [1], [1], [2], [0, 0, 0, 1, 1, 2], [0], [0]>} : vector<2x1x8xbf16>, vector<2x8x8xbf16>, vector<2x1x8xf32> -> vector<2x1x8xf32>
    "tpu.trace_stop"() : () -> ()
    %303 = vector.shape_cast %302 : vector<2x1x8xf32> to vector<2x8xf32>
    %304 = vector.extract_strided_slice %231 {offsets = [0, 24], sizes = [2, 8], strides = [1, 1]} : vector<2x32xf32> to vector<2x8xf32>
    %305 = vector.shape_cast %304 : vector<2x8xf32> to vector<2x1x8xf32>
    %306 = vector.extract_strided_slice %225 {offsets = [0, 24], sizes = [16, 8], strides = [1, 1]} : vector<16x64xf32> to vector<16x8xf32>
    %307 = vector.shape_cast %306 : vector<16x8xf32> to vector<2x8x8xf32>
    %308 = vector.extract_strided_slice %225 {offsets = [0, 56], sizes = [16, 8], strides = [1, 1]} : vector<16x64xf32> to vector<16x8xf32>
    %309 = vector.shape_cast %308 : vector<16x8xf32> to vector<2x8x8xf32>
    %310 = arith.truncf %305 : vector<2x1x8xf32> to vector<2x1x8xbf16>
    %311 = arith.truncf %307 : vector<2x8x8xf32> to vector<2x8x8xbf16>
    "tpu.trace_start"() <{level = 10 : i32, message = "bqd,bkd->bqk"}> : () -> ()
    %cst_87 = arith.constant dense<0.000000e+00> : vector<2x1x8xf32>
    %312 = tpu.matmul %310, %311, %cst_87 {dimension_numbers = #tpu.dot_dimension_numbers<[2], [2], [1], [1], [0, 0, 0, 1, 1, 1], [0], [0]>} : vector<2x1x8xbf16>, vector<2x8x8xbf16>, vector<2x1x8xf32> -> vector<2x1x8xf32>
    "tpu.trace_stop"() : () -> ()
    %313 = arith.addf %312, %1 : vector<2x1x8xf32>
    %cst_88 = arith.constant dense<0xFF800000> : vector<2x1xf32>
    %314 = vector.multi_reduction <maximumf>, %313, %cst_88 [2] : vector<2x1x8xf32> to vector<2x1xf32>
    %315 = vector.shape_cast %314 : vector<2x1xf32> to vector<2x1x1xf32>
    %316 = vector.broadcast %315 : vector<2x1x1xf32> to vector<2x1x8xf32>
    %317 = arith.subf %313, %316 : vector<2x1x8xf32>
    %318 = math.exp %317 : vector<2x1x8xf32>
    %cst_89 = arith.constant dense<0.000000e+00> : vector<2x1xf32>
    %319 = vector.multi_reduction <add>, %318, %cst_89 [2] : vector<2x1x8xf32> to vector<2x1xf32>
    %320 = vector.shape_cast %319 : vector<2x1xf32> to vector<2x1x1xf32>
    %321 = tpu.reciprocal %320 {approx = true} : vector<2x1x1xf32> -> vector<2x1x1xf32>
    %322 = vector.broadcast %321 : vector<2x1x1xf32> to vector<2x1x8xf32>
    %323 = arith.mulf %318, %322 : vector<2x1x8xf32>
    %324 = arith.truncf %323 : vector<2x1x8xf32> to vector<2x1x8xbf16>
    %325 = arith.truncf %309 : vector<2x8x8xf32> to vector<2x8x8xbf16>
    "tpu.trace_start"() <{level = 10 : i32, message = "bqk,bkd->bqd"}> : () -> ()
    %cst_90 = arith.constant dense<0.000000e+00> : vector<2x1x8xf32>
    %326 = tpu.matmul %324, %325, %cst_90 {dimension_numbers = #tpu.dot_dimension_numbers<[2], [1], [1], [2], [0, 0, 0, 1, 1, 2], [0], [0]>} : vector<2x1x8xbf16>, vector<2x8x8xbf16>, vector<2x1x8xf32> -> vector<2x1x8xf32>
    "tpu.trace_stop"() : () -> ()
    %327 = vector.shape_cast %326 : vector<2x1x8xf32> to vector<2x8xf32>
    %328 = tpu.concatenate %255, %279, %303, %327 in 1 : vector<2x8xf32>, vector<2x8xf32>, vector<2x8xf32>, vector<2x8xf32> -> vector<2x32xf32>
    %c0_91 = arith.constant 0 : index
    %c0_92 = arith.constant 0 : index
    %329 = vector.load %arg18[%c0_91, %c0_92] : memref<32x32xbf16, #tpu.memory_space<vmem>>, vector<32x32xbf16>
    %330 = arith.truncf %328 : vector<2x32xf32> to vector<2x32xbf16>
    %cst_93 = arith.constant dense<0.000000e+00> : vector<2x32xf32>
    %331 = tpu.matmul %330, %329, %cst_93 {dimension_numbers = #tpu.dot_dimension_numbers<[1], [0], [0], [1], [0, 0, 1, 1], [], []>} : vector<2x32xbf16>, vector<32x32xbf16>, vector<2x32xf32> -> vector<2x32xf32>
    %c0_94 = arith.constant 0 : index
    %c0_95 = arith.constant 0 : index
    %332 = vector.load %arg19[%c0_94, %c0_95] : memref<1x32xf32, #tpu.memory_space<vmem>>, vector<1x32xf32>
    %333 = vector.broadcast %332 : vector<1x32xf32> to vector<2x32xf32>
    %334 = arith.addf %331, %333 : vector<2x32xf32>
    %335 = arith.addf %334, %219 : vector<2x32xf32>
    %c0_96 = arith.constant 0 : index
    %c0_97 = arith.constant 0 : index
    %336 = vector.load %arg20[%c0_96, %c0_97] : memref<1x32xf32, #tpu.memory_space<vmem>>, vector<1x32xf32>
    %c0_98 = arith.constant 0 : index
    %c0_99 = arith.constant 0 : index
    %337 = vector.load %arg21[%c0_98, %c0_99] : memref<1x32xf32, #tpu.memory_space<vmem>>, vector<1x32xf32>
    %cst_100 = arith.constant dense<0.000000e+00> : vector<2xf32>
    %338 = vector.multi_reduction <add>, %335, %cst_100 [1] : vector<2x32xf32> to vector<2xf32>
    %339 = vector.shape_cast %338 : vector<2xf32> to vector<2x1xf32>
    %cst_101 = arith.constant 3.200000e+01 : f32
    %340 = vector.broadcast %cst_101 : f32 to vector<2x1xf32>
    %341 = arith.divf %339, %340 : vector<2x1xf32>
    %342 = vector.broadcast %341 : vector<2x1xf32> to vector<2x32xf32>
    %343 = arith.subf %335, %342 : vector<2x32xf32>
    %344 = arith.mulf %343, %343 : vector<2x32xf32>
    %cst_102 = arith.constant dense<0.000000e+00> : vector<2xf32>
    %345 = vector.multi_reduction <add>, %344, %cst_102 [1] : vector<2x32xf32> to vector<2xf32>
    %346 = vector.shape_cast %345 : vector<2xf32> to vector<2x1xf32>
    %cst_103 = arith.constant 3.200000e+01 : f32
    %347 = vector.broadcast %cst_103 : f32 to vector<2x1xf32>
    %348 = arith.divf %346, %347 : vector<2x1xf32>
    %349 = vector.broadcast %341 : vector<2x1xf32> to vector<2x32xf32>
    %350 = arith.subf %335, %349 : vector<2x32xf32>
    %cst_104 = arith.constant 9.99999996E-13 : f32
    %351 = vector.broadcast %cst_104 : f32 to vector<2x1xf32>
    %352 = arith.addf %348, %351 : vector<2x1xf32>
    %353 = math.rsqrt %352 : vector<2x1xf32>
    %354 = vector.broadcast %353 : vector<2x1xf32> to vector<2x32xf32>
    %355 = arith.mulf %350, %354 : vector<2x32xf32>
    %356 = vector.broadcast %336 : vector<1x32xf32> to vector<2x32xf32>
    %357 = arith.mulf %355, %356 : vector<2x32xf32>
    %358 = vector.broadcast %337 : vector<1x32xf32> to vector<2x32xf32>
    %359 = arith.addf %357, %358 : vector<2x32xf32>
    %c0_105 = arith.constant 0 : index
    %c0_106 = arith.constant 0 : index
    %360 = vector.load %arg22[%c0_105, %c0_106] : memref<32x64xbf16, #tpu.memory_space<vmem>>, vector<32x64xbf16>
    %c0_107 = arith.constant 0 : index
    %c0_108 = arith.constant 0 : index
    %361 = vector.load %arg23[%c0_107, %c0_108] : memref<1x64xf32, #tpu.memory_space<vmem>>, vector<1x64xf32>
    %c0_109 = arith.constant 0 : index
    %c0_110 = arith.constant 0 : index
    %362 = vector.load %arg24[%c0_109, %c0_110] : memref<64x32xbf16, #tpu.memory_space<vmem>>, vector<64x32xbf16>
    %c0_111 = arith.constant 0 : index
    %c0_112 = arith.constant 0 : index
    %363 = vector.load %arg25[%c0_111, %c0_112] : memref<1x32xf32, #tpu.memory_space<vmem>>, vector<1x32xf32>
    %c0_113 = arith.constant 0 : index
    %c0_114 = arith.constant 0 : index
    %364 = vector.load %arg26[%c0_113, %c0_114] : memref<1x32xf32, #tpu.memory_space<vmem>>, vector<1x32xf32>
    %c0_115 = arith.constant 0 : index
    %c0_116 = arith.constant 0 : index
    %365 = vector.load %arg27[%c0_115, %c0_116] : memref<1x32xf32, #tpu.memory_space<vmem>>, vector<1x32xf32>
    %366 = arith.truncf %359 : vector<2x32xf32> to vector<2x32xbf16>
    %cst_117 = arith.constant dense<0.000000e+00> : vector<2x64xf32>
    %367 = tpu.matmul %366, %360, %cst_117 {dimension_numbers = #tpu.dot_dimension_numbers<[1], [0], [0], [1], [0, 0, 1, 1], [], []>} : vector<2x32xbf16>, vector<32x64xbf16>, vector<2x64xf32> -> vector<2x64xf32>
    %368 = vector.broadcast %361 : vector<1x64xf32> to vector<2x64xf32>
    %369 = arith.addf %367, %368 : vector<2x64xf32>
    %370 = arith.mulf %369, %369 : vector<2x64xf32>
    %371 = arith.mulf %369, %370 : vector<2x64xf32>
    %cst_118 = arith.constant 4.471500e-02 : f32
    %372 = vector.broadcast %cst_118 : f32 to vector<2x64xf32>
    %373 = arith.mulf %372, %371 : vector<2x64xf32>
    %374 = arith.addf %369, %373 : vector<2x64xf32>
    %cst_119 = arith.constant 0.797884583 : f32
    %375 = vector.broadcast %cst_119 : f32 to vector<2x64xf32>
    %376 = arith.mulf %375, %374 : vector<2x64xf32>
    %377 = math.tanh %376 : vector<2x64xf32>
    %cst_120 = arith.constant 1.000000e+00 : f32
    %378 = vector.broadcast %cst_120 : f32 to vector<2x64xf32>
    %379 = arith.addf %378, %377 : vector<2x64xf32>
    %cst_121 = arith.constant 5.000000e-01 : f32
    %380 = vector.broadcast %cst_121 : f32 to vector<2x64xf32>
    %381 = arith.mulf %380, %379 : vector<2x64xf32>
    %382 = arith.mulf %369, %381 : vector<2x64xf32>
    %383 = arith.truncf %382 : vector<2x64xf32> to vector<2x64xbf16>
    %cst_122 = arith.constant dense<0.000000e+00> : vector<2x32xf32>
    %384 = tpu.matmul %383, %362, %cst_122 {dimension_numbers = #tpu.dot_dimension_numbers<[1], [0], [0], [1], [0, 0, 1, 1], [], []>} : vector<2x64xbf16>, vector<64x32xbf16>, vector<2x32xf32> -> vector<2x32xf32>
    %385 = vector.broadcast %363 : vector<1x32xf32> to vector<2x32xf32>
    %386 = arith.addf %384, %385 : vector<2x32xf32>
    %387 = arith.addf %386, %359 : vector<2x32xf32>
    %cst_123 = arith.constant dense<0.000000e+00> : vector<2xf32>
    %388 = vector.multi_reduction <add>, %387, %cst_123 [1] : vector<2x32xf32> to vector<2xf32>
    %389 = vector.shape_cast %388 : vector<2xf32> to vector<2x1xf32>
    %cst_124 = arith.constant 3.200000e+01 : f32
    %390 = vector.broadcast %cst_124 : f32 to vector<2x1xf32>
    %391 = arith.divf %389, %390 : vector<2x1xf32>
    %392 = vector.broadcast %391 : vector<2x1xf32> to vector<2x32xf32>
    %393 = arith.subf %387, %392 : vector<2x32xf32>
    %394 = arith.mulf %393, %393 : vector<2x32xf32>
    %cst_125 = arith.constant dense<0.000000e+00> : vector<2xf32>
    %395 = vector.multi_reduction <add>, %394, %cst_125 [1] : vector<2x32xf32> to vector<2xf32>
    %396 = vector.shape_cast %395 : vector<2xf32> to vector<2x1xf32>
    %cst_126 = arith.constant 3.200000e+01 : f32
    %397 = vector.broadcast %cst_126 : f32 to vector<2x1xf32>
    %398 = arith.divf %396, %397 : vector<2x1xf32>
    %399 = vector.broadcast %391 : vector<2x1xf32> to vector<2x32xf32>
    %400 = arith.subf %387, %399 : vector<2x32xf32>
    %cst_127 = arith.constant 9.99999996E-13 : f32
    %401 = vector.broadcast %cst_127 : f32 to vector<2x1xf32>
    %402 = arith.addf %398, %401 : vector<2x1xf32>
    %403 = math.rsqrt %402 : vector<2x1xf32>
    %404 = vector.broadcast %403 : vector<2x1xf32> to vector<2x32xf32>
    %405 = arith.mulf %400, %404 : vector<2x32xf32>
    %406 = vector.broadcast %364 : vector<1x32xf32> to vector<2x32xf32>
    %407 = arith.mulf %405, %406 : vector<2x32xf32>
    %408 = vector.broadcast %365 : vector<1x32xf32> to vector<2x32xf32>
    %409 = arith.addf %407, %408 : vector<2x32xf32>
    %c0_128 = arith.constant 0 : index
    %c0_129 = arith.constant 0 : index
    %410 = vector.load %arg28[%c0_128, %c0_129] : memref<32x16xbf16, #tpu.memory_space<vmem>>, vector<32x16xbf16>
    %411 = arith.truncf %409 : vector<2x32xf32> to vector<2x32xbf16>
    %cst_130 = arith.constant dense<0.000000e+00> : vector<2x16xf32>
    %412 = tpu.matmul %411, %410, %cst_130 {dimension_numbers = #tpu.dot_dimension_numbers<[1], [0], [0], [1], [0, 0, 1, 1], [], []>} : vector<2x32xbf16>, vector<32x16xbf16>, vector<2x16xf32> -> vector<2x16xf32>
    %c0_131 = arith.constant 0 : index
    %c0_132 = arith.constant 0 : index
    %413 = vector.load %arg29[%c0_131, %c0_132] : memref<1x16xf32, #tpu.memory_space<vmem>>, vector<1x16xf32>
    %414 = vector.broadcast %413 : vector<1x16xf32> to vector<2x16xf32>
    %415 = arith.addf %412, %414 : vector<2x16xf32>
    %cst_133 = arith.constant 0.000000e+00 : f32
    %416 = vector.broadcast %cst_133 : f32 to vector<2x16xf32>
    %417 = arith.maximumf %415, %416 : vector<2x16xf32>
    %c0_134 = arith.constant 0 : index
    %c0_135 = arith.constant 0 : index
    %418 = vector.load %arg30[%c0_134, %c0_135] : memref<16x6xbf16, #tpu.memory_space<vmem>>, vector<16x6xbf16>
    %419 = arith.truncf %417 : vector<2x16xf32> to vector<2x16xbf16>
    %cst_136 = arith.constant dense<0.000000e+00> : vector<2x6xf32>
    %420 = tpu.matmul %419, %418, %cst_136 {dimension_numbers = #tpu.dot_dimension_numbers<[1], [0], [0], [1], [0, 0, 1, 1], [], []>} : vector<2x16xbf16>, vector<16x6xbf16>, vector<2x6xf32> -> vector<2x6xf32>
    %c0_137 = arith.constant 0 : index
    %c0_138 = arith.constant 0 : index
    %421 = vector.load %arg31[%c0_137, %c0_138] : memref<1x6xf32, #tpu.memory_space<vmem>>, vector<1x6xf32>
    %422 = vector.broadcast %421 : vector<1x6xf32> to vector<2x6xf32>
    %423 = arith.addf %420, %422 : vector<2x6xf32>
    %cst_139 = arith.constant dense<0xFF800000> : vector<2xf32>
    %424 = vector.multi_reduction <maximumf>, %423, %cst_139 [1] : vector<2x6xf32> to vector<2xf32>
    %425 = vector.shape_cast %424 : vector<2xf32> to vector<2x1xf32>
    %426 = vector.broadcast %425 : vector<2x1xf32> to vector<2x6xf32>
    %427 = arith.subf %423, %426 : vector<2x6xf32>
    %428 = math.exp %427 : vector<2x6xf32>
    %cst_140 = arith.constant dense<0.000000e+00> : vector<2xf32>
    %429 = vector.multi_reduction <add>, %428, %cst_140 [1] : vector<2x6xf32> to vector<2xf32>
    %430 = vector.shape_cast %429 : vector<2xf32> to vector<2x1xf32>
    %431 = vector.broadcast %430 : vector<2x1xf32> to vector<2x6xf32>
    %432 = arith.divf %428, %431 : vector<2x6xf32>
    %c0_141 = arith.constant 0 : index
    %c0_142 = arith.constant 0 : index
    %433 = vector.load %arg32[%c0_141, %c0_142] : memref<2x6xf32, #tpu.memory_space<vmem>>, vector<2x6xf32>
    tpu.vector_store %arg32[%c0_141, %c0_142], %432 {strides = array<i32>} : memref<2x6xf32, #tpu.memory_space<vmem>>, vector<2x6xf32>,
    return
  }
}

</mosaic_0001>

<llo_original>
// kernel: tpu_custom_call.1
$region0: #{tpu_custom_call.1}
  #allocation0 [shape = 'u32[]', space=smem, size = 0x4, offset = 0x4, fixed_abs, tag = 'smem constant byte address 0x4 - core index']
  #allocation1 [shape = 'u32[144,128]{1,0:T(1,128)}', space=vmem, size = 0x12000, scoped, tag = 'internal scratch']
  %s0 = inlined_call_operand.smem [shape: u32[33], index: -1, kind: input, shape index: {}]
  %s1 = sld [smem:[%s0]]
  %s2 = scalar_lea.smem %s0, 1
  %s3 = sld [smem:[%s2]]
  %s4 = scalar_lea.smem %s0, 2
  %s5 = sld [smem:[%s4]]
  %s6 = scalar_lea.smem %s0, 3
  %s7 = sld [smem:[%s6]]
  %s8 = scalar_lea.smem %s0, 4
  %s9 = sld [smem:[%s8]]
  %s10 = scalar_lea.smem %s0, 5
  %s11 = sld [smem:[%s10]]
  %s12 = scalar_lea.smem %s0, 6
  %s13 = sld [smem:[%s12]]
  %s14 = scalar_lea.smem %s0, 7
  %s15 = sld [smem:[%s14]]
  %s16 = scalar_lea.smem %s0, 8
  %s17 = sld [smem:[%s16]]
  %s18 = scalar_lea.smem %s0, 9
  %s19 = sld [smem:[%s18]]
  %s20 = scalar_lea.smem %s0, 10
  %s21 = sld [smem:[%s20]]
  %s22 = scalar_lea.smem %s0, 11
  %s23 = sld [smem:[%s22]]
  %s24 = scalar_lea.smem %s0, 12
  %s25 = sld [smem:[%s24]]
  %s26 = scalar_lea.smem %s0, 13
  %s27 = sld [smem:[%s26]]
  %s28 = scalar_lea.smem %s0, 14
  %s29 = sld [smem:[%s28]]
  %s30 = scalar_lea.smem %s0, 15
  %s31 = sld [smem:[%s30]]
  %s32 = scalar_lea.smem %s0, 16
  %s33 = sld [smem:[%s32]]
  %s34 = scalar_lea.smem %s0, 17
  %s35 = sld [smem:[%s34]]
  %s36 = scalar_lea.smem %s0, 18
  %s37 = sld [smem:[%s36]]
  %s38 = scalar_lea.smem %s0, 19
  %s39 = sld [smem:[%s38]]
  %s40 = scalar_lea.smem %s0, 20
  %s41 = sld [smem:[%s40]]
  %s42 = scalar_lea.smem %s0, 21
  %s43 = sld [smem:[%s42]]
  %s44 = scalar_lea.smem %s0, 22
  %s45 = sld [smem:[%s44]]
  %s46 = scalar_lea.smem %s0, 23
  %s47 = sld [smem:[%s46]]
  %s48 = scalar_lea.smem %s0, 24
  %s49 = sld [smem:[%s48]]
  %s50 = scalar_lea.smem %s0, 25
  %s51 = sld [smem:[%s50]]
  %s52 = scalar_lea.smem %s0, 26
  %s53 = sld [smem:[%s52]]
  %s54 = scalar_lea.smem %s0, 27
  %s55 = sld [smem:[%s54]]
  %s56 = scalar_lea.smem %s0, 28
  %s57 = sld [smem:[%s56]]
  %s58 = scalar_lea.smem %s0, 29
  %s59 = sld [smem:[%s58]]
  %s60 = scalar_lea.smem %s0, 30
  %s61 = sld [smem:[%s60]]
  %s62 = scalar_lea.smem %s0, 31
  %s63 = sld [smem:[%s62]]
  %s64 = scalar_lea.smem %s0, 32
  %s65 = sld [smem:[%s64]]
  %s66 = sld [smem:[#allocation0]]
  $region154: #{tpu_custom_call.1} parent=0
    _
  %s68 = ssub.s32 1, %s66
  %s69 = scalar_select 0, %s68, %s66
  $region1: #{tpu_custom_call.1} parent=0
    #allocation2 [shape = 'u8[512]{0}', space=vmem, size = 0x400, scoped, tag = 'input window, operand 2, single buffered']
    #allocation3 [shape = 's32[1]{0}', space=sflag, size = 0x4, scoped, tag = 'scoped memory for tpu_custom_call.1']
    #allocation4 [shape = 's32[1]{0}', space=sflag, size = 0x4, scoped, tag = 'scoped memory for tpu_custom_call.1']
    #allocation5 [shape = 'u8[512]{0}', space=vmem, size = 0x400, scoped, tag = 'input window, operand 3, single buffered']
    #allocation6 [shape = 's32[1]{0}', space=sflag, size = 0x4, scoped, tag = 'scoped memory for tpu_custom_call.1']
    #allocation7 [shape = 'u8[512]{0}', space=vmem, size = 0x400, scoped, tag = 'input window, operand 5, single buffered']
    #allocation8 [shape = 'u8[512]{0}', space=vmem, size = 0x400, scoped, tag = 'input window, operand 7, single buffered']
    #allocation9 [shape = 's32[1]{0}', space=sflag, size = 0x4, scoped, tag = 'scoped memory for tpu_custom_call.1']
    #allocation10 [shape = 'u8[1024]{0}', space=vmem, size = 0x400, scoped, tag = 'output window, operand 0, single buffered']
    %70 = vsyncpa [#allocation3], 0
    %71 = vsyncpa [#allocation6], 0
    %72 = vsyncpa [#allocation9], 0
    %73 = vsyncpa [#allocation4], 0
    // Predicated region
    $region2: #{tpu_custom_call.1} parent=1 // pred_check
      _
    $region3: #{tpu_custom_call.1} parent=1 // pred_check_branch
      %75 = sbr.rel (0) target = $region5
    $region4: #{tpu_custom_call.1} parent=1 // pred_region
      _
    $region5: #{tpu_custom_call.1} parent=1 // pred_fallthru
      _
    // Predicated region
    $region6: #{tpu_custom_call.1} parent=1 // pred_check
      _
    $region7: #{tpu_custom_call.1} parent=1 // pred_check_branch
      %77 = sbr.rel (0) target = $region9
    $region8: #{tpu_custom_call.1} parent=1 // pred_region
      _
    $region9: #{tpu_custom_call.1} parent=1 // pred_fallthru
      _
    // Predicated region
    $region10: #{tpu_custom_call.1} parent=1 // pred_check
      _
    $region11: #{tpu_custom_call.1} parent=1 // pred_check_branch
      %79 = sbr.rel (0) target = $region13
    $region12: #{tpu_custom_call.1} parent=1 // pred_region
      %s81 = ssub.s32 16, 16
      %82 = vsyncadd [#allocation3], %s81
      %s84 = sshll.u32 [#allocation2], 4
      %s85 = int_to_ptr.vmem [resolvable:$true] %s84
      %87 = dma.hbm_to_vmem [thread:$0]  %s5, 16, %s85, [#allocation3]
    $region13: #{tpu_custom_call.1} parent=1 // pred_fallthru
      _
    // Predicated region
    $region14: #{tpu_custom_call.1} parent=1 // pred_check
      _
    $region15: #{tpu_custom_call.1} parent=1 // pred_check_branch
      %89 = sbr.rel (0) target = $region17
    $region16: #{tpu_custom_call.1} parent=1 // pred_region
      %s91 = ssub.s32 16, 16
      %92 = vsyncadd [#allocation6], %s91
      %s94 = sshll.u32 [#allocation5], 4
      %s95 = int_to_ptr.vmem [resolvable:$true] %s94
      %97 = dma.hbm_to_vmem [thread:$0]  %s7, 16, %s95, [#allocation6]
    $region17: #{tpu_custom_call.1} parent=1 // pred_fallthru
      _
    // Predicated region
    $region18: #{tpu_custom_call.1} parent=1 // pred_check
      _
    $region19: #{tpu_custom_call.1} parent=1 // pred_check_branch
      %99 = sbr.rel (0) target = $region21
    $region20: #{tpu_custom_call.1} parent=1 // pred_region
      _
    $region21: #{tpu_custom_call.1} parent=1 // pred_fallthru
      _
    // Predicated region
    $region22: #{tpu_custom_call.1} parent=1 // pred_check
      _
    $region23: #{tpu_custom_call.1} parent=1 // pred_check_branch
      %101 = sbr.rel (0) target = $region25
    $region24: #{tpu_custom_call.1} parent=1 // pred_region
      %s103 = ssub.s32 16, 16
      %104 = vsyncadd [#allocation6], %s103
      %s106 = sshll.u32 [#allocation7], 4
      %s107 = int_to_ptr.vmem [resolvable:$true] %s106
      %109 = dma.hbm_to_vmem [thread:$0]  %s11, 16, %s107, [#allocation6]
    $region25: #{tpu_custom_call.1} parent=1 // pred_fallthru
      _
    // Predicated region
    $region26: #{tpu_custom_call.1} parent=1 // pred_check
      _
    $region27: #{tpu_custom_call.1} parent=1 // pred_check_branch
      %111 = sbr.rel (0) target = $region29
    $region28: #{tpu_custom_call.1} parent=1 // pred_region
      _
    $region29: #{tpu_custom_call.1} parent=1 // pred_fallthru
      _
    // Predicated region
    $region30: #{tpu_custom_call.1} parent=1 // pred_check
      _
    $region31: #{tpu_custom_call.1} parent=1 // pred_check_branch
      %113 = sbr.rel (0) target = $region33
    $region32: #{tpu_custom_call.1} parent=1 // pred_region
      %s115 = ssub.s32 16, 16
      %116 = vsyncadd [#allocation9], %s115
      %s118 = sshll.u32 [#allocation8], 4
      %s119 = int_to_ptr.vmem [resolvable:$true] %s118
      %121 = dma.hbm_to_vmem [thread:$0]  %s15, 16, %s119, [#allocation9]
    $region33: #{tpu_custom_call.1} parent=1 // pred_fallthru
      _
    // Predicated region
    $region34: #{tpu_custom_call.1} parent=1 // pred_check
      _
    $region35: #{tpu_custom_call.1} parent=1 // pred_check_branch
      %123 = sbr.rel (0) target = $region37
    $region36: #{tpu_custom_call.1} parent=1 // pred_region
      _
    $region37: #{tpu_custom_call.1} parent=1 // pred_fallthru
      _
    // Predicated region
    $region38: #{tpu_custom_call.1} parent=1 // pred_check
      _
    $region39: #{tpu_custom_call.1} parent=1 // pred_check_branch
      %125 = sbr.rel (0) target = $region41
    $region40: #{tpu_custom_call.1} parent=1 // pred_region
      _
    $region41: #{tpu_custom_call.1} parent=1 // pred_fallthru
      _
    // Predicated region
    $region42: #{tpu_custom_call.1} parent=1 // pred_check
      _
    $region43: #{tpu_custom_call.1} parent=1 // pred_check_branch
      %127 = sbr.rel (0) target = $region45
    $region44: #{tpu_custom_call.1} parent=1 // pred_region
      _
    $region45: #{tpu_custom_call.1} parent=1 // pred_fallthru
      _
    // Predicated region
    $region46: #{tpu_custom_call.1} parent=1 // pred_check
      _
    $region47: #{tpu_custom_call.1} parent=1 // pred_check_branch
      %129 = sbr.rel (0) target = $region49
    $region48: #{tpu_custom_call.1} parent=1 // pred_region
      _
    $region49: #{tpu_custom_call.1} parent=1 // pred_fallthru
      _
    // Predicated region
    $region50: #{tpu_custom_call.1} parent=1 // pred_check
      _
    $region51: #{tpu_custom_call.1} parent=1 // pred_check_branch
      %131 = sbr.rel (0) target = $region53
    $region52: #{tpu_custom_call.1} parent=1 // pred_region
      _
    $region53: #{tpu_custom_call.1} parent=1 // pred_fallthru
      _
    // Predicated region
    $region54: #{tpu_custom_call.1} parent=1 // pred_check
      _
    $region55: #{tpu_custom_call.1} parent=1 // pred_check_branch
      %133 = sbr.rel (0) target = $region57
    $region56: #{tpu_custom_call.1} parent=1 // pred_region
      _
    $region57: #{tpu_custom_call.1} parent=1 // pred_fallthru
      _
    // Predicated region
    $region58: #{tpu_custom_call.1} parent=1 // pred_check
      _
    $region59: #{tpu_custom_call.1} parent=1 // pred_check_branch
      %135 = sbr.rel (0) target = $region61
    $region60: #{tpu_custom_call.1} parent=1 // pred_region
      _
    $region61: #{tpu_custom_call.1} parent=1 // pred_fallthru
      _
    // Predicated region
    $region62: #{tpu_custom_call.1} parent=1 // pred_check
      _
    $region63: #{tpu_custom_call.1} parent=1 // pred_check_branch
      %137 = sbr.rel (0) target = $region65
    $region64: #{tpu_custom_call.1} parent=1 // pred_region
      _
    $region65: #{tpu_custom_call.1} parent=1 // pred_fallthru
      _
    // Predicated region
    $region66: #{tpu_custom_call.1} parent=1 // pred_check
      _
    $region67: #{tpu_custom_call.1} parent=1 // pred_check_branch
      %139 = sbr.rel (0) target = $region69
    $region68: #{tpu_custom_call.1} parent=1 // pred_region
      _
    $region69: #{tpu_custom_call.1} parent=1 // pred_fallthru
      _
    // Predicated region
    $region70: #{tpu_custom_call.1} parent=1 // pred_check
      _
    $region71: #{tpu_custom_call.1} parent=1 // pred_check_branch
      %141 = sbr.rel (0) target = $region73
    $region72: #{tpu_custom_call.1} parent=1 // pred_region
      _
    $region73: #{tpu_custom_call.1} parent=1 // pred_fallthru
      _
    // Predicated region
    $region74: #{tpu_custom_call.1} parent=1 // pred_check
      _
    $region75: #{tpu_custom_call.1} parent=1 // pred_check_branch
      %143 = sbr.rel (0) target = $region77
    $region76: #{tpu_custom_call.1} parent=1 // pred_region
      _
    $region77: #{tpu_custom_call.1} parent=1 // pred_fallthru
      _
    // Predicated region
    $region78: #{tpu_custom_call.1} parent=1 // pred_check
      _
    $region79: #{tpu_custom_call.1} parent=1 // pred_check_branch
      %145 = sbr.rel (0) target = $region81
    $region80: #{tpu_custom_call.1} parent=1 // pred_region
      _
    $region81: #{tpu_custom_call.1} parent=1 // pred_fallthru
      _
    // Predicated region
    $region82: #{tpu_custom_call.1} parent=1 // pred_check
      _
    $region83: #{tpu_custom_call.1} parent=1 // pred_check_branch
      %147 = sbr.rel (0) target = $region85
    $region84: #{tpu_custom_call.1} parent=1 // pred_region
      _
    $region85: #{tpu_custom_call.1} parent=1 // pred_fallthru
      _
    // Predicated region
    $region86: #{tpu_custom_call.1} parent=1 // pred_check
      _
    $region87: #{tpu_custom_call.1} parent=1 // pred_check_branch
      %149 = sbr.rel (0) target = $region89
    $region88: #{tpu_custom_call.1} parent=1 // pred_region
      _
    $region89: #{tpu_custom_call.1} parent=1 // pred_fallthru
      _
    // Predicated region
    $region90: #{tpu_custom_call.1} parent=1 // pred_check
      _
    $region91: #{tpu_custom_call.1} parent=1 // pred_check_branch
      %151 = sbr.rel (0) target = $region93
    $region92: #{tpu_custom_call.1} parent=1 // pred_region
      _
    $region93: #{tpu_custom_call.1} parent=1 // pred_fallthru
      _
    // Predicated region
    $region94: #{tpu_custom_call.1} parent=1 // pred_check
      _
    $region95: #{tpu_custom_call.1} parent=1 // pred_check_branch
      %153 = sbr.rel (0) target = $region97
    $region96: #{tpu_custom_call.1} parent=1 // pred_region
      _
    $region97: #{tpu_custom_call.1} parent=1 // pred_fallthru
      _
    // Predicated region
    $region98: #{tpu_custom_call.1} parent=1 // pred_check
      _
    $region99: #{tpu_custom_call.1} parent=1 // pred_check_branch
      %155 = sbr.rel (0) target = $region101
    $region100: #{tpu_custom_call.1} parent=1 // pred_region
      _
    $region101: #{tpu_custom_call.1} parent=1 // pred_fallthru
      _
    // Predicated region
    $region102: #{tpu_custom_call.1} parent=1 // pred_check
      _
    $region103: #{tpu_custom_call.1} parent=1 // pred_check_branch
      %157 = sbr.rel (0) target = $region105
    $region104: #{tpu_custom_call.1} parent=1 // pred_region
      _
    $region105: #{tpu_custom_call.1} parent=1 // pred_fallthru
      _
    // Predicated region
    $region106: #{tpu_custom_call.1} parent=1 // pred_check
      _
    $region107: #{tpu_custom_call.1} parent=1 // pred_check_branch
      %159 = sbr.rel (0) target = $region109
    $region108: #{tpu_custom_call.1} parent=1 // pred_region
      _
    $region109: #{tpu_custom_call.1} parent=1 // pred_fallthru
      _
    // Predicated region
    $region110: #{tpu_custom_call.1} parent=1 // pred_check
      _
    $region111: #{tpu_custom_call.1} parent=1 // pred_check_branch
      %161 = sbr.rel (0) target = $region113
    $region112: #{tpu_custom_call.1} parent=1 // pred_region
      _
    $region113: #{tpu_custom_call.1} parent=1 // pred_fallthru
      _
    // Predicated region
    $region114: #{tpu_custom_call.1} parent=1 // pred_check
      _
    $region115: #{tpu_custom_call.1} parent=1 // pred_check_branch
      %163 = sbr.rel (0) target = $region117
    $region116: #{tpu_custom_call.1} parent=1 // pred_region
      _
    $region117: #{tpu_custom_call.1} parent=1 // pred_fallthru
      _
    // Predicated region
    $region118: #{tpu_custom_call.1} parent=1 // pred_check
      _
    $region119: #{tpu_custom_call.1} parent=1 // pred_check_branch
      %165 = sbr.rel (0) target = $region121
    $region120: #{tpu_custom_call.1} parent=1 // pred_region
      _
    $region121: #{tpu_custom_call.1} parent=1 // pred_fallthru
      _
    // Predicated region
    $region122: #{tpu_custom_call.1} parent=1 // pred_check
      _
    $region123: #{tpu_custom_call.1} parent=1 // pred_check_branch
      %167 = sbr.rel (0) target = $region125
    $region124: #{tpu_custom_call.1} parent=1 // pred_region
      _
    $region125: #{tpu_custom_call.1} parent=1 // pred_fallthru
      _
    // Predicated region
    $region126: #{tpu_custom_call.1} parent=1 // pred_check
      _
    $region127: #{tpu_custom_call.1} parent=1 // pred_check_branch
      %169 = sbr.rel (0) target = $region129
    $region128: #{tpu_custom_call.1} parent=1 // pred_region
      _
    $region129: #{tpu_custom_call.1} parent=1 // pred_fallthru
      _
    // Predicated region
    $region130: #{tpu_custom_call.1} parent=1 // pred_check
      _
    $region131: #{tpu_custom_call.1} parent=1 // pred_check_branch
      %171 = sbr.rel (0) target = $region133
    $region132: #{tpu_custom_call.1} parent=1 // pred_region
      %172 = dma.done [#allocation3], 16
    $region133: #{tpu_custom_call.1} parent=1 // pred_fallthru
      _
    // Predicated region
    $region134: #{tpu_custom_call.1} parent=1 // pred_check
      _
    $region135: #{tpu_custom_call.1} parent=1 // pred_check_branch
      %174 = sbr.rel (0) target = $region137
    $region136: #{tpu_custom_call.1} parent=1 // pred_region
      %175 = dma.done [#allocation6], 16
    $region137: #{tpu_custom_call.1} parent=1 // pred_fallthru
      _
    // Predicated region
    $region138: #{tpu_custom_call.1} parent=1 // pred_check
      _
    $region139: #{tpu_custom_call.1} parent=1 // pred_check_branch
      %177 = sbr.rel (0) target = $region141
    $region140: #{tpu_custom_call.1} parent=1 // pred_region
      %178 = dma.done [#allocation6], 16
    $region141: #{tpu_custom_call.1} parent=1 // pred_fallthru
      _
    // Predicated region
    $region142: #{tpu_custom_call.1} parent=1 // pred_check
      _
    $region143: #{tpu_custom_call.1} parent=1 // pred_check_branch
      %180 = sbr.rel (0) target = $region145
    $region144: #{tpu_custom_call.1} parent=1 // pred_region
      %181 = dma.done [#allocation9], 16
    $region145: #{tpu_custom_call.1} parent=1 // pred_fallthru
      _
    %v183 = vld [vmem:[%s3] sm:$0x3]
    %v186 = vunpack.c.l.s4 1966171168
    %v187 = vunpack.c.0.s8 %v186
    %v188 = vlaneseq
    %v189 = vshrl.u32 %v188, 7
    %v190 = vsub.s32 %v187, %v189
    %v191 = vrot.slane %v183, %v190
    %v192 = vcombine.high %v191, %v191
    %v194 = vunpack.c.l.s4 1966171168
    %v195 = vunpack.c.0.s8 %v194
    %v196 = vlaneseq
    %v197 = vshrl.u32 %v196, 7
    %v198 = vsub.s32 %v195, %v197
    %v199 = vrot.slane %v191, %v198
    %v201 = vunpack.c.l.s4 1966171168
    %v202 = vunpack.c.0.s8 %v201
    %v203 = vlaneseq
    %v204 = vshrl.u32 %v203, 7
    %v205 = vsub.s32 %v202, %v204
    %v206 = vrot.slane %v192, %v205
    %v209 = vld [vmem:[%s1] sm:$0xff]
    %v210 = vld [vmem:[%s1 + $0x8] sm:$0xff]
    %v211 = vld [vmem:[#allocation2] sm:$0x1]
    %v212 = vld [vmem:[#allocation5] sm:$0x1]
    %vm213 = vcmask 261120
    %v214 = vsel %vm213, %v209, 0.0
    %215 = vadd.xlane.f32.xlu0 %v214
    %v216 = vpop.xlane.xlu0 %215
    %v217 = vsel %vm213, %v210, 0.0
    %218 = vadd.xlane.f32.xlu0 %v217
    %v219 = vpop.xlane.xlu0 %218
    %v220 = vrcp.pop 32.0
    %v221 = vmul.f32 %v216, %v220
    %v222 = vmul.f32 %v219, %v220
    %v223 = vsub.f32 %v209, %v221
    %v224 = vsub.f32 %v210, %v222
    %v225 = vmul.f32 %v223, %v223
    %v226 = vmul.f32 %v224, %v224
    %v227 = vsel %vm213, %v225, 0.0
    %228 = vadd.xlane.f32.xlu0 %v227
    %v229 = vpop.xlane.xlu0 %228
    %v230 = vsel %vm213, %v226, 0.0
    %231 = vadd.xlane.f32.xlu0 %v230
    %v232 = vpop.xlane.xlu0 %231
    %v233 = vmul.f32 %v229, %v220
    %v234 = vmul.f32 %v232, %v220
    %v235 = vadd.f32 %v233, 1e-12
    %v236 = vadd.f32 %v234, 1e-12
    %v237 = vrsqrt.pop %v235
    %v238 = vrsqrt.pop %v236
    %v239 = vmul.f32 %v223, %v237
    %v240 = vmul.f32 %v224, %v238
    %v242 = vlaneseq
    %v243 = vshrl.u32 %v242, 7
    %v244 = vsub.s32 0, %v243
    %v245 = vrot.slane %v211, %v244
    %v247 = vmul.f32 %v239, %v245
    %v248 = vmul.f32 %v240, %v245
    %v250 = vlaneseq
    %v251 = vshrl.u32 %v250, 7
    %v252 = vsub.s32 0, %v251
    %v253 = vrot.slane %v212, %v252
    %v255 = vadd.f32 %v247, %v253
    %v256 = vadd.f32 %v248, %v253
    %v257 = vld [vmem:[%s9] sm:$0xf]
    %v258 = vld [vmem:[%s9 + $0x4] sm:$0xf]
    %v259 = vld [vmem:[%s9 + $0x8] sm:$0xf]
    %v260 = vld [vmem:[%s9 + $0xc] sm:$0xf]
    %v261 = vpack.c.bf16 %v256, %v255
    %v262 = vld [vmem:[#allocation7] sm:$0x1]
    %v264 = vlaneseq
    %v265 = vshrl.u32 %v264, 7
    %v266 = vsub.s32 0, %v265
    %v267 = vrot.slane %v262, %v266
    %v273 = vunpack.c.l.b16 %v257
    %v274 = vunpack.c.l.b16 %v258
    %v275 = vunpack.c.l.b16 %v259
    %v276 = vunpack.c.l.b16 %v260
    %v277 = vpack.c.b16 %v274, %v273
    %v278 = vpack.c.b16 %v276, %v275
    %v282 = vsel %vm213, %v261, 0
    %284 = vmatprep.subr.bf16.mxu0 0
    %285 = vmatpush1.bf16.msra.mxu0 %v277
    %286 = vmatprep.subr.bf16.mxu0 0
    %287 = vmatpush1.bf16.msra.mxu0 %v278
    %288 = vmatprep.subr.bf16.mxu0 0
    %289 = vmatpush1.bf16.msra.mxu0 0
    %290 = vmatprep.subr.bf16.mxu0 0
    %291 = vmatpush1.bf16.msra.mxu0 0
    %292 = vmatprep.subr.bf16.mxu0 0
    %293 = vmatpush1.bf16.msra.mxu0 0
    %294 = vmatprep.subr.bf16.mxu0 0
    %295 = vmatpush1.bf16.msra.mxu0 0
    %296 = vmatprep.subr.bf16.mxu0 0
    %297 = vmatpush1.bf16.msra.mxu0 0
    %298 = vmatprep.subr.bf16.mxu0 0
    %299 = vmatpush1.bf16.msra.mxu0 0
    %300 = vmatprep.subr.bf16.mxu0 0
    %301 = vmatpush1.bf16.msra.mxu0 0
    %302 = vmatprep.subr.bf16.mxu0 0
    %303 = vmatpush1.bf16.msra.mxu0 0
    %304 = vmatprep.subr.bf16.mxu0 0
    %305 = vmatpush1.bf16.msra.mxu0 0
    %306 = vmatprep.subr.bf16.mxu0 0
    %307 = vmatpush1.bf16.msra.mxu0 0
    %308 = vmatprep.subr.bf16.mxu0 0
    %309 = vmatpush1.bf16.msra.mxu0 0
    %310 = vmatprep.subr.bf16.mxu0 0
    %311 = vmatpush1.bf16.msra.mxu0 0
    %312 = vmatprep.subr.bf16.mxu0 0
    %313 = vmatpush1.bf16.msra.mxu0 0
    %314 = vmatprep.subr.bf16.mxu0 0
    %315 = vmatpush1.bf16.msra.mxu0 0
    %316 = vmatprep.mubr.bf16.mxu0 0
    %317 = vmatmul.mubr.bf16.gmra.mrb[0].mxu0 %v282
    %v318 = vpop.f32.mrb[0].mxu0
    %v319 = vadd.f32 %v267, %v318
    %v320 = vpop.f32.mrb[0].mxu0
    %v321 = vpop.f32.mrb[0].mxu0
    %v322 = vadd.f32 %v267, %v321
    %v323 = vpop.f32.mrb[0].mxu0
    %324 = vdwg.mxu0
    %v325 = vpack.c.bf16 %v319, %v319
    %v326 = vpack.c.bf16 %v322, %v322
    %v327 = vlaneseq
    %v328 = vshrl.u32 %v327, 7
    %v329 = vsub.s32 0, %v328
    %v330 = vrot.slane %v199, %v329
    %v331 = vlaneseq
    %v332 = vshrl.u32 %v331, 7
    %v333 = vsub.s32 0, %v332
    %v334 = vrot.slane %v206, %v333
    %338 = vrot.lane.b32.xlu0 %v325, 96
    %v339 = vpop.permute.xlu0 %338
    %vm340 = vcmask 64512
    %v342 = vsel %vm340, %v325, 0
    %v345 = vsel %vm340, %v339, 0
    %347 = vmatprep.subr.bf16.mxu0 0
    %348 = vmatpush1.bf16.xpose.msra.mxu0 %v345
    %349 = vmatprep.subr.bf16.mxu0 0
    %350 = vmatpush1.bf16.xpose.msra.mxu0 0
    %351 = vmatprep.subr.bf16.mxu0 0
    %352 = vmatpush1.bf16.xpose.msra.mxu0 0
    %353 = vmatprep.subr.bf16.mxu0 0
    %354 = vmatpush1.bf16.xpose.msra.mxu0 0
    %355 = vmatprep.subr.bf16.mxu0 0
    %356 = vmatpush1.bf16.xpose.msra.mxu0 0
    %357 = vmatprep.subr.bf16.mxu0 0
    %358 = vmatpush1.bf16.xpose.msra.mxu0 0
    %359 = vmatprep.subr.bf16.mxu0 0
    %360 = vmatpush1.bf16.xpose.msra.mxu0 0
    %361 = vmatprep.subr.bf16.mxu0 0
    %362 = vmatpush1.bf16.xpose.msra.mxu0 0
    %363 = vmatprep.subr.bf16.mxu0 0
    %364 = vmatpush1.bf16.xpose.msra.mxu0 0
    %365 = vmatprep.subr.bf16.mxu0 0
    %366 = vmatpush1.bf16.xpose.msra.mxu0 0
    %367 = vmatprep.subr.bf16.mxu0 0
    %368 = vmatpush1.bf16.xpose.msra.mxu0 0
    %369 = vmatprep.subr.bf16.mxu0 0
    %370 = vmatpush1.bf16.xpose.msra.mxu0 0
    %371 = vmatprep.subr.bf16.mxu0 0
    %372 = vmatpush1.bf16.xpose.msra.mxu0 0
    %373 = vmatprep.subr.bf16.mxu0 0
    %374 = vmatpush1.bf16.xpose.msra.mxu0 0
    %375 = vmatprep.subr.bf16.mxu0 0
    %376 = vmatpush1.bf16.xpose.msra.mxu0 0
    %377 = vmatprep.subr.bf16.mxu0 0
    %378 = vmatpush1.bf16.xpose.msra.mxu0 0
    %379 = vmatprep.mubr.bf16.mxu0 0
    %380 = vmatmul.mubr.bf16.gmra.mrb[0].mxu0 %v342
    %v381 = vpop.f32.mrb[0].mxu0
    %v382 = vadd.f32 %v330, %v381
    %v383 = vpop.f32.mrb[0].mxu0
    %v384 = vpop.f32.mrb[0].mxu0
    %v385 = vpop.f32.mrb[0].mxu0
    %386 = vdwg.mxu0
    %388 = vrot.lane.b32.xlu0 %v326, 96
    %v389 = vpop.permute.xlu0 %388
    %v391 = vsel %vm340, %v326, 0
    %v394 = vsel %vm340, %v389, 0
    %396 = vmatprep.subr.bf16.mxu0 0
    %397 = vmatpush1.bf16.xpose.msra.mxu0 %v394
    %398 = vmatprep.subr.bf16.mxu0 0
    %399 = vmatpush1.bf16.xpose.msra.mxu0 0
    %400 = vmatprep.subr.bf16.mxu0 0
    %401 = vmatpush1.bf16.xpose.msra.mxu0 0
    %402 = vmatprep.subr.bf16.mxu0 0
    %403 = vmatpush1.bf16.xpose.msra.mxu0 0
    %404 = vmatprep.subr.bf16.mxu0 0
    %405 = vmatpush1.bf16.xpose.msra.mxu0 0
    %406 = vmatprep.subr.bf16.mxu0 0
    %407 = vmatpush1.bf16.xpose.msra.mxu0 0
    %408 = vmatprep.subr.bf16.mxu0 0
    %409 = vmatpush1.bf16.xpose.msra.mxu0 0
    %410 = vmatprep.subr.bf16.mxu0 0
    %411 = vmatpush1.bf16.xpose.msra.mxu0 0
    %412 = vmatprep.subr.bf16.mxu0 0
    %413 = vmatpush1.bf16.xpose.msra.mxu0 0
    %414 = vmatprep.subr.bf16.mxu0 0
    %415 = vmatpush1.bf16.xpose.msra.mxu0 0
    %416 = vmatprep.subr.bf16.mxu0 0
    %417 = vmatpush1.bf16.xpose.msra.mxu0 0
    %418 = vmatprep.subr.bf16.mxu0 0
    %419 = vmatpush1.bf16.xpose.msra.mxu0 0
    %420 = vmatprep.subr.bf16.mxu0 0
    %421 = vmatpush1.bf16.xpose.msra.mxu0 0
    %422 = vmatprep.subr.bf16.mxu0 0
    %423 = vmatpush1.bf16.xpose.msra.mxu0 0
    %424 = vmatprep.subr.bf16.mxu0 0
    %425 = vmatpush1.bf16.xpose.msra.mxu0 0
    %426 = vmatprep.subr.bf16.mxu0 0
    %427 = vmatpush1.bf16.xpose.msra.mxu0 0
    %428 = vmatprep.mubr.bf16.mxu0 0
    %429 = vmatmul.mubr.bf16.gmra.mrb[0].mxu0 %v391
    %v430 = vpop.f32.mrb[0].mxu0
    %v431 = vadd.f32 %v334, %v430
    %v432 = vpop.f32.mrb[0].mxu0
    %v433 = vpop.f32.mrb[0].mxu0
    %v434 = vpop.f32.mrb[0].mxu0
    %435 = vdwg.mxu0
    %v436 = vsel %vm340, %v382, -inf
    %437 = vmax.xlane.f32.xlu0 %v436
    %v438 = vpop.xlane.xlu0 %437
    %v439 = vsel %vm340, %v431, -inf
    %440 = vmax.xlane.f32.xlu0 %v439
    %v441 = vpop.xlane.xlu0 %440
    %v442 = vsub.f32 %v382, %v438
    %v443 = vsub.f32 %v431, %v441
    %v444 = vmul.f32 %v442, 1.442695
    %v445 = vpow.pop %v444
    %v446 = vmul.f32 %v443, 1.442695
    %v447 = vpow.pop %v446
    %v448 = vsel %vm340, %v445, 0.0
    %449 = vadd.xlane.f32.xlu0 %v448
    %v450 = vpop.xlane.xlu0 %449
    %v451 = vsel %vm340, %v447, 0.0
    %452 = vadd.xlane.f32.xlu0 %v451
    %v453 = vpop.xlane.xlu0 %452
    %v454 = vrcp.pop %v450
    %v455 = vrcp.pop %v453
    %v456 = vmul.f32 %v445, %v454
    %v457 = vmul.f32 %v447, %v455
    %v458 = vpack.c.bf16 %v456, %v456
    %v459 = vpack.c.bf16 %v457, %v457
    %460 = vrot.lane.b32.xlu0 %v325, 64
    %v461 = vpop.permute.xlu0 %460
    %v463 = vsel %vm340, %v458, 0
    %vm465 = vcmask 1043456
    %v467 = vsel %vm465, %v461, 0
    %469 = vmatprep.subr.bf16.mxu0 0
    %470 = vmatpush1.bf16.msra.mxu0 %v467
    %471 = vmatprep.subr.bf16.mxu0 0
    %472 = vmatpush1.bf16.msra.mxu0 0
    %473 = vmatprep.subr.bf16.mxu0 0
    %474 = vmatpush1.bf16.msra.mxu0 0
    %475 = vmatprep.subr.bf16.mxu0 0
    %476 = vmatpush1.bf16.msra.mxu0 0
    %477 = vmatprep.subr.bf16.mxu0 0
    %478 = vmatpush1.bf16.msra.mxu0 0
    %479 = vmatprep.subr.bf16.mxu0 0
    %480 = vmatpush1.bf16.msra.mxu0 0
    %481 = vmatprep.subr.bf16.mxu0 0
    %482 = vmatpush1.bf16.msra.mxu0 0
    %483 = vmatprep.subr.bf16.mxu0 0
    %484 = vmatpush1.bf16.msra.mxu0 0
    %485 = vmatprep.subr.bf16.mxu0 0
    %486 = vmatpush1.bf16.msra.mxu0 0
    %487 = vmatprep.subr.bf16.mxu0 0
    %488 = vmatpush1.bf16.msra.mxu0 0
    %489 = vmatprep.subr.bf16.mxu0 0
    %490 = vmatpush1.bf16.msra.mxu0 0
    %491 = vmatprep.subr.bf16.mxu0 0
    %492 = vmatpush1.bf16.msra.mxu0 0
    %493 = vmatprep.subr.bf16.mxu0 0
    %494 = vmatpush1.bf16.msra.mxu0 0
    %495 = vmatprep.subr.bf16.mxu0 0
    %496 = vmatpush1.bf16.msra.mxu0 0
    %497 = vmatprep.subr.bf16.mxu0 0
    %498 = vmatpush1.bf16.msra.mxu0 0
    %499 = vmatprep.subr.bf16.mxu0 0
    %500 = vmatpush1.bf16.msra.mxu0 0
    %501 = vmatprep.mubr.bf16.mxu0 0
    %502 = vmatmul.mubr.bf16.gmra.mrb[0].mxu0 %v463
    %v503 = vpop.f32.mrb[0].mxu0
    %v504 = vadd.f32 0.0, %v503
    %v505 = vpop.f32.mrb[0].mxu0
    %v506 = vpop.f32.mrb[0].mxu0
    %v507 = vpop.f32.mrb[0].mxu0
    %508 = vdwg.mxu0
    %509 = vrot.lane.b32.xlu0 %v326, 64
    %v510 = vpop.permute.xlu0 %509
    %v512 = vsel %vm340, %v459, 0
    %v515 = vsel %vm465, %v510, 0
    %517 = vmatprep.subr.bf16.mxu0 0
    %518 = vmatpush1.bf16.msra.mxu0 %v515
    %519 = vmatprep.subr.bf16.mxu0 0
    %520 = vmatpush1.bf16.msra.mxu0 0
    %521 = vmatprep.subr.bf16.mxu0 0
    %522 = vmatpush1.bf16.msra.mxu0 0
    %523 = vmatprep.subr.bf16.mxu0 0
    %524 = vmatpush1.bf16.msra.mxu0 0
    %525 = vmatprep.subr.bf16.mxu0 0
    %526 = vmatpush1.bf16.msra.mxu0 0
    %527 = vmatprep.subr.bf16.mxu0 0
    %528 = vmatpush1.bf16.msra.mxu0 0
    %529 = vmatprep.subr.bf16.mxu0 0
    %530 = vmatpush1.bf16.msra.mxu0 0
    %531 = vmatprep.subr.bf16.mxu0 0
    %532 = vmatpush1.bf16.msra.mxu0 0
    %533 = vmatprep.subr.bf16.mxu0 0
    %534 = vmatpush1.bf16.msra.mxu0 0
    %535 = vmatprep.subr.bf16.mxu0 0
    %536 = vmatpush1.bf16.msra.mxu0 0
    %537 = vmatprep.subr.bf16.mxu0 0
    %538 = vmatpush1.bf16.msra.mxu0 0
    %539 = vmatprep.subr.bf16.mxu0 0
    %540 = vmatpush1.bf16.msra.mxu0 0
    %541 = vmatprep.subr.bf16.mxu0 0
    %542 = vmatpush1.bf16.msra.mxu0 0
    %543 = vmatprep.subr.bf16.mxu0 0
    %544 = vmatpush1.bf16.msra.mxu0 0
    %545 = vmatprep.subr.bf16.mxu0 0
    %546 = vmatpush1.bf16.msra.mxu0 0
    %547 = vmatprep.subr.bf16.mxu0 0
    %548 = vmatpush1.bf16.msra.mxu0 0
    %549 = vmatprep.mubr.bf16.mxu0 0
    %550 = vmatmul.mubr.bf16.gmra.mrb[0].mxu0 %v512
    %v551 = vpop.f32.mrb[0].mxu0
    %v552 = vadd.f32 0.0, %v551
    %v553 = vpop.f32.mrb[0].mxu0
    %v554 = vpop.f32.mrb[0].mxu0
    %v555 = vpop.f32.mrb[0].mxu0
    %556 = vdwg.mxu0
    %557 = vrot.lane.b32.xlu0 %v325, 120
    %v558 = vpop.permute.xlu0 %557
    %559 = vrot.lane.b32.xlu0 %v325, 88
    %v560 = vpop.permute.xlu0 %559
    %v562 = vsel %vm340, %v558, 0
    %v565 = vsel %vm340, %v560, 0
    %567 = vmatprep.subr.bf16.mxu0 0
    %568 = vmatpush1.bf16.xpose.msra.mxu0 %v565
    %569 = vmatprep.subr.bf16.mxu0 0
    %570 = vmatpush1.bf16.xpose.msra.mxu0 0
    %571 = vmatprep.subr.bf16.mxu0 0
    %572 = vmatpush1.bf16.xpose.msra.mxu0 0
    %573 = vmatprep.subr.bf16.mxu0 0
    %574 = vmatpush1.bf16.xpose.msra.mxu0 0
    %575 = vmatprep.subr.bf16.mxu0 0
    %576 = vmatpush1.bf16.xpose.msra.mxu0 0
    %577 = vmatprep.subr.bf16.mxu0 0
    %578 = vmatpush1.bf16.xpose.msra.mxu0 0
    %579 = vmatprep.subr.bf16.mxu0 0
    %580 = vmatpush1.bf16.xpose.msra.mxu0 0
    %581 = vmatprep.subr.bf16.mxu0 0
    %582 = vmatpush1.bf16.xpose.msra.mxu0 0
    %583 = vmatprep.subr.bf16.mxu0 0
    %584 = vmatpush1.bf16.xpose.msra.mxu0 0
    %585 = vmatprep.subr.bf16.mxu0 0
    %586 = vmatpush1.bf16.xpose.msra.mxu0 0
    %587 = vmatprep.subr.bf16.mxu0 0
    %588 = vmatpush1.bf16.xpose.msra.mxu0 0
    %589 = vmatprep.subr.bf16.mxu0 0
    %590 = vmatpush1.bf16.xpose.msra.mxu0 0
    %591 = vmatprep.subr.bf16.mxu0 0
    %592 = vmatpush1.bf16.xpose.msra.mxu0 0
    %593 = vmatprep.subr.bf16.mxu0 0
    %594 = vmatpush1.bf16.xpose.msra.mxu0 0
    %595 = vmatprep.subr.bf16.mxu0 0
    %596 = vmatpush1.bf16.xpose.msra.mxu0 0
    %597 = vmatprep.subr.bf16.mxu0 0
    %598 = vmatpush1.bf16.xpose.msra.mxu0 0
    %599 = vmatprep.mubr.bf16.mxu0 0
    %600 = vmatmul.mubr.bf16.gmra.mrb[0].mxu0 %v562
    %v601 = vpop.f32.mrb[0].mxu0
    %v602 = vadd.f32 %v330, %v601
    %v603 = vpop.f32.mrb[0].mxu0
    %v604 = vpop.f32.mrb[0].mxu0
    %v605 = vpop.f32.mrb[0].mxu0
    %606 = vdwg.mxu0
    %607 = vrot.lane.b32.xlu0 %v326, 120
    %v608 = vpop.permute.xlu0 %607
    %609 = vrot.lane.b32.xlu0 %v326, 88
    %v610 = vpop.permute.xlu0 %609
    %v612 = vsel %vm340, %v608, 0
    %v615 = vsel %vm340, %v610, 0
    %617 = vmatprep.subr.bf16.mxu0 0
    %618 = vmatpush1.bf16.xpose.msra.mxu0 %v615
    %619 = vmatprep.subr.bf16.mxu0 0
    %620 = vmatpush1.bf16.xpose.msra.mxu0 0
    %621 = vmatprep.subr.bf16.mxu0 0
    %622 = vmatpush1.bf16.xpose.msra.mxu0 0
    %623 = vmatprep.subr.bf16.mxu0 0
    %624 = vmatpush1.bf16.xpose.msra.mxu0 0
    %625 = vmatprep.subr.bf16.mxu0 0
    %626 = vmatpush1.bf16.xpose.msra.mxu0 0
    %627 = vmatprep.subr.bf16.mxu0 0
    %628 = vmatpush1.bf16.xpose.msra.mxu0 0
    %629 = vmatprep.subr.bf16.mxu0 0
    %630 = vmatpush1.bf16.xpose.msra.mxu0 0
    %631 = vmatprep.subr.bf16.mxu0 0
    %632 = vmatpush1.bf16.xpose.msra.mxu0 0
    %633 = vmatprep.subr.bf16.mxu0 0
    %634 = vmatpush1.bf16.xpose.msra.mxu0 0
    %635 = vmatprep.subr.bf16.mxu0 0
    %636 = vmatpush1.bf16.xpose.msra.mxu0 0
    %637 = vmatprep.subr.bf16.mxu0 0
    %638 = vmatpush1.bf16.xpose.msra.mxu0 0
    %639 = vmatprep.subr.bf16.mxu0 0
    %640 = vmatpush1.bf16.xpose.msra.mxu0 0
    %641 = vmatprep.subr.bf16.mxu0 0
    %642 = vmatpush1.bf16.xpose.msra.mxu0 0
    %643 = vmatprep.subr.bf16.mxu0 0
    %644 = vmatpush1.bf16.xpose.msra.mxu0 0
    %645 = vmatprep.subr.bf16.mxu0 0
    %646 = vmatpush1.bf16.xpose.msra.mxu0 0
    %647 = vmatprep.subr.bf16.mxu0 0
    %648 = vmatpush1.bf16.xpose.msra.mxu0 0
    %649 = vmatprep.mubr.bf16.mxu0 0
    %650 = vmatmul.mubr.bf16.gmra.mrb[0].mxu0 %v612
    %v651 = vpop.f32.mrb[0].mxu0
    %v652 = vadd.f32 %v334, %v651
    %v653 = vpop.f32.mrb[0].mxu0
    %v654 = vpop.f32.mrb[0].mxu0
    %v655 = vpop.f32.mrb[0].mxu0
    %656 = vdwg.mxu0
    %v657 = vsel %vm340, %v602, -inf
    %658 = vmax.xlane.f32.xlu0 %v657
    %v659 = vpop.xlane.xlu0 %658
    %v660 = vsel %vm340, %v652, -inf
    %661 = vmax.xlane.f32.xlu0 %v660
    %v662 = vpop.xlane.xlu0 %661
    %v663 = vsub.f32 %v602, %v659
    %v664 = vsub.f32 %v652, %v662
    %v665 = vmul.f32 %v663, 1.442695
    %v666 = vpow.pop %v665
    %v667 = vmul.f32 %v664, 1.442695
    %v668 = vpow.pop %v667
    %v669 = vsel %vm340, %v666, 0.0
    %670 = vadd.xlane.f32.xlu0 %v669
    %v671 = vpop.xlane.xlu0 %670
    %v672 = vsel %vm340, %v668, 0.0
    %673 = vadd.xlane.f32.xlu0 %v672
    %v674 = vpop.xlane.xlu0 %673
    %v675 = vrcp.pop %v671
    %v676 = vrcp.pop %v674
    %v677 = vmul.f32 %v666, %v675
    %v678 = vmul.f32 %v668, %v676
    %v679 = vpack.c.bf16 %v677, %v677
    %v680 = vpack.c.bf16 %v678, %v678
    %681 = vrot.lane.b32.xlu0 %v325, 56
    %v682 = vpop.permute.xlu0 %681
    %v684 = vsel %vm340, %v679, 0
    %v687 = vsel %vm465, %v682, 0
    %689 = vmatprep.subr.bf16.mxu0 0
    %690 = vmatpush1.bf16.msra.mxu0 %v687
    %691 = vmatprep.subr.bf16.mxu0 0
    %692 = vmatpush1.bf16.msra.mxu0 0
    %693 = vmatprep.subr.bf16.mxu0 0
    %694 = vmatpush1.bf16.msra.mxu0 0
    %695 = vmatprep.subr.bf16.mxu0 0
    %696 = vmatpush1.bf16.msra.mxu0 0
    %697 = vmatprep.subr.bf16.mxu0 0
    %698 = vmatpush1.bf16.msra.mxu0 0
    %699 = vmatprep.subr.bf16.mxu0 0
    %700 = vmatpush1.bf16.msra.mxu0 0
    %701 = vmatprep.subr.bf16.mxu0 0
    %702 = vmatpush1.bf16.msra.mxu0 0
    %703 = vmatprep.subr.bf16.mxu0 0
    %704 = vmatpush1.bf16.msra.mxu0 0
    %705 = vmatprep.subr.bf16.mxu0 0
    %706 = vmatpush1.bf16.msra.mxu0 0
    %707 = vmatprep.subr.bf16.mxu0 0
    %708 = vmatpush1.bf16.msra.mxu0 0
    %709 = vmatprep.subr.bf16.mxu0 0
    %710 = vmatpush1.bf16.msra.mxu0 0
    %711 = vmatprep.subr.bf16.mxu0 0
    %712 = vmatpush1.bf16.msra.mxu0 0
    %713 = vmatprep.subr.bf16.mxu0 0
    %714 = vmatpush1.bf16.msra.mxu0 0
    %715 = vmatprep.subr.bf16.mxu0 0
    %716 = vmatpush1.bf16.msra.mxu0 0
    %717 = vmatprep.subr.bf16.mxu0 0
    %718 = vmatpush1.bf16.msra.mxu0 0
    %719 = vmatprep.subr.bf16.mxu0 0
    %720 = vmatpush1.bf16.msra.mxu0 0
    %721 = vmatprep.mubr.bf16.mxu0 0
    %722 = vmatmul.mubr.bf16.gmra.mrb[0].mxu0 %v684
    %v723 = vpop.f32.mrb[0].mxu0
    %v724 = vadd.f32 0.0, %v723
    %v725 = vpop.f32.mrb[0].mxu0
    %v726 = vpop.f32.mrb[0].mxu0
    %v727 = vpop.f32.mrb[0].mxu0
    %728 = vdwg.mxu0
    %729 = vrot.lane.b32.xlu0 %v326, 56
    %v730 = vpop.permute.xlu0 %729
    %v732 = vsel %vm340, %v680, 0
    %v735 = vsel %vm465, %v730, 0
    %737 = vmatprep.subr.bf16.mxu0 0
    %738 = vmatpush1.bf16.msra.mxu0 %v735
    %739 = vmatprep.subr.bf16.mxu0 0
    %740 = vmatpush1.bf16.msra.mxu0 0
    %741 = vmatprep.subr.bf16.mxu0 0
    %742 = vmatpush1.bf16.msra.mxu0 0
    %743 = vmatprep.subr.bf16.mxu0 0
    %744 = vmatpush1.bf16.msra.mxu0 0
    %745 = vmatprep.subr.bf16.mxu0 0
    %746 = vmatpush1.bf16.msra.mxu0 0
    %747 = vmatprep.subr.bf16.mxu0 0
    %748 = vmatpush1.bf16.msra.mxu0 0
    %749 = vmatprep.subr.bf16.mxu0 0
    %750 = vmatpush1.bf16.msra.mxu0 0
    %751 = vmatprep.subr.bf16.mxu0 0
    %752 = vmatpush1.bf16.msra.mxu0 0
    %753 = vmatprep.subr.bf16.mxu0 0
    %754 = vmatpush1.bf16.msra.mxu0 0
    %755 = vmatprep.subr.bf16.mxu0 0
    %756 = vmatpush1.bf16.msra.mxu0 0
    %757 = vmatprep.subr.bf16.mxu0 0
    %758 = vmatpush1.bf16.msra.mxu0 0
    %759 = vmatprep.subr.bf16.mxu0 0
    %760 = vmatpush1.bf16.msra.mxu0 0
    %761 = vmatprep.subr.bf16.mxu0 0
    %762 = vmatpush1.bf16.msra.mxu0 0
    %763 = vmatprep.subr.bf16.mxu0 0
    %764 = vmatpush1.bf16.msra.mxu0 0
    %765 = vmatprep.subr.bf16.mxu0 0
    %766 = vmatpush1.bf16.msra.mxu0 0
    %767 = vmatprep.subr.bf16.mxu0 0
    %768 = vmatpush1.bf16.msra.mxu0 0
    %769 = vmatprep.mubr.bf16.mxu0 0
    %770 = vmatmul.mubr.bf16.gmra.mrb[0].mxu0 %v732
    %v771 = vpop.f32.mrb[0].mxu0
    %v772 = vadd.f32 0.0, %v771
    %v773 = vpop.f32.mrb[0].mxu0
    %v774 = vpop.f32.mrb[0].mxu0
    %v775 = vpop.f32.mrb[0].mxu0
    %776 = vdwg.mxu0
    %777 = vrot.lane.b32.xlu0 %v325, 112
    %v778 = vpop.permute.xlu0 %777
    %779 = vrot.lane.b32.xlu0 %v325, 80
    %v780 = vpop.permute.xlu0 %779
    %v782 = vsel %vm340, %v778, 0
    %v785 = vsel %vm340, %v780, 0
    %787 = vmatprep.subr.bf16.mxu0 0
    %788 = vmatpush1.bf16.xpose.msra.mxu0 %v785
    %789 = vmatprep.subr.bf16.mxu0 0
    %790 = vmatpush1.bf16.xpose.msra.mxu0 0
    %791 = vmatprep.subr.bf16.mxu0 0
    %792 = vmatpush1.bf16.xpose.msra.mxu0 0
    %793 = vmatprep.subr.bf16.mxu0 0
    %794 = vmatpush1.bf16.xpose.msra.mxu0 0
    %795 = vmatprep.subr.bf16.mxu0 0
    %796 = vmatpush1.bf16.xpose.msra.mxu0 0
    %797 = vmatprep.subr.bf16.mxu0 0
    %798 = vmatpush1.bf16.xpose.msra.mxu0 0
    %799 = vmatprep.subr.bf16.mxu0 0
    %800 = vmatpush1.bf16.xpose.msra.mxu0 0
    %801 = vmatprep.subr.bf16.mxu0 0
    %802 = vmatpush1.bf16.xpose.msra.mxu0 0
    %803 = vmatprep.subr.bf16.mxu0 0
    %804 = vmatpush1.bf16.xpose.msra.mxu0 0
    %805 = vmatprep.subr.bf16.mxu0 0
    %806 = vmatpush1.bf16.xpose.msra.mxu0 0
    %807 = vmatprep.subr.bf16.mxu0 0
    %808 = vmatpush1.bf16.xpose.msra.mxu0 0
    %809 = vmatprep.subr.bf16.mxu0 0
    %810 = vmatpush1.bf16.xpose.msra.mxu0 0
    %811 = vmatprep.subr.bf16.mxu0 0
    %812 = vmatpush1.bf16.xpose.msra.mxu0 0
    %813 = vmatprep.subr.bf16.mxu0 0
    %814 = vmatpush1.bf16.xpose.msra.mxu0 0
    %815 = vmatprep.subr.bf16.mxu0 0
    %816 = vmatpush1.bf16.xpose.msra.mxu0 0
    %817 = vmatprep.subr.bf16.mxu0 0
    %818 = vmatpush1.bf16.xpose.msra.mxu0 0
    %819 = vmatprep.mubr.bf16.mxu0 0
    %820 = vmatmul.mubr.bf16.gmra.mrb[0].mxu0 %v782
    %v821 = vpop.f32.mrb[0].mxu0
    %v822 = vadd.f32 %v330, %v821
    %v823 = vpop.f32.mrb[0].mxu0
    %v824 = vpop.f32.mrb[0].mxu0
    %v825 = vpop.f32.mrb[0].mxu0
    %826 = vdwg.mxu0
    %827 = vrot.lane.b32.xlu0 %v326, 112
    %v828 = vpop.permute.xlu0 %827
    %829 = vrot.lane.b32.xlu0 %v326, 80
    %v830 = vpop.permute.xlu0 %829
    %v832 = vsel %vm340, %v828, 0
    %v835 = vsel %vm340, %v830, 0
    %837 = vmatprep.subr.bf16.mxu0 0
    %838 = vmatpush1.bf16.xpose.msra.mxu0 %v835
    %839 = vmatprep.subr.bf16.mxu0 0
    %840 = vmatpush1.bf16.xpose.msra.mxu0 0
    %841 = vmatprep.subr.bf16.mxu0 0
    %842 = vmatpush1.bf16.xpose.msra.mxu0 0
    %843 = vmatprep.subr.bf16.mxu0 0
    %844 = vmatpush1.bf16.xpose.msra.mxu0 0
    %845 = vmatprep.subr.bf16.mxu0 0
    %846 = vmatpush1.bf16.xpose.msra.mxu0 0
    %847 = vmatprep.subr.bf16.mxu0 0
    %848 = vmatpush1.bf16.xpose.msra.mxu0 0
    %849 = vmatprep.subr.bf16.mxu0 0
    %850 = vmatpush1.bf16.xpose.msra.mxu0 0
    %851 = vmatprep.subr.bf16.mxu0 0
    %852 = vmatpush1.bf16.xpose.msra.mxu0 0
    %853 = vmatprep.subr.bf16.mxu0 0
    %854 = vmatpush1.bf16.xpose.msra.mxu0 0
    %855 = vmatprep.subr.bf16.mxu0 0
    %856 = vmatpush1.bf16.xpose.msra.mxu0 0
    %857 = vmatprep.subr.bf16.mxu0 0
    %858 = vmatpush1.bf16.xpose.msra.mxu0 0
    %859 = vmatprep.subr.bf16.mxu0 0
    %860 = vmatpush1.bf16.xpose.msra.mxu0 0
    %861 = vmatprep.subr.bf16.mxu0 0
    %862 = vmatpush1.bf16.xpose.msra.mxu0 0
    %863 = vmatprep.subr.bf16.mxu0 0
    %864 = vmatpush1.bf16.xpose.msra.mxu0 0
    %865 = vmatprep.subr.bf16.mxu0 0
    %866 = vmatpush1.bf16.xpose.msra.mxu0 0
    %867 = vmatprep.subr.bf16.mxu0 0
    %868 = vmatpush1.bf16.xpose.msra.mxu0 0
    %869 = vmatprep.mubr.bf16.mxu0 0
    %870 = vmatmul.mubr.bf16.gmra.mrb[0].mxu0 %v832
    %v871 = vpop.f32.mrb[0].mxu0
    %v872 = vadd.f32 %v334, %v871
    %v873 = vpop.f32.mrb[0].mxu0
    %v874 = vpop.f32.mrb[0].mxu0
    %v875 = vpop.f32.mrb[0].mxu0
    %876 = vdwg.mxu0
    %v877 = vsel %vm340, %v822, -inf
    %878 = vmax.xlane.f32.xlu0 %v877
    %v879 = vpop.xlane.xlu0 %878
    %v880 = vsel %vm340, %v872, -inf
    %881 = vmax.xlane.f32.xlu0 %v880
    %v882 = vpop.xlane.xlu0 %881
    %v883 = vsub.f32 %v822, %v879
    %v884 = vsub.f32 %v872, %v882
    %v885 = vmul.f32 %v883, 1.442695
    %v886 = vpow.pop %v885
    %v887 = vmul.f32 %v884, 1.442695
    %v888 = vpow.pop %v887
    %v889 = vsel %vm340, %v886, 0.0
    %890 = vadd.xlane.f32.xlu0 %v889
    %v891 = vpop.xlane.xlu0 %890
    %v892 = vsel %vm340, %v888, 0.0
    %893 = vadd.xlane.f32.xlu0 %v892
    %v894 = vpop.xlane.xlu0 %893
    %v895 = vrcp.pop %v891
    %v896 = vrcp.pop %v894
    %v897 = vmul.f32 %v886, %v895
    %v898 = vmul.f32 %v888, %v896
    %v899 = vpack.c.bf16 %v897, %v897
    %v900 = vpack.c.bf16 %v898, %v898
    %901 = vrot.lane.b32.xlu0 %v325, 48
    %v902 = vpop.permute.xlu0 %901
    %v904 = vsel %vm340, %v899, 0
    %v907 = vsel %vm465, %v902, 0
    %909 = vmatprep.subr.bf16.mxu0 0
    %910 = vmatpush1.bf16.msra.mxu0 %v907
    %911 = vmatprep.subr.bf16.mxu0 0
    %912 = vmatpush1.bf16.msra.mxu0 0
    %913 = vmatprep.subr.bf16.mxu0 0
    %914 = vmatpush1.bf16.msra.mxu0 0
    %915 = vmatprep.subr.bf16.mxu0 0
    %916 = vmatpush1.bf16.msra.mxu0 0
    %917 = vmatprep.subr.bf16.mxu0 0
    %918 = vmatpush1.bf16.msra.mxu0 0
    %919 = vmatprep.subr.bf16.mxu0 0
    %920 = vmatpush1.bf16.msra.mxu0 0
    %921 = vmatprep.subr.bf16.mxu0 0
    %922 = vmatpush1.bf16.msra.mxu0 0
    %923 = vmatprep.subr.bf16.mxu0 0
    %924 = vmatpush1.bf16.msra.mxu0 0
    %925 = vmatprep.subr.bf16.mxu0 0
    %926 = vmatpush1.bf16.msra.mxu0 0
    %927 = vmatprep.subr.bf16.mxu0 0
    %928 = vmatpush1.bf16.msra.mxu0 0
    %929 = vmatprep.subr.bf16.mxu0 0
    %930 = vmatpush1.bf16.msra.mxu0 0
    %931 = vmatprep.subr.bf16.mxu0 0
    %932 = vmatpush1.bf16.msra.mxu0 0
    %933 = vmatprep.subr.bf16.mxu0 0
    %934 = vmatpush1.bf16.msra.mxu0 0
    %935 = vmatprep.subr.bf16.mxu0 0
    %936 = vmatpush1.bf16.msra.mxu0 0
    %937 = vmatprep.subr.bf16.mxu0 0
    %938 = vmatpush1.bf16.msra.mxu0 0
    %939 = vmatprep.subr.bf16.mxu0 0
    %940 = vmatpush1.bf16.msra.mxu0 0
    %941 = vmatprep.mubr.bf16.mxu0 0
    %942 = vmatmul.mubr.bf16.gmra.mrb[0].mxu0 %v904
    %v943 = vpop.f32.mrb[0].mxu0
    %v944 = vadd.f32 0.0, %v943
    %v945 = vpop.f32.mrb[0].mxu0
    %v946 = vpop.f32.mrb[0].mxu0
    %v947 = vpop.f32.mrb[0].mxu0
    %948 = vdwg.mxu0
    %949 = vrot.lane.b32.xlu0 %v326, 48
    %v950 = vpop.permute.xlu0 %949
    %v952 = vsel %vm340, %v900, 0
    %v955 = vsel %vm465, %v950, 0
    %957 = vmatprep.subr.bf16.mxu0 0
    %958 = vmatpush1.bf16.msra.mxu0 %v955
    %959 = vmatprep.subr.bf16.mxu0 0
    %960 = vmatpush1.bf16.msra.mxu0 0
    %961 = vmatprep.subr.bf16.mxu0 0
    %962 = vmatpush1.bf16.msra.mxu0 0
    %963 = vmatprep.subr.bf16.mxu0 0
    %964 = vmatpush1.bf16.msra.mxu0 0
    %965 = vmatprep.subr.bf16.mxu0 0
    %966 = vmatpush1.bf16.msra.mxu0 0
    %967 = vmatprep.subr.bf16.mxu0 0
    %968 = vmatpush1.bf16.msra.mxu0 0
    %969 = vmatprep.subr.bf16.mxu0 0
    %970 = vmatpush1.bf16.msra.mxu0 0
    %971 = vmatprep.subr.bf16.mxu0 0
    %972 = vmatpush1.bf16.msra.mxu0 0
    %973 = vmatprep.subr.bf16.mxu0 0
    %974 = vmatpush1.bf16.msra.mxu0 0
    %975 = vmatprep.subr.bf16.mxu0 0
    %976 = vmatpush1.bf16.msra.mxu0 0
    %977 = vmatprep.subr.bf16.mxu0 0
    %978 = vmatpush1.bf16.msra.mxu0 0
    %979 = vmatprep.subr.bf16.mxu0 0
    %980 = vmatpush1.bf16.msra.mxu0 0
    %981 = vmatprep.subr.bf16.mxu0 0
    %982 = vmatpush1.bf16.msra.mxu0 0
    %983 = vmatprep.subr.bf16.mxu0 0
    %984 = vmatpush1.bf16.msra.mxu0 0
    %985 = vmatprep.subr.bf16.mxu0 0
    %986 = vmatpush1.bf16.msra.mxu0 0
    %987 = vmatprep.subr.bf16.mxu0 0
    %988 = vmatpush1.bf16.msra.mxu0 0
    %989 = vmatprep.mubr.bf16.mxu0 0
    %990 = vmatmul.mubr.bf16.gmra.mrb[0].mxu0 %v952
    %v991 = vpop.f32.mrb[0].mxu0
    %v992 = vadd.f32 0.0, %v991
    %v993 = vpop.f32.mrb[0].mxu0
    %v994 = vpop.f32.mrb[0].mxu0
    %v995 = vpop.f32.mrb[0].mxu0
    %996 = vdwg.mxu0
    %997 = vrot.lane.b32.xlu0 %v325, 104
    %v998 = vpop.permute.xlu0 %997
    %999 = vrot.lane.b32.xlu0 %v325, 72
    %v1000 = vpop.permute.xlu0 %999
    %v1002 = vsel %vm340, %v998, 0
    %v1005 = vsel %vm340, %v1000, 0
    %1007 = vmatprep.subr.bf16.mxu0 0
    %1008 = vmatpush1.bf16.xpose.msra.mxu0 %v1005
    %1009 = vmatprep.subr.bf16.mxu0 0
    %1010 = vmatpush1.bf16.xpose.msra.mxu0 0
    %1011 = vmatprep.subr.bf16.mxu0 0
    %1012 = vmatpush1.bf16.xpose.msra.mxu0 0
    %1013 = vmatprep.subr.bf16.mxu0 0
    %1014 = vmatpush1.bf16.xpose.msra.mxu0 0
    %1015 = vmatprep.subr.bf16.mxu0 0
    %1016 = vmatpush1.bf16.xpose.msra.mxu0 0
    %1017 = vmatprep.subr.bf16.mxu0 0
    %1018 = vmatpush1.bf16.xpose.msra.mxu0 0
    %1019 = vmatprep.subr.bf16.mxu0 0
    %1020 = vmatpush1.bf16.xpose.msra.mxu0 0
    %1021 = vmatprep.subr.bf16.mxu0 0
    %1022 = vmatpush1.bf16.xpose.msra.mxu0 0
    %1023 = vmatprep.subr.bf16.mxu0 0
    %1024 = vmatpush1.bf16.xpose.msra.mxu0 0
    %1025 = vmatprep.subr.bf16.mxu0 0
    %1026 = vmatpush1.bf16.xpose.msra.mxu0 0
    %1027 = vmatprep.subr.bf16.mxu0 0
    %1028 = vmatpush1.bf16.xpose.msra.mxu0 0
    %1029 = vmatprep.subr.bf16.mxu0 0
    %1030 = vmatpush1.bf16.xpose.msra.mxu0 0
    %1031 = vmatprep.subr.bf16.mxu0 0
    %1032 = vmatpush1.bf16.xpose.msra.mxu0 0
    %1033 = vmatprep.subr.bf16.mxu0 0
    %1034 = vmatpush1.bf16.xpose.msra.mxu0 0
    %1035 = vmatprep.subr.bf16.mxu0 0
    %1036 = vmatpush1.bf16.xpose.msra.mxu0 0
    %1037 = vmatprep.subr.bf16.mxu0 0
    %1038 = vmatpush1.bf16.xpose.msra.mxu0 0
    %1039 = vmatprep.mubr.bf16.mxu0 0
    %1040 = vmatmul.mubr.bf16.gmra.mrb[0].mxu0 %v1002
    %v1041 = vpop.f32.mrb[0].mxu0
    %v1042 = vadd.f32 %v330, %v1041
    %v1043 = vpop.f32.mrb[0].mxu0
    %v1044 = vpop.f32.mrb[0].mxu0
    %v1045 = vpop.f32.mrb[0].mxu0
    %1046 = vdwg.mxu0
    %1047 = vrot.lane.b32.xlu0 %v326, 104
    %v1048 = vpop.permute.xlu0 %1047
    %1049 = vrot.lane.b32.xlu0 %v326, 72
    %v1050 = vpop.permute.xlu0 %1049
    %v1052 = vsel %vm340, %v1048, 0
    %v1055 = vsel %vm340, %v1050, 0
    %1057 = vmatprep.subr.bf16.mxu0 0
    %1058 = vmatpush1.bf16.xpose.msra.mxu0 %v1055
    %1059 = vmatprep.subr.bf16.mxu0 0
    %1060 = vmatpush1.bf16.xpose.msra.mxu0 0
    %1061 = vmatprep.subr.bf16.mxu0 0
    %1062 = vmatpush1.bf16.xpose.msra.mxu0 0
    %1063 = vmatprep.subr.bf16.mxu0 0
    %1064 = vmatpush1.bf16.xpose.msra.mxu0 0
    %1065 = vmatprep.subr.bf16.mxu0 0
    %1066 = vmatpush1.bf16.xpose.msra.mxu0 0
    %1067 = vmatprep.subr.bf16.mxu0 0
    %1068 = vmatpush1.bf16.xpose.msra.mxu0 0
    %1069 = vmatprep.subr.bf16.mxu0 0
    %1070 = vmatpush1.bf16.xpose.msra.mxu0 0
    %1071 = vmatprep.subr.bf16.mxu0 0
    %1072 = vmatpush1.bf16.xpose.msra.mxu0 0
    %1073 = vmatprep.subr.bf16.mxu0 0
    %1074 = vmatpush1.bf16.xpose.msra.mxu0 0
    %1075 = vmatprep.subr.bf16.mxu0 0
    %1076 = vmatpush1.bf16.xpose.msra.mxu0 0
    %1077 = vmatprep.subr.bf16.mxu0 0
    %1078 = vmatpush1.bf16.xpose.msra.mxu0 0
    %1079 = vmatprep.subr.bf16.mxu0 0
    %1080 = vmatpush1.bf16.xpose.msra.mxu0 0
    %1081 = vmatprep.subr.bf16.mxu0 0
    %1082 = vmatpush1.bf16.xpose.msra.mxu0 0
    %1083 = vmatprep.subr.bf16.mxu0 0
    %1084 = vmatpush1.bf16.xpose.msra.mxu0 0
    %1085 = vmatprep.subr.bf16.mxu0 0
    %1086 = vmatpush1.bf16.xpose.msra.mxu0 0
    %1087 = vmatprep.subr.bf16.mxu0 0
    %1088 = vmatpush1.bf16.xpose.msra.mxu0 0
    %1089 = vmatprep.mubr.bf16.mxu0 0
    %1090 = vmatmul.mubr.bf16.gmra.mrb[0].mxu0 %v1052
    %v1091 = vpop.f32.mrb[0].mxu0
    %v1092 = vadd.f32 %v334, %v1091
    %v1093 = vpop.f32.mrb[0].mxu0
    %v1094 = vpop.f32.mrb[0].mxu0
    %v1095 = vpop.f32.mrb[0].mxu0
    %1096 = vdwg.mxu0
    %v1097 = vsel %vm340, %v1042, -inf
    %1098 = vmax.xlane.f32.xlu0 %v1097
    %v1099 = vpop.xlane.xlu0 %1098
    %v1100 = vsel %vm340, %v1092, -inf
    %1101 = vmax.xlane.f32.xlu0 %v1100
    %v1102 = vpop.xlane.xlu0 %1101
    %v1103 = vsub.f32 %v1042, %v1099
    %v1104 = vsub.f32 %v1092, %v1102
    %v1105 = vmul.f32 %v1103, 1.442695
    %v1106 = vpow.pop %v1105
    %v1107 = vmul.f32 %v1104, 1.442695
    %v1108 = vpow.pop %v1107
    %v1109 = vsel %vm340, %v1106, 0.0
    %1110 = vadd.xlane.f32.xlu0 %v1109
    %v1111 = vpop.xlane.xlu0 %1110
    %v1112 = vsel %vm340, %v1108, 0.0
    %1113 = vadd.xlane.f32.xlu0 %v1112
    %v1114 = vpop.xlane.xlu0 %1113
    %v1115 = vrcp.pop %v1111
    %v1116 = vrcp.pop %v1114
    %v1117 = vmul.f32 %v1106, %v1115
    %v1118 = vmul.f32 %v1108, %v1116
    %v1119 = vpack.c.bf16 %v1117, %v1117
    %v1120 = vpack.c.bf16 %v1118, %v1118
    %1121 = vrot.lane.b32.xlu0 %v325, 40
    %v1122 = vpop.permute.xlu0 %1121
    %v1124 = vsel %vm340, %v1119, 0
    %v1127 = vsel %vm465, %v1122, 0
    %1129 = vmatprep.subr.bf16.mxu0 0
    %1130 = vmatpush1.bf16.msra.mxu0 %v1127
    %1131 = vmatprep.subr.bf16.mxu0 0
    %1132 = vmatpush1.bf16.msra.mxu0 0
    %1133 = vmatprep.subr.bf16.mxu0 0
    %1134 = vmatpush1.bf16.msra.mxu0 0
    %1135 = vmatprep.subr.bf16.mxu0 0
    %1136 = vmatpush1.bf16.msra.mxu0 0
    %1137 = vmatprep.subr.bf16.mxu0 0
    %1138 = vmatpush1.bf16.msra.mxu0 0
    %1139 = vmatprep.subr.bf16.mxu0 0
    %1140 = vmatpush1.bf16.msra.mxu0 0
    %1141 = vmatprep.subr.bf16.mxu0 0
    %1142 = vmatpush1.bf16.msra.mxu0 0
    %1143 = vmatprep.subr.bf16.mxu0 0
    %1144 = vmatpush1.bf16.msra.mxu0 0
    %1145 = vmatprep.subr.bf16.mxu0 0
    %1146 = vmatpush1.bf16.msra.mxu0 0
    %1147 = vmatprep.subr.bf16.mxu0 0
    %1148 = vmatpush1.bf16.msra.mxu0 0
    %1149 = vmatprep.subr.bf16.mxu0 0
    %1150 = vmatpush1.bf16.msra.mxu0 0
    %1151 = vmatprep.subr.bf16.mxu0 0
    %1152 = vmatpush1.bf16.msra.mxu0 0
    %1153 = vmatprep.subr.bf16.mxu0 0
    %1154 = vmatpush1.bf16.msra.mxu0 0
    %1155 = vmatprep.subr.bf16.mxu0 0
    %1156 = vmatpush1.bf16.msra.mxu0 0
    %1157 = vmatprep.subr.bf16.mxu0 0
    %1158 = vmatpush1.bf16.msra.mxu0 0
    %1159 = vmatprep.subr.bf16.mxu0 0
    %1160 = vmatpush1.bf16.msra.mxu0 0
    %1161 = vmatprep.mubr.bf16.mxu0 0
    %1162 = vmatmul.mubr.bf16.gmra.mrb[0].mxu0 %v1124
    %v1163 = vpop.f32.mrb[0].mxu0
    %v1164 = vadd.f32 0.0, %v1163
    %v1165 = vpop.f32.mrb[0].mxu0
    %v1166 = vpop.f32.mrb[0].mxu0
    %v1167 = vpop.f32.mrb[0].mxu0
    %1168 = vdwg.mxu0
    %1169 = vrot.lane.b32.xlu0 %v326, 40
    %v1170 = vpop.permute.xlu0 %1169
    %v1172 = vsel %vm340, %v1120, 0
    %v1175 = vsel %vm465, %v1170, 0
    %1177 = vmatprep.subr.bf16.mxu0 0
    %1178 = vmatpush1.bf16.msra.mxu0 %v1175
    %1179 = vmatprep.subr.bf16.mxu0 0
    %1180 = vmatpush1.bf16.msra.mxu0 0
    %1181 = vmatprep.subr.bf16.mxu0 0
    %1182 = vmatpush1.bf16.msra.mxu0 0
    %1183 = vmatprep.subr.bf16.mxu0 0
    %1184 = vmatpush1.bf16.msra.mxu0 0
    %1185 = vmatprep.subr.bf16.mxu0 0
    %1186 = vmatpush1.bf16.msra.mxu0 0
    %1187 = vmatprep.subr.bf16.mxu0 0
    %1188 = vmatpush1.bf16.msra.mxu0 0
    %1189 = vmatprep.subr.bf16.mxu0 0
    %1190 = vmatpush1.bf16.msra.mxu0 0
    %1191 = vmatprep.subr.bf16.mxu0 0
    %1192 = vmatpush1.bf16.msra.mxu0 0
    %1193 = vmatprep.subr.bf16.mxu0 0
    %1194 = vmatpush1.bf16.msra.mxu0 0
    %1195 = vmatprep.subr.bf16.mxu0 0
    %1196 = vmatpush1.bf16.msra.mxu0 0
    %1197 = vmatprep.subr.bf16.mxu0 0
    %1198 = vmatpush1.bf16.msra.mxu0 0
    %1199 = vmatprep.subr.bf16.mxu0 0
    %1200 = vmatpush1.bf16.msra.mxu0 0
    %1201 = vmatprep.subr.bf16.mxu0 0
    %1202 = vmatpush1.bf16.msra.mxu0 0
    %1203 = vmatprep.subr.bf16.mxu0 0
    %1204 = vmatpush1.bf16.msra.mxu0 0
    %1205 = vmatprep.subr.bf16.mxu0 0
    %1206 = vmatpush1.bf16.msra.mxu0 0
    %1207 = vmatprep.subr.bf16.mxu0 0
    %1208 = vmatpush1.bf16.msra.mxu0 0
    %1209 = vmatprep.mubr.bf16.mxu0 0
    %1210 = vmatmul.mubr.bf16.gmra.mrb[0].mxu0 %v1172
    %v1211 = vpop.f32.mrb[0].mxu0
    %v1212 = vadd.f32 0.0, %v1211
    %v1213 = vpop.f32.mrb[0].mxu0
    %v1214 = vpop.f32.mrb[0].mxu0
    %v1215 = vpop.f32.mrb[0].mxu0
    %1216 = vdwg.mxu0
    %1219 = vrot.lane.b32.xlu0 %v724, 8
    %v1220 = vpop.permute.xlu0 %1219
    %1221 = vrot.lane.b32.xlu0 %v772, 8
    %v1222 = vpop.permute.xlu0 %1221
    %1227 = vrot.lane.b32.xlu0 %v944, 16
    %v1228 = vpop.permute.xlu0 %1227
    %1229 = vrot.lane.b32.xlu0 %v992, 16
    %v1230 = vpop.permute.xlu0 %1229
    %1235 = vrot.lane.b32.xlu0 %v1164, 24
    %v1236 = vpop.permute.xlu0 %1235
    %1237 = vrot.lane.b32.xlu0 %v1212, 24
    %v1238 = vpop.permute.xlu0 %1237
    %v1241 = vsel %vm340, %v504, %v1220
    %v1242 = vsel %vm340, %v552, %v1222
    %vm1243 = vcmask 130048
    %v1244 = vsel %vm1243, %v1241, %v1228
    %v1245 = vsel %vm1243, %v1242, %v1230
    %vm1246 = vcmask 195584
    %v1247 = vsel %vm1246, %v1244, %v1236
    %v1248 = vsel %vm1246, %v1245, %v1238
    %v1249 = vld [vmem:[%s13] sm:$0xf]
    %v1250 = vld [vmem:[%s13 + $0x4] sm:$0xf]
    %v1251 = vld [vmem:[%s13 + $0x8] sm:$0xf]
    %v1252 = vld [vmem:[%s13 + $0xc] sm:$0xf]
    %v1253 = vpack.c.bf16 %v1248, %v1247
    %v1254 = vld [vmem:[#allocation8] sm:$0x1]
    %v1256 = vlaneseq
    %v1257 = vshrl.u32 %v1256, 7
    %v1258 = vsub.s32 0, %v1257
    %v1259 = vrot.slane %v1254, %v1258
    %v1265 = vunpack.c.l.b16 %v1249
    %v1266 = vunpack.c.l.b16 %v1250
    %v1267 = vunpack.c.l.b16 %v1251
    %v1268 = vunpack.c.l.b16 %v1252
    %v1269 = vpack.c.b16 %v1266, %v1265
    %v1270 = vpack.c.b16 %v1268, %v1267
    %v1274 = vsel %vm213, %v1253, 0
    %1276 = vmatprep.subr.bf16.mxu0 0
    %1277 = vmatpush1.bf16.msra.mxu0 %v1269
    %1278 = vmatprep.subr.bf16.mxu0 0
    %1279 = vmatpush1.bf16.msra.mxu0 %v1270
    %1280 = vmatprep.subr.bf16.mxu0 0
    %1281 = vmatpush1.bf16.msra.mxu0 0
    %1282 = vmatprep.subr.bf16.mxu0 0
    %1283 = vmatpush1.bf16.msra.mxu0 0
    %1284 = vmatprep.subr.bf16.mxu0 0
    %1285 = vmatpush1.bf16.msra.mxu0 0
    %1286 = vmatprep.subr.bf16.mxu0 0
    %1287 = vmatpush1.bf16.msra.mxu0 0
    %1288 = vmatprep.subr.bf16.mxu0 0
    %1289 = vmatpush1.bf16.msra.mxu0 0
    %1290 = vmatprep.subr.bf16.mxu0 0
    %1291 = vmatpush1.bf16.msra.mxu0 0
    %1292 = vmatprep.subr.bf16.mxu0 0
    %1293 = vmatpush1.bf16.msra.mxu0 0
    %1294 = vmatprep.subr.bf16.mxu0 0
    %1295 = vmatpush1.bf16.msra.mxu0 0
    %1296 = vmatprep.subr.bf16.mxu0 0
    %1297 = vmatpush1.bf16.msra.mxu0 0
    %1298 = vmatprep.subr.bf16.mxu0 0
    %1299 = vmatpush1.bf16.msra.mxu0 0
    %1300 = vmatprep.subr.bf16.mxu0 0
    %1301 = vmatpush1.bf16.msra.mxu0 0
    %1302 = vmatprep.subr.bf16.mxu0 0
    %1303 = vmatpush1.bf16.msra.mxu0 0
    %1304 = vmatprep.subr.bf16.mxu0 0
    %1305 = vmatpush1.bf16.msra.mxu0 0
    %1306 = vmatprep.subr.bf16.mxu0 0
    %1307 = vmatpush1.bf16.msra.mxu0 0
    %1308 = vmatprep.mubr.bf16.mxu0 0
    %1309 = vmatmul.mubr.bf16.gmra.mrb[0].mxu0 %v1274
    %v1310 = vpop.f32.mrb[0].mxu0
    %v1311 = vadd.f32 %v1259, %v1310
    %v1312 = vpop.f32.mrb[0].mxu0
    %v1313 = vpop.f32.mrb[0].mxu0
    %v1314 = vadd.f32 %v1259, %v1313
    %v1315 = vpop.f32.mrb[0].mxu0
    %1316 = vdwg.mxu0
    %v1317 = vadd.f32 %v1311, %v255
    %v1318 = vadd.f32 %v1314, %v256
    %v1319 = vld [vmem:[%s17] sm:$0x1]
    %v1320 = vld [vmem:[%s19] sm:$0x1]
    %v1321 = vsel %vm213, %v1317, 0.0
    %1322 = vadd.xlane.f32.xlu0 %v1321
    %v1323 = vpop.xlane.xlu0 %1322
    %v1324 = vsel %vm213, %v1318, 0.0
    %1325 = vadd.xlane.f32.xlu0 %v1324
    %v1326 = vpop.xlane.xlu0 %1325
    %v1327 = vmul.f32 %v1323, %v220
    %v1328 = vmul.f32 %v1326, %v220
    %v1329 = vsub.f32 %v1317, %v1327
    %v1330 = vsub.f32 %v1318, %v1328
    %v1331 = vmul.f32 %v1329, %v1329
    %v1332 = vmul.f32 %v1330, %v1330
    %v1333 = vsel %vm213, %v1331, 0.0
    %1334 = vadd.xlane.f32.xlu0 %v1333
    %v1335 = vpop.xlane.xlu0 %1334
    %v1336 = vsel %vm213, %v1332, 0.0
    %1337 = vadd.xlane.f32.xlu0 %v1336
    %v1338 = vpop.xlane.xlu0 %1337
    %v1339 = vmul.f32 %v1335, %v220
    %v1340 = vmul.f32 %v1338, %v220
    %v1341 = vadd.f32 %v1339, 1e-12
    %v1342 = vadd.f32 %v1340, 1e-12
    %v1343 = vrsqrt.pop %v1341
    %v1344 = vrsqrt.pop %v1342
    %v1345 = vmul.f32 %v1329, %v1343
    %v1346 = vmul.f32 %v1330, %v1344
    %v1348 = vlaneseq
    %v1349 = vshrl.u32 %v1348, 7
    %v1350 = vsub.s32 0, %v1349
    %v1351 = vrot.slane %v1319, %v1350
    %v1353 = vmul.f32 %v1345, %v1351
    %v1354 = vmul.f32 %v1346, %v1351
    %v1356 = vlaneseq
    %v1357 = vshrl.u32 %v1356, 7
    %v1358 = vsub.s32 0, %v1357
    %v1359 = vrot.slane %v1320, %v1358
    %v1361 = vadd.f32 %v1353, %v1359
    %v1362 = vadd.f32 %v1354, %v1359
    %v1363 = vld [vmem:[%s21] sm:$0xf]
    %v1364 = vld [vmem:[%s21 + $0x4] sm:$0xf]
    %v1365 = vld [vmem:[%s21 + $0x8] sm:$0xf]
    %v1366 = vld [vmem:[%s21 + $0xc] sm:$0xf]
    %v1367 = vld [vmem:[%s23] sm:$0x1]
    %v1368 = vld [vmem:[%s25] sm:$0xf]
    %v1369 = vld [vmem:[%s25 + $0x4] sm:$0xf]
    %v1370 = vld [vmem:[%s25 + $0x8] sm:$0xf]
    %v1371 = vld [vmem:[%s25 + $0xc] sm:$0xf]
    %v1372 = vld [vmem:[%s25 + $0x10] sm:$0xf]
    %v1373 = vld [vmem:[%s25 + $0x14] sm:$0xf]
    %v1374 = vld [vmem:[%s25 + $0x18] sm:$0xf]
    %v1375 = vld [vmem:[%s25 + $0x1c] sm:$0xf]
    %v1376 = vld [vmem:[%s27] sm:$0x1]
    %v1377 = vld [vmem:[%s29] sm:$0x1]
    %v1378 = vld [vmem:[%s31] sm:$0x1]
    %v1379 = vpack.c.bf16 %v1362, %v1361
    %v1381 = vlaneseq
    %v1382 = vshrl.u32 %v1381, 7
    %v1383 = vsub.s32 0, %v1382
    %v1384 = vrot.slane %v1367, %v1383
    %v1390 = vunpack.c.l.b16 %v1363
    %v1391 = vunpack.c.l.b16 %v1364
    %v1392 = vunpack.c.l.b16 %v1365
    %v1393 = vunpack.c.l.b16 %v1366
    %v1394 = vpack.c.b16 %v1391, %v1390
    %v1395 = vpack.c.b16 %v1393, %v1392
    %v1399 = vsel %vm213, %v1379, 0
    %1401 = vmatprep.subr.bf16.mxu0 0
    %1402 = vmatpush1.bf16.msra.mxu0 %v1394
    %1403 = vmatprep.subr.bf16.mxu0 0
    %1404 = vmatpush1.bf16.msra.mxu0 %v1395
    %1405 = vmatprep.subr.bf16.mxu0 0
    %1406 = vmatpush1.bf16.msra.mxu0 0
    %1407 = vmatprep.subr.bf16.mxu0 0
    %1408 = vmatpush1.bf16.msra.mxu0 0
    %1409 = vmatprep.subr.bf16.mxu0 0
    %1410 = vmatpush1.bf16.msra.mxu0 0
    %1411 = vmatprep.subr.bf16.mxu0 0
    %1412 = vmatpush1.bf16.msra.mxu0 0
    %1413 = vmatprep.subr.bf16.mxu0 0
    %1414 = vmatpush1.bf16.msra.mxu0 0
    %1415 = vmatprep.subr.bf16.mxu0 0
    %1416 = vmatpush1.bf16.msra.mxu0 0
    %1417 = vmatprep.subr.bf16.mxu0 0
    %1418 = vmatpush1.bf16.msra.mxu0 0
    %1419 = vmatprep.subr.bf16.mxu0 0
    %1420 = vmatpush1.bf16.msra.mxu0 0
    %1421 = vmatprep.subr.bf16.mxu0 0
    %1422 = vmatpush1.bf16.msra.mxu0 0
    %1423 = vmatprep.subr.bf16.mxu0 0
    %1424 = vmatpush1.bf16.msra.mxu0 0
    %1425 = vmatprep.subr.bf16.mxu0 0
    %1426 = vmatpush1.bf16.msra.mxu0 0
    %1427 = vmatprep.subr.bf16.mxu0 0
    %1428 = vmatpush1.bf16.msra.mxu0 0
    %1429 = vmatprep.subr.bf16.mxu0 0
    %1430 = vmatpush1.bf16.msra.mxu0 0
    %1431 = vmatprep.subr.bf16.mxu0 0
    %1432 = vmatpush1.bf16.msra.mxu0 0
    %1433 = vmatprep.mubr.bf16.mxu0 0
    %1434 = vmatmul.mubr.bf16.gmra.mrb[0].mxu0 %v1399
    %v1435 = vpop.f32.mrb[0].mxu0
    %v1436 = vadd.f32 %v1384, %v1435
    %v1437 = vpop.f32.mrb[0].mxu0
    %v1438 = vpop.f32.mrb[0].mxu0
    %v1439 = vadd.f32 %v1384, %v1438
    %v1440 = vpop.f32.mrb[0].mxu0
    %1441 = vdwg.mxu0
    %v1442 = vmul.f32 %v1436, %v1436
    %v1443 = vmul.f32 %v1439, %v1439
    %v1444 = vmul.f32 %v1436, %v1442
    %v1445 = vmul.f32 %v1439, %v1443
    %v1446 = vmul.f32 %v1444, 0.044715
    %v1447 = vmul.f32 %v1445, 0.044715
    %v1448 = vadd.f32 %v1436, %v1446
    %v1449 = vadd.f32 %v1439, %v1447
    %v1450 = vmul.f32 %v1448, 0.7978846
    %v1451 = vmul.f32 %v1449, 0.7978846
    %v1452 = vtanh.pop %v1450
    %v1453 = vtanh.pop %v1451
    %v1454 = vadd.f32 %v1452, 1.0
    %v1455 = vadd.f32 %v1453, 1.0
    %v1456 = vmul.f32 %v1454, 0.5
    %v1457 = vmul.f32 %v1455, 0.5
    %v1458 = vmul.f32 %v1436, %v1456
    %v1459 = vmul.f32 %v1439, %v1457
    %v1460 = vpack.c.bf16 %v1459, %v1458
    %v1462 = vlaneseq
    %v1463 = vshrl.u32 %v1462, 7
    %v1464 = vsub.s32 0, %v1463
    %v1465 = vrot.slane %v1376, %v1464
    %v1475 = vunpack.c.l.b16 %v1368
    %v1476 = vunpack.c.l.b16 %v1369
    %v1477 = vunpack.c.l.b16 %v1370
    %v1478 = vunpack.c.l.b16 %v1371
    %v1479 = vunpack.c.l.b16 %v1372
    %v1480 = vunpack.c.l.b16 %v1373
    %v1481 = vunpack.c.l.b16 %v1374
    %v1482 = vunpack.c.l.b16 %v1375
    %v1483 = vpack.c.b16 %v1476, %v1475
    %v1484 = vpack.c.b16 %v1478, %v1477
    %v1485 = vpack.c.b16 %v1480, %v1479
    %v1486 = vpack.c.b16 %v1482, %v1481
    %vm1491 = vcmask 523264
    %v1493 = vsel %vm1491, %v1460, 0
    %1495 = vmatprep.subr.bf16.mxu0 0
    %1496 = vmatpush1.bf16.msra.mxu0 %v1483
    %1497 = vmatprep.subr.bf16.mxu0 0
    %1498 = vmatpush1.bf16.msra.mxu0 %v1484
    %1499 = vmatprep.subr.bf16.mxu0 0
    %1500 = vmatpush1.bf16.msra.mxu0 %v1485
    %1501 = vmatprep.subr.bf16.mxu0 0
    %1502 = vmatpush1.bf16.msra.mxu0 %v1486
    %1503 = vmatprep.subr.bf16.mxu0 0
    %1504 = vmatpush1.bf16.msra.mxu0 0
    %1505 = vmatprep.subr.bf16.mxu0 0
    %1506 = vmatpush1.bf16.msra.mxu0 0
    %1507 = vmatprep.subr.bf16.mxu0 0
    %1508 = vmatpush1.bf16.msra.mxu0 0
    %1509 = vmatprep.subr.bf16.mxu0 0
    %1510 = vmatpush1.bf16.msra.mxu0 0
    %1511 = vmatprep.subr.bf16.mxu0 0
    %1512 = vmatpush1.bf16.msra.mxu0 0
    %1513 = vmatprep.subr.bf16.mxu0 0
    %1514 = vmatpush1.bf16.msra.mxu0 0
    %1515 = vmatprep.subr.bf16.mxu0 0
    %1516 = vmatpush1.bf16.msra.mxu0 0
    %1517 = vmatprep.subr.bf16.mxu0 0
    %1518 = vmatpush1.bf16.msra.mxu0 0
    %1519 = vmatprep.subr.bf16.mxu0 0
    %1520 = vmatpush1.bf16.msra.mxu0 0
    %1521 = vmatprep.subr.bf16.mxu0 0
    %1522 = vmatpush1.bf16.msra.mxu0 0
    %1523 = vmatprep.subr.bf16.mxu0 0
    %1524 = vmatpush1.bf16.msra.mxu0 0
    %1525 = vmatprep.subr.bf16.mxu0 0
    %1526 = vmatpush1.bf16.msra.mxu0 0
    %1527 = vmatprep.mubr.bf16.mxu0 0
    %1528 = vmatmul.mubr.bf16.gmra.mrb[0].mxu0 %v1493
    %v1529 = vpop.f32.mrb[0].mxu0
    %v1530 = vadd.f32 %v1465, %v1529
    %v1531 = vpop.f32.mrb[0].mxu0
    %v1532 = vpop.f32.mrb[0].mxu0
    %v1533 = vadd.f32 %v1465, %v1532
    %v1534 = vpop.f32.mrb[0].mxu0
    %1535 = vdwg.mxu0
    %v1536 = vadd.f32 %v1530, %v1361
    %v1537 = vadd.f32 %v1533, %v1362
    %v1538 = vsel %vm213, %v1536, 0.0
    %1539 = vadd.xlane.f32.xlu0 %v1538
    %v1540 = vpop.xlane.xlu0 %1539
    %v1541 = vsel %vm213, %v1537, 0.0
    %1542 = vadd.xlane.f32.xlu0 %v1541
    %v1543 = vpop.xlane.xlu0 %1542
    %v1544 = vmul.f32 %v1540, %v220
    %v1545 = vmul.f32 %v1543, %v220
    %v1546 = vsub.f32 %v1536, %v1544
    %v1547 = vsub.f32 %v1537, %v1545
    %v1548 = vmul.f32 %v1546, %v1546
    %v1549 = vmul.f32 %v1547, %v1547
    %v1550 = vsel %vm213, %v1548, 0.0
    %1551 = vadd.xlane.f32.xlu0 %v1550
    %v1552 = vpop.xlane.xlu0 %1551
    %v1553 = vsel %vm213, %v1549, 0.0
    %1554 = vadd.xlane.f32.xlu0 %v1553
    %v1555 = vpop.xlane.xlu0 %1554
    %v1556 = vmul.f32 %v1552, %v220
    %v1557 = vmul.f32 %v1555, %v220
    %v1558 = vadd.f32 %v1556, 1e-12
    %v1559 = vadd.f32 %v1557, 1e-12
    %v1560 = vrsqrt.pop %v1558
    %v1561 = vrsqrt.pop %v1559
    %v1562 = vmul.f32 %v1546, %v1560
    %v1563 = vmul.f32 %v1547, %v1561
    %v1565 = vlaneseq
    %v1566 = vshrl.u32 %v1565, 7
    %v1567 = vsub.s32 0, %v1566
    %v1568 = vrot.slane %v1377, %v1567
    %v1570 = vmul.f32 %v1562, %v1568
    %v1571 = vmul.f32 %v1563, %v1568
    %v1573 = vlaneseq
    %v1574 = vshrl.u32 %v1573, 7
    %v1575 = vsub.s32 0, %v1574
    %v1576 = vrot.slane %v1378, %v1575
    %v1578 = vadd.f32 %v1570, %v1576
    %v1579 = vadd.f32 %v1571, %v1576
    %v1580 = vld [vmem:[%s33] sm:$0xf]
    %v1581 = vld [vmem:[%s33 + $0x4] sm:$0xf]
    %v1582 = vld [vmem:[%s33 + $0x8] sm:$0xf]
    %v1583 = vld [vmem:[%s33 + $0xc] sm:$0xf]
    %v1584 = vld [vmem:[%s35] sm:$0x1]
    %v1585 = vpack.c.bf16 %v1579, %v1578
    %v1587 = vlaneseq
    %v1588 = vshrl.u32 %v1587, 7
    %v1589 = vsub.s32 0, %v1588
    %v1590 = vrot.slane %v1584, %v1589
    %v1595 = vunpack.c.l.b16 %v1580
    %v1596 = vunpack.c.l.b16 %v1581
    %v1597 = vunpack.c.l.b16 %v1582
    %v1598 = vunpack.c.l.b16 %v1583
    %v1599 = vpack.c.b16 %v1596, %v1595
    %v1600 = vpack.c.b16 %v1598, %v1597
    %1601 = vrot.lane.b32.xlu0 %v1599, 96
    %v1602 = vpop.permute.xlu0 %1601
    %1603 = vrot.lane.b32.xlu0 %v1600, 96
    %v1604 = vpop.permute.xlu0 %1603
    %1607 = vrot.lane.b32.xlu0 %v1590, 96
    %v1608 = vpop.permute.xlu0 %1607
    %v1611 = vsel %vm213, %v1585, 0
    %1613 = vmatprep.subr.bf16.mxu0 0
    %1614 = vmatpush1.bf16.msra.mxu0 %v1602
    %1615 = vmatprep.subr.bf16.mxu0 0
    %1616 = vmatpush1.bf16.msra.mxu0 %v1604
    %1617 = vmatprep.subr.bf16.mxu0 0
    %1618 = vmatpush1.bf16.msra.mxu0 0
    %1619 = vmatprep.subr.bf16.mxu0 0
    %1620 = vmatpush1.bf16.msra.mxu0 0
    %1621 = vmatprep.subr.bf16.mxu0 0
    %1622 = vmatpush1.bf16.msra.mxu0 0
    %1623 = vmatprep.subr.bf16.mxu0 0
    %1624 = vmatpush1.bf16.msra.mxu0 0
    %1625 = vmatprep.subr.bf16.mxu0 0
    %1626 = vmatpush1.bf16.msra.mxu0 0
    %1627 = vmatprep.subr.bf16.mxu0 0
    %1628 = vmatpush1.bf16.msra.mxu0 0
    %1629 = vmatprep.subr.bf16.mxu0 0
    %1630 = vmatpush1.bf16.msra.mxu0 0
    %1631 = vmatprep.subr.bf16.mxu0 0
    %1632 = vmatpush1.bf16.msra.mxu0 0
    %1633 = vmatprep.subr.bf16.mxu0 0
    %1634 = vmatpush1.bf16.msra.mxu0 0
    %1635 = vmatprep.subr.bf16.mxu0 0
    %1636 = vmatpush1.bf16.msra.mxu0 0
    %1637 = vmatprep.subr.bf16.mxu0 0
    %1638 = vmatpush1.bf16.msra.mxu0 0
    %1639 = vmatprep.subr.bf16.mxu0 0
    %1640 = vmatpush1.bf16.msra.mxu0 0
    %1641 = vmatprep.subr.bf16.mxu0 0
    %1642 = vmatpush1.bf16.msra.mxu0 0
    %1643 = vmatprep.subr.bf16.mxu0 0
    %1644 = vmatpush1.bf16.msra.mxu0 0
    %1645 = vmatprep.mubr.bf16.mxu0 0
    %1646 = vmatmul.mubr.bf16.gmra.mrb[0].mxu0 %v1611
    %v1647 = vpop.f32.mrb[0].mxu0
    %v1648 = vadd.f32 %v1608, %v1647
    %v1649 = vpop.f32.mrb[0].mxu0
    %v1650 = vpop.f32.mrb[0].mxu0
    %v1651 = vadd.f32 %v1608, %v1650
    %v1652 = vpop.f32.mrb[0].mxu0
    %1653 = vdwg.mxu0
    %v1654 = vpack.c.bf16 %v1578, %v1578
    %v1655 = vpack.c.bf16 %v1579, %v1579
    %v1659 = vunpack.c.l.b16 %v1654
    %v1660 = vunpack.c.l.b16 %v1655
    %v1661 = vrot.slane %v1660, 7
    %vm1662 = vcmask 1041409
    %v1663 = vsel %vm1662, %v1661, %v1659
    %v1664 = vpack.c.b16 %v1663, %v1663
    %v1668 = vsel %vm213, %v1664, 0
    %1670 = vmatprep.subr.bf16.mxu0 0
    %1671 = vmatpush1.bf16.msra.mxu0 %v1599
    %1672 = vmatprep.subr.bf16.mxu0 0
    %1673 = vmatpush1.bf16.msra.mxu0 %v1600
    %1674 = vmatprep.subr.bf16.mxu0 0
    %1675 = vmatpush1.bf16.msra.mxu0 0
    %1676 = vmatprep.subr.bf16.mxu0 0
    %1677 = vmatpush1.bf16.msra.mxu0 0
    %1678 = vmatprep.subr.bf16.mxu0 0
    %1679 = vmatpush1.bf16.msra.mxu0 0
    %1680 = vmatprep.subr.bf16.mxu0 0
    %1681 = vmatpush1.bf16.msra.mxu0 0
    %1682 = vmatprep.subr.bf16.mxu0 0
    %1683 = vmatpush1.bf16.msra.mxu0 0
    %1684 = vmatprep.subr.bf16.mxu0 0
    %1685 = vmatpush1.bf16.msra.mxu0 0
    %1686 = vmatprep.subr.bf16.mxu0 0
    %1687 = vmatpush1.bf16.msra.mxu0 0
    %1688 = vmatprep.subr.bf16.mxu0 0
    %1689 = vmatpush1.bf16.msra.mxu0 0
    %1690 = vmatprep.subr.bf16.mxu0 0
    %1691 = vmatpush1.bf16.msra.mxu0 0
    %1692 = vmatprep.subr.bf16.mxu0 0
    %1693 = vmatpush1.bf16.msra.mxu0 0
    %1694 = vmatprep.subr.bf16.mxu0 0
    %1695 = vmatpush1.bf16.msra.mxu0 0
    %1696 = vmatprep.subr.bf16.mxu0 0
    %1697 = vmatpush1.bf16.msra.mxu0 0
    %1698 = vmatprep.subr.bf16.mxu0 0
    %1699 = vmatpush1.bf16.msra.mxu0 0
    %1700 = vmatprep.subr.bf16.mxu0 0
    %1701 = vmatpush1.bf16.msra.mxu0 0
    %1702 = vmatprep.mubr.bf16.mxu0 0
    %1703 = vmatmul.mubr.bf16.gmra.mrb[0].mxu0 %v1668
    %v1704 = vpop.f32.mrb[0].mxu0
    %v1705 = vadd.f32 %v1590, %v1704
    %v1706 = vpop.f32.mrb[0].mxu0
    %v1707 = vpop.f32.mrb[0].mxu0
    %v1708 = vpop.f32.mrb[0].mxu0
    %1709 = vdwg.mxu0
    %v1712 = vunpack.c.l.s4 1966171168
    %v1713 = vunpack.c.0.s8 %v1712
    %v1714 = vlaneseq
    %v1715 = vshrl.u32 %v1714, 7
    %v1716 = vsub.s32 %v1713, %v1715
    %v1717 = vrot.slane %v1705, %v1716
    %v1718 = vcombine.high %v1717, %v1717
    %v1720 = vunpack.c.l.s4 1966171168
    %v1721 = vunpack.c.0.s8 %v1720
    %v1722 = vlaneseq
    %v1723 = vshrl.u32 %v1722, 7
    %v1724 = vsub.s32 %v1721, %v1723
    %v1725 = vrot.slane %v1717, %v1724
    %v1727 = vunpack.c.l.s4 1966171168
    %v1728 = vunpack.c.0.s8 %v1727
    %v1729 = vlaneseq
    %v1730 = vshrl.u32 %v1729, 7
    %v1731 = vsub.s32 %v1728, %v1730
    %v1732 = vrot.slane %v1718, %v1731
    %v1735 = vpack.c.bf16 %v1725, %v1725
    %v1736 = vpack.c.bf16 %v1732, %v1732
    %v1737 = vpack.c.bf16 %v1648, %v1648
    %v1738 = vpack.c.bf16 %v1651, %v1651
    %v1740 = vsel %vm340, %v1735, 0
    %v1743 = vsel %vm340, %v1737, 0
    %1745 = vmatprep.subr.bf16.mxu0 0
    %1746 = vmatpush1.bf16.xpose.msra.mxu0 %v1743
    %1747 = vmatprep.subr.bf16.mxu0 0
    %1748 = vmatpush1.bf16.xpose.msra.mxu0 0
    %1749 = vmatprep.subr.bf16.mxu0 0
    %1750 = vmatpush1.bf16.xpose.msra.mxu0 0
    %1751 = vmatprep.subr.bf16.mxu0 0
    %1752 = vmatpush1.bf16.xpose.msra.mxu0 0
    %1753 = vmatprep.subr.bf16.mxu0 0
    %1754 = vmatpush1.bf16.xpose.msra.mxu0 0
    %1755 = vmatprep.subr.bf16.mxu0 0
    %1756 = vmatpush1.bf16.xpose.msra.mxu0 0
    %1757 = vmatprep.subr.bf16.mxu0 0
    %1758 = vmatpush1.bf16.xpose.msra.mxu0 0
    %1759 = vmatprep.subr.bf16.mxu0 0
    %1760 = vmatpush1.bf16.xpose.msra.mxu0 0
    %1761 = vmatprep.subr.bf16.mxu0 0
    %1762 = vmatpush1.bf16.xpose.msra.mxu0 0
    %1763 = vmatprep.subr.bf16.mxu0 0
    %1764 = vmatpush1.bf16.xpose.msra.mxu0 0
    %1765 = vmatprep.subr.bf16.mxu0 0
    %1766 = vmatpush1.bf16.xpose.msra.mxu0 0
    %1767 = vmatprep.subr.bf16.mxu0 0
    %1768 = vmatpush1.bf16.xpose.msra.mxu0 0
    %1769 = vmatprep.subr.bf16.mxu0 0
    %1770 = vmatpush1.bf16.xpose.msra.mxu0 0
    %1771 = vmatprep.subr.bf16.mxu0 0
    %1772 = vmatpush1.bf16.xpose.msra.mxu0 0
    %1773 = vmatprep.subr.bf16.mxu0 0
    %1774 = vmatpush1.bf16.xpose.msra.mxu0 0
    %1775 = vmatprep.subr.bf16.mxu0 0
    %1776 = vmatpush1.bf16.xpose.msra.mxu0 0
    %1777 = vmatprep.mubr.bf16.mxu0 0
    %1778 = vmatmul.mubr.bf16.gmra.mrb[0].mxu0 %v1740
    %v1779 = vpop.f32.mrb[0].mxu0
    %v1780 = vadd.f32 %v199, %v1779
    %v1781 = vpop.f32.mrb[0].mxu0
    %v1782 = vpop.f32.mrb[0].mxu0
    %v1783 = vpop.f32.mrb[0].mxu0
    %1784 = vdwg.mxu0
    %v1786 = vsel %vm340, %v1736, 0
    %v1789 = vsel %vm340, %v1738, 0
    %1791 = vmatprep.subr.bf16.mxu0 0
    %1792 = vmatpush1.bf16.xpose.msra.mxu0 %v1789
    %1793 = vmatprep.subr.bf16.mxu0 0
    %1794 = vmatpush1.bf16.xpose.msra.mxu0 0
    %1795 = vmatprep.subr.bf16.mxu0 0
    %1796 = vmatpush1.bf16.xpose.msra.mxu0 0
    %1797 = vmatprep.subr.bf16.mxu0 0
    %1798 = vmatpush1.bf16.xpose.msra.mxu0 0
    %1799 = vmatprep.subr.bf16.mxu0 0
    %1800 = vmatpush1.bf16.xpose.msra.mxu0 0
    %1801 = vmatprep.subr.bf16.mxu0 0
    %1802 = vmatpush1.bf16.xpose.msra.mxu0 0
    %1803 = vmatprep.subr.bf16.mxu0 0
    %1804 = vmatpush1.bf16.xpose.msra.mxu0 0
    %1805 = vmatprep.subr.bf16.mxu0 0
    %1806 = vmatpush1.bf16.xpose.msra.mxu0 0
    %1807 = vmatprep.subr.bf16.mxu0 0
    %1808 = vmatpush1.bf16.xpose.msra.mxu0 0
    %1809 = vmatprep.subr.bf16.mxu0 0
    %1810 = vmatpush1.bf16.xpose.msra.mxu0 0
    %1811 = vmatprep.subr.bf16.mxu0 0
    %1812 = vmatpush1.bf16.xpose.msra.mxu0 0
    %1813 = vmatprep.subr.bf16.mxu0 0
    %1814 = vmatpush1.bf16.xpose.msra.mxu0 0
    %1815 = vmatprep.subr.bf16.mxu0 0
    %1816 = vmatpush1.bf16.xpose.msra.mxu0 0
    %1817 = vmatprep.subr.bf16.mxu0 0
    %1818 = vmatpush1.bf16.xpose.msra.mxu0 0
    %1819 = vmatprep.subr.bf16.mxu0 0
    %1820 = vmatpush1.bf16.xpose.msra.mxu0 0
    %1821 = vmatprep.subr.bf16.mxu0 0
    %1822 = vmatpush1.bf16.xpose.msra.mxu0 0
    %1823 = vmatprep.mubr.bf16.mxu0 0
    %1824 = vmatmul.mubr.bf16.gmra.mrb[0].mxu0 %v1786
    %v1825 = vpop.f32.mrb[0].mxu0
    %v1826 = vadd.f32 %v206, %v1825
    %v1827 = vpop.f32.mrb[0].mxu0
    %v1828 = vpop.f32.mrb[0].mxu0
    %v1829 = vpop.f32.mrb[0].mxu0
    %1830 = vdwg.mxu0
    %vm1831 = vcmask 57344
    %v1832 = vsel %vm1831, %v1780, -inf
    %1833 = vmax.xlane.f32.xlu0 %v1832
    %v1834 = vpop.xlane.xlu0 %1833
    %v1835 = vsel %vm1831, %v1826, -inf
    %1836 = vmax.xlane.f32.xlu0 %v1835
    %v1837 = vpop.xlane.xlu0 %1836
    %v1838 = vsub.f32 %v1780, %v1834
    %v1839 = vsub.f32 %v1826, %v1837
    %v1840 = vmul.f32 %v1838, 1.442695
    %v1841 = vpow.pop %v1840
    %v1842 = vmul.f32 %v1839, 1.442695
    %v1843 = vpow.pop %v1842
    %v1844 = vsel %vm1831, %v1841, 0.0
    %1845 = vadd.xlane.f32.xlu0 %v1844
    %v1846 = vpop.xlane.xlu0 %1845
    %v1847 = vsel %vm1831, %v1843, 0.0
    %1848 = vadd.xlane.f32.xlu0 %v1847
    %v1849 = vpop.xlane.xlu0 %1848
    %v1850 = vrcp.pop %v1846
    %v1851 = vrcp.pop %v1849
    %v1852 = vmul.f32 %v1841, %v1850
    %v1853 = vmul.f32 %v1843, %v1851
    %v1854 = vpack.c.bf16 %v1852, %v1852
    %v1855 = vpack.c.bf16 %v1853, %v1853
    %1857 = vrot.lane.b32.xlu0 %v1737, 96
    %v1858 = vpop.permute.xlu0 %1857
    %v1860 = vsel %vm340, %v1854, 0
    %v1863 = vsel %vm465, %v1858, 0
    %1865 = vmatprep.subr.bf16.mxu0 0
    %1866 = vmatpush1.bf16.msra.mxu0 %v1863
    %1867 = vmatprep.subr.bf16.mxu0 0
    %1868 = vmatpush1.bf16.msra.mxu0 0
    %1869 = vmatprep.subr.bf16.mxu0 0
    %1870 = vmatpush1.bf16.msra.mxu0 0
    %1871 = vmatprep.subr.bf16.mxu0 0
    %1872 = vmatpush1.bf16.msra.mxu0 0
    %1873 = vmatprep.subr.bf16.mxu0 0
    %1874 = vmatpush1.bf16.msra.mxu0 0
    %1875 = vmatprep.subr.bf16.mxu0 0
    %1876 = vmatpush1.bf16.msra.mxu0 0
    %1877 = vmatprep.subr.bf16.mxu0 0
    %1878 = vmatpush1.bf16.msra.mxu0 0
    %1879 = vmatprep.subr.bf16.mxu0 0
    %1880 = vmatpush1.bf16.msra.mxu0 0
    %1881 = vmatprep.subr.bf16.mxu0 0
    %1882 = vmatpush1.bf16.msra.mxu0 0
    %1883 = vmatprep.subr.bf16.mxu0 0
    %1884 = vmatpush1.bf16.msra.mxu0 0
    %1885 = vmatprep.subr.bf16.mxu0 0
    %1886 = vmatpush1.bf16.msra.mxu0 0
    %1887 = vmatprep.subr.bf16.mxu0 0
    %1888 = vmatpush1.bf16.msra.mxu0 0
    %1889 = vmatprep.subr.bf16.mxu0 0
    %1890 = vmatpush1.bf16.msra.mxu0 0
    %1891 = vmatprep.subr.bf16.mxu0 0
    %1892 = vmatpush1.bf16.msra.mxu0 0
    %1893 = vmatprep.subr.bf16.mxu0 0
    %1894 = vmatpush1.bf16.msra.mxu0 0
    %1895 = vmatprep.subr.bf16.mxu0 0
    %1896 = vmatpush1.bf16.msra.mxu0 0
    %1897 = vmatprep.mubr.bf16.mxu0 0
    %1898 = vmatmul.mubr.bf16.gmra.mrb[0].mxu0 %v1860
    %v1899 = vpop.f32.mrb[0].mxu0
    %v1900 = vadd.f32 0.0, %v1899
    %v1901 = vpop.f32.mrb[0].mxu0
    %v1902 = vpop.f32.mrb[0].mxu0
    %v1903 = vpop.f32.mrb[0].mxu0
    %1904 = vdwg.mxu0
    %1906 = vrot.lane.b32.xlu0 %v1738, 96
    %v1907 = vpop.permute.xlu0 %1906
    %v1909 = vsel %vm340, %v1855, 0
    %v1912 = vsel %vm465, %v1907, 0
    %1914 = vmatprep.subr.bf16.mxu0 0
    %1915 = vmatpush1.bf16.msra.mxu0 %v1912
    %1916 = vmatprep.subr.bf16.mxu0 0
    %1917 = vmatpush1.bf16.msra.mxu0 0
    %1918 = vmatprep.subr.bf16.mxu0 0
    %1919 = vmatpush1.bf16.msra.mxu0 0
    %1920 = vmatprep.subr.bf16.mxu0 0
    %1921 = vmatpush1.bf16.msra.mxu0 0
    %1922 = vmatprep.subr.bf16.mxu0 0
    %1923 = vmatpush1.bf16.msra.mxu0 0
    %1924 = vmatprep.subr.bf16.mxu0 0
    %1925 = vmatpush1.bf16.msra.mxu0 0
    %1926 = vmatprep.subr.bf16.mxu0 0
    %1927 = vmatpush1.bf16.msra.mxu0 0
    %1928 = vmatprep.subr.bf16.mxu0 0
    %1929 = vmatpush1.bf16.msra.mxu0 0
    %1930 = vmatprep.subr.bf16.mxu0 0
    %1931 = vmatpush1.bf16.msra.mxu0 0
    %1932 = vmatprep.subr.bf16.mxu0 0
    %1933 = vmatpush1.bf16.msra.mxu0 0
    %1934 = vmatprep.subr.bf16.mxu0 0
    %1935 = vmatpush1.bf16.msra.mxu0 0
    %1936 = vmatprep.subr.bf16.mxu0 0
    %1937 = vmatpush1.bf16.msra.mxu0 0
    %1938 = vmatprep.subr.bf16.mxu0 0
    %1939 = vmatpush1.bf16.msra.mxu0 0
    %1940 = vmatprep.subr.bf16.mxu0 0
    %1941 = vmatpush1.bf16.msra.mxu0 0
    %1942 = vmatprep.subr.bf16.mxu0 0
    %1943 = vmatpush1.bf16.msra.mxu0 0
    %1944 = vmatprep.subr.bf16.mxu0 0
    %1945 = vmatpush1.bf16.msra.mxu0 0
    %1946 = vmatprep.mubr.bf16.mxu0 0
    %1947 = vmatmul.mubr.bf16.gmra.mrb[0].mxu0 %v1909
    %v1948 = vpop.f32.mrb[0].mxu0
    %v1949 = vadd.f32 0.0, %v1948
    %v1950 = vpop.f32.mrb[0].mxu0
    %v1951 = vpop.f32.mrb[0].mxu0
    %v1952 = vpop.f32.mrb[0].mxu0
    %1953 = vdwg.mxu0
    %1955 = vrot.lane.b32.xlu0 %v1735, 120
    %v1956 = vpop.permute.xlu0 %1955
    %1957 = vrot.lane.b32.xlu0 %v1737, 120
    %v1958 = vpop.permute.xlu0 %1957
    %v1960 = vsel %vm340, %v1956, 0
    %v1963 = vsel %vm340, %v1958, 0
    %1965 = vmatprep.subr.bf16.mxu0 0
    %1966 = vmatpush1.bf16.xpose.msra.mxu0 %v1963
    %1967 = vmatprep.subr.bf16.mxu0 0
    %1968 = vmatpush1.bf16.xpose.msra.mxu0 0
    %1969 = vmatprep.subr.bf16.mxu0 0
    %1970 = vmatpush1.bf16.xpose.msra.mxu0 0
    %1971 = vmatprep.subr.bf16.mxu0 0
    %1972 = vmatpush1.bf16.xpose.msra.mxu0 0
    %1973 = vmatprep.subr.bf16.mxu0 0
    %1974 = vmatpush1.bf16.xpose.msra.mxu0 0
    %1975 = vmatprep.subr.bf16.mxu0 0
    %1976 = vmatpush1.bf16.xpose.msra.mxu0 0
    %1977 = vmatprep.subr.bf16.mxu0 0
    %1978 = vmatpush1.bf16.xpose.msra.mxu0 0
    %1979 = vmatprep.subr.bf16.mxu0 0
    %1980 = vmatpush1.bf16.xpose.msra.mxu0 0
    %1981 = vmatprep.subr.bf16.mxu0 0
    %1982 = vmatpush1.bf16.xpose.msra.mxu0 0
    %1983 = vmatprep.subr.bf16.mxu0 0
    %1984 = vmatpush1.bf16.xpose.msra.mxu0 0
    %1985 = vmatprep.subr.bf16.mxu0 0
    %1986 = vmatpush1.bf16.xpose.msra.mxu0 0
    %1987 = vmatprep.subr.bf16.mxu0 0
    %1988 = vmatpush1.bf16.xpose.msra.mxu0 0
    %1989 = vmatprep.subr.bf16.mxu0 0
    %1990 = vmatpush1.bf16.xpose.msra.mxu0 0
    %1991 = vmatprep.subr.bf16.mxu0 0
    %1992 = vmatpush1.bf16.xpose.msra.mxu0 0
    %1993 = vmatprep.subr.bf16.mxu0 0
    %1994 = vmatpush1.bf16.xpose.msra.mxu0 0
    %1995 = vmatprep.subr.bf16.mxu0 0
    %1996 = vmatpush1.bf16.xpose.msra.mxu0 0
    %1997 = vmatprep.mubr.bf16.mxu0 0
    %1998 = vmatmul.mubr.bf16.gmra.mrb[0].mxu0 %v1960
    %v1999 = vpop.f32.mrb[0].mxu0
    %v2000 = vadd.f32 %v199, %v1999
    %v2001 = vpop.f32.mrb[0].mxu0
    %v2002 = vpop.f32.mrb[0].mxu0
    %v2003 = vpop.f32.mrb[0].mxu0
    %2004 = vdwg.mxu0
    %2006 = vrot.lane.b32.xlu0 %v1736, 120
    %v2007 = vpop.permute.xlu0 %2006
    %2008 = vrot.lane.b32.xlu0 %v1738, 120
    %v2009 = vpop.permute.xlu0 %2008
    %v2011 = vsel %vm340, %v2007, 0
    %v2014 = vsel %vm340, %v2009, 0
    %2016 = vmatprep.subr.bf16.mxu0 0
    %2017 = vmatpush1.bf16.xpose.msra.mxu0 %v2014
    %2018 = vmatprep.subr.bf16.mxu0 0
    %2019 = vmatpush1.bf16.xpose.msra.mxu0 0
    %2020 = vmatprep.subr.bf16.mxu0 0
    %2021 = vmatpush1.bf16.xpose.msra.mxu0 0
    %2022 = vmatprep.subr.bf16.mxu0 0
    %2023 = vmatpush1.bf16.xpose.msra.mxu0 0
    %2024 = vmatprep.subr.bf16.mxu0 0
    %2025 = vmatpush1.bf16.xpose.msra.mxu0 0
    %2026 = vmatprep.subr.bf16.mxu0 0
    %2027 = vmatpush1.bf16.xpose.msra.mxu0 0
    %2028 = vmatprep.subr.bf16.mxu0 0
    %2029 = vmatpush1.bf16.xpose.msra.mxu0 0
    %2030 = vmatprep.subr.bf16.mxu0 0
    %2031 = vmatpush1.bf16.xpose.msra.mxu0 0
    %2032 = vmatprep.subr.bf16.mxu0 0
    %2033 = vmatpush1.bf16.xpose.msra.mxu0 0
    %2034 = vmatprep.subr.bf16.mxu0 0
    %2035 = vmatpush1.bf16.xpose.msra.mxu0 0
    %2036 = vmatprep.subr.bf16.mxu0 0
    %2037 = vmatpush1.bf16.xpose.msra.mxu0 0
    %2038 = vmatprep.subr.bf16.mxu0 0
    %2039 = vmatpush1.bf16.xpose.msra.mxu0 0
    %2040 = vmatprep.subr.bf16.mxu0 0
    %2041 = vmatpush1.bf16.xpose.msra.mxu0 0
    %2042 = vmatprep.subr.bf16.mxu0 0
    %2043 = vmatpush1.bf16.xpose.msra.mxu0 0
    %2044 = vmatprep.subr.bf16.mxu0 0
    %2045 = vmatpush1.bf16.xpose.msra.mxu0 0
    %2046 = vmatprep.subr.bf16.mxu0 0
    %2047 = vmatpush1.bf16.xpose.msra.mxu0 0
    %2048 = vmatprep.mubr.bf16.mxu0 0
    %2049 = vmatmul.mubr.bf16.gmra.mrb[0].mxu0 %v2011
    %v2050 = vpop.f32.mrb[0].mxu0
    %v2051 = vadd.f32 %v206, %v2050
    %v2052 = vpop.f32.mrb[0].mxu0
    %v2053 = vpop.f32.mrb[0].mxu0
    %v2054 = vpop.f32.mrb[0].mxu0
    %2055 = vdwg.mxu0
    %v2056 = vsel %vm1831, %v2000, -inf
    %2057 = vmax.xlane.f32.xlu0 %v2056
    %v2058 = vpop.xlane.xlu0 %2057
    %v2059 = vsel %vm1831, %v2051, -inf
    %2060 = vmax.xlane.f32.xlu0 %v2059
    %v2061 = vpop.xlane.xlu0 %2060
    %v2062 = vsub.f32 %v2000, %v2058
    %v2063 = vsub.f32 %v2051, %v2061
    %v2064 = vmul.f32 %v2062, 1.442695
    %v2065 = vpow.pop %v2064
    %v2066 = vmul.f32 %v2063, 1.442695
    %v2067 = vpow.pop %v2066
    %v2068 = vsel %vm1831, %v2065, 0.0
    %2069 = vadd.xlane.f32.xlu0 %v2068
    %v2070 = vpop.xlane.xlu0 %2069
    %v2071 = vsel %vm1831, %v2067, 0.0
    %2072 = vadd.xlane.f32.xlu0 %v2071
    %v2073 = vpop.xlane.xlu0 %2072
    %v2074 = vrcp.pop %v2070
    %v2075 = vrcp.pop %v2073
    %v2076 = vmul.f32 %v2065, %v2074
    %v2077 = vmul.f32 %v2067, %v2075
    %v2078 = vpack.c.bf16 %v2076, %v2076
    %v2079 = vpack.c.bf16 %v2077, %v2077
    %2080 = vrot.lane.b32.xlu0 %v1737, 88
    %v2081 = vpop.permute.xlu0 %2080
    %v2083 = vsel %vm340, %v2078, 0
    %v2086 = vsel %vm465, %v2081, 0
    %2088 = vmatprep.subr.bf16.mxu0 0
    %2089 = vmatpush1.bf16.msra.mxu0 %v2086
    %2090 = vmatprep.subr.bf16.mxu0 0
    %2091 = vmatpush1.bf16.msra.mxu0 0
    %2092 = vmatprep.subr.bf16.mxu0 0
    %2093 = vmatpush1.bf16.msra.mxu0 0
    %2094 = vmatprep.subr.bf16.mxu0 0
    %2095 = vmatpush1.bf16.msra.mxu0 0
    %2096 = vmatprep.subr.bf16.mxu0 0
    %2097 = vmatpush1.bf16.msra.mxu0 0
    %2098 = vmatprep.subr.bf16.mxu0 0
    %2099 = vmatpush1.bf16.msra.mxu0 0
    %2100 = vmatprep.subr.bf16.mxu0 0
    %2101 = vmatpush1.bf16.msra.mxu0 0
    %2102 = vmatprep.subr.bf16.mxu0 0
    %2103 = vmatpush1.bf16.msra.mxu0 0
    %2104 = vmatprep.subr.bf16.mxu0 0
    %2105 = vmatpush1.bf16.msra.mxu0 0
    %2106 = vmatprep.subr.bf16.mxu0 0
    %2107 = vmatpush1.bf16.msra.mxu0 0
    %2108 = vmatprep.subr.bf16.mxu0 0
    %2109 = vmatpush1.bf16.msra.mxu0 0
    %2110 = vmatprep.subr.bf16.mxu0 0
    %2111 = vmatpush1.bf16.msra.mxu0 0
    %2112 = vmatprep.subr.bf16.mxu0 0
    %2113 = vmatpush1.bf16.msra.mxu0 0
    %2114 = vmatprep.subr.bf16.mxu0 0
    %2115 = vmatpush1.bf16.msra.mxu0 0
    %2116 = vmatprep.subr.bf16.mxu0 0
    %2117 = vmatpush1.bf16.msra.mxu0 0
    %2118 = vmatprep.subr.bf16.mxu0 0
    %2119 = vmatpush1.bf16.msra.mxu0 0
    %2120 = vmatprep.mubr.bf16.mxu0 0
    %2121 = vmatmul.mubr.bf16.gmra.mrb[0].mxu0 %v2083
    %v2122 = vpop.f32.mrb[0].mxu0
    %v2123 = vadd.f32 0.0, %v2122
    %v2124 = vpop.f32.mrb[0].mxu0
    %v2125 = vpop.f32.mrb[0].mxu0
    %v2126 = vpop.f32.mrb[0].mxu0
    %2127 = vdwg.mxu0
    %2128 = vrot.lane.b32.xlu0 %v1738, 88
    %v2129 = vpop.permute.xlu0 %2128
    %v2131 = vsel %vm340, %v2079, 0
    %v2134 = vsel %vm465, %v2129, 0
    %2136 = vmatprep.subr.bf16.mxu0 0
    %2137 = vmatpush1.bf16.msra.mxu0 %v2134
    %2138 = vmatprep.subr.bf16.mxu0 0
    %2139 = vmatpush1.bf16.msra.mxu0 0
    %2140 = vmatprep.subr.bf16.mxu0 0
    %2141 = vmatpush1.bf16.msra.mxu0 0
    %2142 = vmatprep.subr.bf16.mxu0 0
    %2143 = vmatpush1.bf16.msra.mxu0 0
    %2144 = vmatprep.subr.bf16.mxu0 0
    %2145 = vmatpush1.bf16.msra.mxu0 0
    %2146 = vmatprep.subr.bf16.mxu0 0
    %2147 = vmatpush1.bf16.msra.mxu0 0
    %2148 = vmatprep.subr.bf16.mxu0 0
    %2149 = vmatpush1.bf16.msra.mxu0 0
    %2150 = vmatprep.subr.bf16.mxu0 0
    %2151 = vmatpush1.bf16.msra.mxu0 0
    %2152 = vmatprep.subr.bf16.mxu0 0
    %2153 = vmatpush1.bf16.msra.mxu0 0
    %2154 = vmatprep.subr.bf16.mxu0 0
    %2155 = vmatpush1.bf16.msra.mxu0 0
    %2156 = vmatprep.subr.bf16.mxu0 0
    %2157 = vmatpush1.bf16.msra.mxu0 0
    %2158 = vmatprep.subr.bf16.mxu0 0
    %2159 = vmatpush1.bf16.msra.mxu0 0
    %2160 = vmatprep.subr.bf16.mxu0 0
    %2161 = vmatpush1.bf16.msra.mxu0 0
    %2162 = vmatprep.subr.bf16.mxu0 0
    %2163 = vmatpush1.bf16.msra.mxu0 0
    %2164 = vmatprep.subr.bf16.mxu0 0
    %2165 = vmatpush1.bf16.msra.mxu0 0
    %2166 = vmatprep.subr.bf16.mxu0 0
    %2167 = vmatpush1.bf16.msra.mxu0 0
    %2168 = vmatprep.mubr.bf16.mxu0 0
    %2169 = vmatmul.mubr.bf16.gmra.mrb[0].mxu0 %v2131
    %v2170 = vpop.f32.mrb[0].mxu0
    %v2171 = vadd.f32 0.0, %v2170
    %v2172 = vpop.f32.mrb[0].mxu0
    %v2173 = vpop.f32.mrb[0].mxu0
    %v2174 = vpop.f32.mrb[0].mxu0
    %2175 = vdwg.mxu0
    %2176 = vrot.lane.b32.xlu0 %v1735, 112
    %v2177 = vpop.permute.xlu0 %2176
    %2178 = vrot.lane.b32.xlu0 %v1737, 112
    %v2179 = vpop.permute.xlu0 %2178
    %v2181 = vsel %vm340, %v2177, 0
    %v2184 = vsel %vm340, %v2179, 0
    %2186 = vmatprep.subr.bf16.mxu0 0
    %2187 = vmatpush1.bf16.xpose.msra.mxu0 %v2184
    %2188 = vmatprep.subr.bf16.mxu0 0
    %2189 = vmatpush1.bf16.xpose.msra.mxu0 0
    %2190 = vmatprep.subr.bf16.mxu0 0
    %2191 = vmatpush1.bf16.xpose.msra.mxu0 0
    %2192 = vmatprep.subr.bf16.mxu0 0
    %2193 = vmatpush1.bf16.xpose.msra.mxu0 0
    %2194 = vmatprep.subr.bf16.mxu0 0
    %2195 = vmatpush1.bf16.xpose.msra.mxu0 0
    %2196 = vmatprep.subr.bf16.mxu0 0
    %2197 = vmatpush1.bf16.xpose.msra.mxu0 0
    %2198 = vmatprep.subr.bf16.mxu0 0
    %2199 = vmatpush1.bf16.xpose.msra.mxu0 0
    %2200 = vmatprep.subr.bf16.mxu0 0
    %2201 = vmatpush1.bf16.xpose.msra.mxu0 0
    %2202 = vmatprep.subr.bf16.mxu0 0
    %2203 = vmatpush1.bf16.xpose.msra.mxu0 0
    %2204 = vmatprep.subr.bf16.mxu0 0
    %2205 = vmatpush1.bf16.xpose.msra.mxu0 0
    %2206 = vmatprep.subr.bf16.mxu0 0
    %2207 = vmatpush1.bf16.xpose.msra.mxu0 0
    %2208 = vmatprep.subr.bf16.mxu0 0
    %2209 = vmatpush1.bf16.xpose.msra.mxu0 0
    %2210 = vmatprep.subr.bf16.mxu0 0
    %2211 = vmatpush1.bf16.xpose.msra.mxu0 0
    %2212 = vmatprep.subr.bf16.mxu0 0
    %2213 = vmatpush1.bf16.xpose.msra.mxu0 0
    %2214 = vmatprep.subr.bf16.mxu0 0
    %2215 = vmatpush1.bf16.xpose.msra.mxu0 0
    %2216 = vmatprep.subr.bf16.mxu0 0
    %2217 = vmatpush1.bf16.xpose.msra.mxu0 0
    %2218 = vmatprep.mubr.bf16.mxu0 0
    %2219 = vmatmul.mubr.bf16.gmra.mrb[0].mxu0 %v2181
    %v2220 = vpop.f32.mrb[0].mxu0
    %v2221 = vadd.f32 %v199, %v2220
    %v2222 = vpop.f32.mrb[0].mxu0
    %v2223 = vpop.f32.mrb[0].mxu0
    %v2224 = vpop.f32.mrb[0].mxu0
    %2225 = vdwg.mxu0
    %2226 = vrot.lane.b32.xlu0 %v1736, 112
    %v2227 = vpop.permute.xlu0 %2226
    %2228 = vrot.lane.b32.xlu0 %v1738, 112
    %v2229 = vpop.permute.xlu0 %2228
    %v2231 = vsel %vm340, %v2227, 0
    %v2234 = vsel %vm340, %v2229, 0
    %2236 = vmatprep.subr.bf16.mxu0 0
    %2237 = vmatpush1.bf16.xpose.msra.mxu0 %v2234
    %2238 = vmatprep.subr.bf16.mxu0 0
    %2239 = vmatpush1.bf16.xpose.msra.mxu0 0
    %2240 = vmatprep.subr.bf16.mxu0 0
    %2241 = vmatpush1.bf16.xpose.msra.mxu0 0
    %2242 = vmatprep.subr.bf16.mxu0 0
    %2243 = vmatpush1.bf16.xpose.msra.mxu0 0
    %2244 = vmatprep.subr.bf16.mxu0 0
    %2245 = vmatpush1.bf16.xpose.msra.mxu0 0
    %2246 = vmatprep.subr.bf16.mxu0 0
    %2247 = vmatpush1.bf16.xpose.msra.mxu0 0
    %2248 = vmatprep.subr.bf16.mxu0 0
    %2249 = vmatpush1.bf16.xpose.msra.mxu0 0
    %2250 = vmatprep.subr.bf16.mxu0 0
    %2251 = vmatpush1.bf16.xpose.msra.mxu0 0
    %2252 = vmatprep.subr.bf16.mxu0 0
    %2253 = vmatpush1.bf16.xpose.msra.mxu0 0
    %2254 = vmatprep.subr.bf16.mxu0 0
    %2255 = vmatpush1.bf16.xpose.msra.mxu0 0
    %2256 = vmatprep.subr.bf16.mxu0 0
    %2257 = vmatpush1.bf16.xpose.msra.mxu0 0
    %2258 = vmatprep.subr.bf16.mxu0 0
    %2259 = vmatpush1.bf16.xpose.msra.mxu0 0
    %2260 = vmatprep.subr.bf16.mxu0 0
    %2261 = vmatpush1.bf16.xpose.msra.mxu0 0
    %2262 = vmatprep.subr.bf16.mxu0 0
    %2263 = vmatpush1.bf16.xpose.msra.mxu0 0
    %2264 = vmatprep.subr.bf16.mxu0 0
    %2265 = vmatpush1.bf16.xpose.msra.mxu0 0
    %2266 = vmatprep.subr.bf16.mxu0 0
    %2267 = vmatpush1.bf16.xpose.msra.mxu0 0
    %2268 = vmatprep.mubr.bf16.mxu0 0
    %2269 = vmatmul.mubr.bf16.gmra.mrb[0].mxu0 %v2231
    %v2270 = vpop.f32.mrb[0].mxu0
    %v2271 = vadd.f32 %v206, %v2270
    %v2272 = vpop.f32.mrb[0].mxu0
    %v2273 = vpop.f32.mrb[0].mxu0
    %v2274 = vpop.f32.mrb[0].mxu0
    %2275 = vdwg.mxu0
    %v2276 = vsel %vm1831, %v2221, -inf
    %2277 = vmax.xlane.f32.xlu0 %v2276
    %v2278 = vpop.xlane.xlu0 %2277
    %v2279 = vsel %vm1831, %v2271, -inf
    %2280 = vmax.xlane.f32.xlu0 %v2279
    %v2281 = vpop.xlane.xlu0 %2280
    %v2282 = vsub.f32 %v2221, %v2278
    %v2283 = vsub.f32 %v2271, %v2281
    %v2284 = vmul.f32 %v2282, 1.442695
    %v2285 = vpow.pop %v2284
    %v2286 = vmul.f32 %v2283, 1.442695
    %v2287 = vpow.pop %v2286
    %v2288 = vsel %vm1831, %v2285, 0.0
    %2289 = vadd.xlane.f32.xlu0 %v2288
    %v2290 = vpop.xlane.xlu0 %2289
    %v2291 = vsel %vm1831, %v2287, 0.0
    %2292 = vadd.xlane.f32.xlu0 %v2291
    %v2293 = vpop.xlane.xlu0 %2292
    %v2294 = vrcp.pop %v2290
    %v2295 = vrcp.pop %v2293
    %v2296 = vmul.f32 %v2285, %v2294
    %v2297 = vmul.f32 %v2287, %v2295
    %v2298 = vpack.c.bf16 %v2296, %v2296
    %v2299 = vpack.c.bf16 %v2297, %v2297
    %2300 = vrot.lane.b32.xlu0 %v1737, 80
    %v2301 = vpop.permute.xlu0 %2300
    %v2303 = vsel %vm340, %v2298, 0
    %v2306 = vsel %vm465, %v2301, 0
    %2308 = vmatprep.subr.bf16.mxu0 0
    %2309 = vmatpush1.bf16.msra.mxu0 %v2306
    %2310 = vmatprep.subr.bf16.mxu0 0
    %2311 = vmatpush1.bf16.msra.mxu0 0
    %2312 = vmatprep.subr.bf16.mxu0 0
    %2313 = vmatpush1.bf16.msra.mxu0 0
    %2314 = vmatprep.subr.bf16.mxu0 0
    %2315 = vmatpush1.bf16.msra.mxu0 0
    %2316 = vmatprep.subr.bf16.mxu0 0
    %2317 = vmatpush1.bf16.msra.mxu0 0
    %2318 = vmatprep.subr.bf16.mxu0 0
    %2319 = vmatpush1.bf16.msra.mxu0 0
    %2320 = vmatprep.subr.bf16.mxu0 0
    %2321 = vmatpush1.bf16.msra.mxu0 0
    %2322 = vmatprep.subr.bf16.mxu0 0
    %2323 = vmatpush1.bf16.msra.mxu0 0
    %2324 = vmatprep.subr.bf16.mxu0 0
    %2325 = vmatpush1.bf16.msra.mxu0 0
    %2326 = vmatprep.subr.bf16.mxu0 0
    %2327 = vmatpush1.bf16.msra.mxu0 0
    %2328 = vmatprep.subr.bf16.mxu0 0
    %2329 = vmatpush1.bf16.msra.mxu0 0
    %2330 = vmatprep.subr.bf16.mxu0 0
    %2331 = vmatpush1.bf16.msra.mxu0 0
    %2332 = vmatprep.subr.bf16.mxu0 0
    %2333 = vmatpush1.bf16.msra.mxu0 0
    %2334 = vmatprep.subr.bf16.mxu0 0
    %2335 = vmatpush1.bf16.msra.mxu0 0
    %2336 = vmatprep.subr.bf16.mxu0 0
    %2337 = vmatpush1.bf16.msra.mxu0 0
    %2338 = vmatprep.subr.bf16.mxu0 0
    %2339 = vmatpush1.bf16.msra.mxu0 0
    %2340 = vmatprep.mubr.bf16.mxu0 0
    %2341 = vmatmul.mubr.bf16.gmra.mrb[0].mxu0 %v2303
    %v2342 = vpop.f32.mrb[0].mxu0
    %v2343 = vadd.f32 0.0, %v2342
    %v2344 = vpop.f32.mrb[0].mxu0
    %v2345 = vpop.f32.mrb[0].mxu0
    %v2346 = vpop.f32.mrb[0].mxu0
    %2347 = vdwg.mxu0
    %2348 = vrot.lane.b32.xlu0 %v1738, 80
    %v2349 = vpop.permute.xlu0 %2348
    %v2351 = vsel %vm340, %v2299, 0
    %v2354 = vsel %vm465, %v2349, 0
    %2356 = vmatprep.subr.bf16.mxu0 0
    %2357 = vmatpush1.bf16.msra.mxu0 %v2354
    %2358 = vmatprep.subr.bf16.mxu0 0
    %2359 = vmatpush1.bf16.msra.mxu0 0
    %2360 = vmatprep.subr.bf16.mxu0 0
    %2361 = vmatpush1.bf16.msra.mxu0 0
    %2362 = vmatprep.subr.bf16.mxu0 0
    %2363 = vmatpush1.bf16.msra.mxu0 0
    %2364 = vmatprep.subr.bf16.mxu0 0
    %2365 = vmatpush1.bf16.msra.mxu0 0
    %2366 = vmatprep.subr.bf16.mxu0 0
    %2367 = vmatpush1.bf16.msra.mxu0 0
    %2368 = vmatprep.subr.bf16.mxu0 0
    %2369 = vmatpush1.bf16.msra.mxu0 0
    %2370 = vmatprep.subr.bf16.mxu0 0
    %2371 = vmatpush1.bf16.msra.mxu0 0
    %2372 = vmatprep.subr.bf16.mxu0 0
    %2373 = vmatpush1.bf16.msra.mxu0 0
    %2374 = vmatprep.subr.bf16.mxu0 0
    %2375 = vmatpush1.bf16.msra.mxu0 0
    %2376 = vmatprep.subr.bf16.mxu0 0
    %2377 = vmatpush1.bf16.msra.mxu0 0
    %2378 = vmatprep.subr.bf16.mxu0 0
    %2379 = vmatpush1.bf16.msra.mxu0 0
    %2380 = vmatprep.subr.bf16.mxu0 0
    %2381 = vmatpush1.bf16.msra.mxu0 0
    %2382 = vmatprep.subr.bf16.mxu0 0
    %2383 = vmatpush1.bf16.msra.mxu0 0
    %2384 = vmatprep.subr.bf16.mxu0 0
    %2385 = vmatpush1.bf16.msra.mxu0 0
    %2386 = vmatprep.subr.bf16.mxu0 0
    %2387 = vmatpush1.bf16.msra.mxu0 0
    %2388 = vmatprep.mubr.bf16.mxu0 0
    %2389 = vmatmul.mubr.bf16.gmra.mrb[0].mxu0 %v2351
    %v2390 = vpop.f32.mrb[0].mxu0
    %v2391 = vadd.f32 0.0, %v2390
    %v2392 = vpop.f32.mrb[0].mxu0
    %v2393 = vpop.f32.mrb[0].mxu0
    %v2394 = vpop.f32.mrb[0].mxu0
    %2395 = vdwg.mxu0
    %2396 = vrot.lane.b32.xlu0 %v1735, 104
    %v2397 = vpop.permute.xlu0 %2396
    %2398 = vrot.lane.b32.xlu0 %v1737, 104
    %v2399 = vpop.permute.xlu0 %2398
    %v2401 = vsel %vm340, %v2397, 0
    %v2404 = vsel %vm340, %v2399, 0
    %2406 = vmatprep.subr.bf16.mxu0 0
    %2407 = vmatpush1.bf16.xpose.msra.mxu0 %v2404
    %2408 = vmatprep.subr.bf16.mxu0 0
    %2409 = vmatpush1.bf16.xpose.msra.mxu0 0
    %2410 = vmatprep.subr.bf16.mxu0 0
    %2411 = vmatpush1.bf16.xpose.msra.mxu0 0
    %2412 = vmatprep.subr.bf16.mxu0 0
    %2413 = vmatpush1.bf16.xpose.msra.mxu0 0
    %2414 = vmatprep.subr.bf16.mxu0 0
    %2415 = vmatpush1.bf16.xpose.msra.mxu0 0
    %2416 = vmatprep.subr.bf16.mxu0 0
    %2417 = vmatpush1.bf16.xpose.msra.mxu0 0
    %2418 = vmatprep.subr.bf16.mxu0 0
    %2419 = vmatpush1.bf16.xpose.msra.mxu0 0
    %2420 = vmatprep.subr.bf16.mxu0 0
    %2421 = vmatpush1.bf16.xpose.msra.mxu0 0
    %2422 = vmatprep.subr.bf16.mxu0 0
    %2423 = vmatpush1.bf16.xpose.msra.mxu0 0
    %2424 = vmatprep.subr.bf16.mxu0 0
    %2425 = vmatpush1.bf16.xpose.msra.mxu0 0
    %2426 = vmatprep.subr.bf16.mxu0 0
    %2427 = vmatpush1.bf16.xpose.msra.mxu0 0
    %2428 = vmatprep.subr.bf16.mxu0 0
    %2429 = vmatpush1.bf16.xpose.msra.mxu0 0
    %2430 = vmatprep.subr.bf16.mxu0 0
    %2431 = vmatpush1.bf16.xpose.msra.mxu0 0
    %2432 = vmatprep.subr.bf16.mxu0 0
    %2433 = vmatpush1.bf16.xpose.msra.mxu0 0
    %2434 = vmatprep.subr.bf16.mxu0 0
    %2435 = vmatpush1.bf16.xpose.msra.mxu0 0
    %2436 = vmatprep.subr.bf16.mxu0 0
    %2437 = vmatpush1.bf16.xpose.msra.mxu0 0
    %2438 = vmatprep.mubr.bf16.mxu0 0
    %2439 = vmatmul.mubr.bf16.gmra.mrb[0].mxu0 %v2401
    %v2440 = vpop.f32.mrb[0].mxu0
    %v2441 = vadd.f32 %v199, %v2440
    %v2442 = vpop.f32.mrb[0].mxu0
    %v2443 = vpop.f32.mrb[0].mxu0
    %v2444 = vpop.f32.mrb[0].mxu0
    %2445 = vdwg.mxu0
    %2446 = vrot.lane.b32.xlu0 %v1736, 104
    %v2447 = vpop.permute.xlu0 %2446
    %2448 = vrot.lane.b32.xlu0 %v1738, 104
    %v2449 = vpop.permute.xlu0 %2448
    %v2451 = vsel %vm340, %v2447, 0
    %v2454 = vsel %vm340, %v2449, 0
    %2456 = vmatprep.subr.bf16.mxu0 0
    %2457 = vmatpush1.bf16.xpose.msra.mxu0 %v2454
    %2458 = vmatprep.subr.bf16.mxu0 0
    %2459 = vmatpush1.bf16.xpose.msra.mxu0 0
    %2460 = vmatprep.subr.bf16.mxu0 0
    %2461 = vmatpush1.bf16.xpose.msra.mxu0 0
    %2462 = vmatprep.subr.bf16.mxu0 0
    %2463 = vmatpush1.bf16.xpose.msra.mxu0 0
    %2464 = vmatprep.subr.bf16.mxu0 0
    %2465 = vmatpush1.bf16.xpose.msra.mxu0 0
    %2466 = vmatprep.subr.bf16.mxu0 0
    %2467 = vmatpush1.bf16.xpose.msra.mxu0 0
    %2468 = vmatprep.subr.bf16.mxu0 0
    %2469 = vmatpush1.bf16.xpose.msra.mxu0 0
    %2470 = vmatprep.subr.bf16.mxu0 0
    %2471 = vmatpush1.bf16.xpose.msra.mxu0 0
    %2472 = vmatprep.subr.bf16.mxu0 0
    %2473 = vmatpush1.bf16.xpose.msra.mxu0 0
    %2474 = vmatprep.subr.bf16.mxu0 0
    %2475 = vmatpush1.bf16.xpose.msra.mxu0 0
    %2476 = vmatprep.subr.bf16.mxu0 0
    %2477 = vmatpush1.bf16.xpose.msra.mxu0 0
    %2478 = vmatprep.subr.bf16.mxu0 0
    %2479 = vmatpush1.bf16.xpose.msra.mxu0 0
    %2480 = vmatprep.subr.bf16.mxu0 0
    %2481 = vmatpush1.bf16.xpose.msra.mxu0 0
    %2482 = vmatprep.subr.bf16.mxu0 0
    %2483 = vmatpush1.bf16.xpose.msra.mxu0 0
    %2484 = vmatprep.subr.bf16.mxu0 0
    %2485 = vmatpush1.bf16.xpose.msra.mxu0 0
    %2486 = vmatprep.subr.bf16.mxu0 0
    %2487 = vmatpush1.bf16.xpose.msra.mxu0 0
    %2488 = vmatprep.mubr.bf16.mxu0 0
    %2489 = vmatmul.mubr.bf16.gmra.mrb[0].mxu0 %v2451
    %v2490 = vpop.f32.mrb[0].mxu0
    %v2491 = vadd.f32 %v206, %v2490
    %v2492 = vpop.f32.mrb[0].mxu0
    %v2493 = vpop.f32.mrb[0].mxu0
    %v2494 = vpop.f32.mrb[0].mxu0
    %2495 = vdwg.mxu0
    %v2496 = vsel %vm1831, %v2441, -inf
    %2497 = vmax.xlane.f32.xlu0 %v2496
    %v2498 = vpop.xlane.xlu0 %2497
    %v2499 = vsel %vm1831, %v2491, -inf
    %2500 = vmax.xlane.f32.xlu0 %v2499
    %v2501 = vpop.xlane.xlu0 %2500
    %v2502 = vsub.f32 %v2441, %v2498
    %v2503 = vsub.f32 %v2491, %v2501
    %v2504 = vmul.f32 %v2502, 1.442695
    %v2505 = vpow.pop %v2504
    %v2506 = vmul.f32 %v2503, 1.442695
    %v2507 = vpow.pop %v2506
    %v2508 = vsel %vm1831, %v2505, 0.0
    %2509 = vadd.xlane.f32.xlu0 %v2508
    %v2510 = vpop.xlane.xlu0 %2509
    %v2511 = vsel %vm1831, %v2507, 0.0
    %2512 = vadd.xlane.f32.xlu0 %v2511
    %v2513 = vpop.xlane.xlu0 %2512
    %v2514 = vrcp.pop %v2510
    %v2515 = vrcp.pop %v2513
    %v2516 = vmul.f32 %v2505, %v2514
    %v2517 = vmul.f32 %v2507, %v2515
    %v2518 = vpack.c.bf16 %v2516, %v2516
    %v2519 = vpack.c.bf16 %v2517, %v2517
    %2520 = vrot.lane.b32.xlu0 %v1737, 72
    %v2521 = vpop.permute.xlu0 %2520
    %v2523 = vsel %vm340, %v2518, 0
    %v2526 = vsel %vm465, %v2521, 0
    %2528 = vmatprep.subr.bf16.mxu0 0
    %2529 = vmatpush1.bf16.msra.mxu0 %v2526
    %2530 = vmatprep.subr.bf16.mxu0 0
    %2531 = vmatpush1.bf16.msra.mxu0 0
    %2532 = vmatprep.subr.bf16.mxu0 0
    %2533 = vmatpush1.bf16.msra.mxu0 0
    %2534 = vmatprep.subr.bf16.mxu0 0
    %2535 = vmatpush1.bf16.msra.mxu0 0
    %2536 = vmatprep.subr.bf16.mxu0 0
    %2537 = vmatpush1.bf16.msra.mxu0 0
    %2538 = vmatprep.subr.bf16.mxu0 0
    %2539 = vmatpush1.bf16.msra.mxu0 0
    %2540 = vmatprep.subr.bf16.mxu0 0
    %2541 = vmatpush1.bf16.msra.mxu0 0
    %2542 = vmatprep.subr.bf16.mxu0 0
    %2543 = vmatpush1.bf16.msra.mxu0 0
    %2544 = vmatprep.subr.bf16.mxu0 0
    %2545 = vmatpush1.bf16.msra.mxu0 0
    %2546 = vmatprep.subr.bf16.mxu0 0
    %2547 = vmatpush1.bf16.msra.mxu0 0
    %2548 = vmatprep.subr.bf16.mxu0 0
    %2549 = vmatpush1.bf16.msra.mxu0 0
    %2550 = vmatprep.subr.bf16.mxu0 0
    %2551 = vmatpush1.bf16.msra.mxu0 0
    %2552 = vmatprep.subr.bf16.mxu0 0
    %2553 = vmatpush1.bf16.msra.mxu0 0
    %2554 = vmatprep.subr.bf16.mxu0 0
    %2555 = vmatpush1.bf16.msra.mxu0 0
    %2556 = vmatprep.subr.bf16.mxu0 0
    %2557 = vmatpush1.bf16.msra.mxu0 0
    %2558 = vmatprep.subr.bf16.mxu0 0
    %2559 = vmatpush1.bf16.msra.mxu0 0
    %2560 = vmatprep.mubr.bf16.mxu0 0
    %2561 = vmatmul.mubr.bf16.gmra.mrb[0].mxu0 %v2523
    %v2562 = vpop.f32.mrb[0].mxu0
    %v2563 = vadd.f32 0.0, %v2562
    %v2564 = vpop.f32.mrb[0].mxu0
    %v2565 = vpop.f32.mrb[0].mxu0
    %v2566 = vpop.f32.mrb[0].mxu0
    %2567 = vdwg.mxu0
    %2568 = vrot.lane.b32.xlu0 %v1738, 72
    %v2569 = vpop.permute.xlu0 %2568
    %v2571 = vsel %vm340, %v2519, 0
    %v2574 = vsel %vm465, %v2569, 0
    %2576 = vmatprep.subr.bf16.mxu0 0
    %2577 = vmatpush1.bf16.msra.mxu0 %v2574
    %2578 = vmatprep.subr.bf16.mxu0 0
    %2579 = vmatpush1.bf16.msra.mxu0 0
    %2580 = vmatprep.subr.bf16.mxu0 0
    %2581 = vmatpush1.bf16.msra.mxu0 0
    %2582 = vmatprep.subr.bf16.mxu0 0
    %2583 = vmatpush1.bf16.msra.mxu0 0
    %2584 = vmatprep.subr.bf16.mxu0 0
    %2585 = vmatpush1.bf16.msra.mxu0 0
    %2586 = vmatprep.subr.bf16.mxu0 0
    %2587 = vmatpush1.bf16.msra.mxu0 0
    %2588 = vmatprep.subr.bf16.mxu0 0
    %2589 = vmatpush1.bf16.msra.mxu0 0
    %2590 = vmatprep.subr.bf16.mxu0 0
    %2591 = vmatpush1.bf16.msra.mxu0 0
    %2592 = vmatprep.subr.bf16.mxu0 0
    %2593 = vmatpush1.bf16.msra.mxu0 0
    %2594 = vmatprep.subr.bf16.mxu0 0
    %2595 = vmatpush1.bf16.msra.mxu0 0
    %2596 = vmatprep.subr.bf16.mxu0 0
    %2597 = vmatpush1.bf16.msra.mxu0 0
    %2598 = vmatprep.subr.bf16.mxu0 0
    %2599 = vmatpush1.bf16.msra.mxu0 0
    %2600 = vmatprep.subr.bf16.mxu0 0
    %2601 = vmatpush1.bf16.msra.mxu0 0
    %2602 = vmatprep.subr.bf16.mxu0 0
    %2603 = vmatpush1.bf16.msra.mxu0 0
    %2604 = vmatprep.subr.bf16.mxu0 0
    %2605 = vmatpush1.bf16.msra.mxu0 0
    %2606 = vmatprep.subr.bf16.mxu0 0
    %2607 = vmatpush1.bf16.msra.mxu0 0
    %2608 = vmatprep.mubr.bf16.mxu0 0
    %2609 = vmatmul.mubr.bf16.gmra.mrb[0].mxu0 %v2571
    %v2610 = vpop.f32.mrb[0].mxu0
    %v2611 = vadd.f32 0.0, %v2610
    %v2612 = vpop.f32.mrb[0].mxu0
    %v2613 = vpop.f32.mrb[0].mxu0
    %v2614 = vpop.f32.mrb[0].mxu0
    %2615 = vdwg.mxu0
    %v2618 = vrot.slane %v1949, 7
    %v2619 = vsel %vm1662, %v2618, %v1900
    %v2623 = vrot.slane %v2171, 7
    %v2624 = vsel %vm1662, %v2623, %v2123
    %2625 = vrot.lane.b32.xlu0 %v2624, 8
    %v2626 = vpop.permute.xlu0 %2625
    %v2630 = vrot.slane %v2391, 7
    %v2631 = vsel %vm1662, %v2630, %v2343
    %2632 = vrot.lane.b32.xlu0 %v2631, 16
    %v2633 = vpop.permute.xlu0 %2632
    %v2637 = vrot.slane %v2611, 7
    %v2638 = vsel %vm1662, %v2637, %v2563
    %2639 = vrot.lane.b32.xlu0 %v2638, 24
    %v2640 = vpop.permute.xlu0 %2639
    %v2642 = vsel %vm340, %v2619, %v2626
    %v2643 = vsel %vm1243, %v2642, %v2633
    %v2644 = vsel %vm1246, %v2643, %v2640
    %v2645 = vld [vmem:[%s37] sm:$0xf]
    %v2646 = vld [vmem:[%s37 + $0x4] sm:$0xf]
    %v2647 = vld [vmem:[%s37 + $0x8] sm:$0xf]
    %v2648 = vld [vmem:[%s37 + $0xc] sm:$0xf]
    %v2649 = vpack.c.bf16 %v2644, %v2644
    %v2650 = vld [vmem:[%s39] sm:$0x1]
    %v2652 = vlaneseq
    %v2653 = vshrl.u32 %v2652, 7
    %v2654 = vsub.s32 0, %v2653
    %v2655 = vrot.slane %v2650, %v2654
    %v2661 = vunpack.c.l.b16 %v2645
    %v2662 = vunpack.c.l.b16 %v2646
    %v2663 = vunpack.c.l.b16 %v2647
    %v2664 = vunpack.c.l.b16 %v2648
    %v2665 = vpack.c.b16 %v2662, %v2661
    %v2666 = vpack.c.b16 %v2664, %v2663
    %v2670 = vsel %vm213, %v2649, 0
    %2672 = vmatprep.subr.bf16.mxu0 0
    %2673 = vmatpush1.bf16.msra.mxu0 %v2665
    %2674 = vmatprep.subr.bf16.mxu0 0
    %2675 = vmatpush1.bf16.msra.mxu0 %v2666
    %2676 = vmatprep.subr.bf16.mxu0 0
    %2677 = vmatpush1.bf16.msra.mxu0 0
    %2678 = vmatprep.subr.bf16.mxu0 0
    %2679 = vmatpush1.bf16.msra.mxu0 0
    %2680 = vmatprep.subr.bf16.mxu0 0
    %2681 = vmatpush1.bf16.msra.mxu0 0
    %2682 = vmatprep.subr.bf16.mxu0 0
    %2683 = vmatpush1.bf16.msra.mxu0 0
    %2684 = vmatprep.subr.bf16.mxu0 0
    %2685 = vmatpush1.bf16.msra.mxu0 0
    %2686 = vmatprep.subr.bf16.mxu0 0
    %2687 = vmatpush1.bf16.msra.mxu0 0
    %2688 = vmatprep.subr.bf16.mxu0 0
    %2689 = vmatpush1.bf16.msra.mxu0 0
    %2690 = vmatprep.subr.bf16.mxu0 0
    %2691 = vmatpush1.bf16.msra.mxu0 0
    %2692 = vmatprep.subr.bf16.mxu0 0
    %2693 = vmatpush1.bf16.msra.mxu0 0
    %2694 = vmatprep.subr.bf16.mxu0 0
    %2695 = vmatpush1.bf16.msra.mxu0 0
    %2696 = vmatprep.subr.bf16.mxu0 0
    %2697 = vmatpush1.bf16.msra.mxu0 0
    %2698 = vmatprep.subr.bf16.mxu0 0
    %2699 = vmatpush1.bf16.msra.mxu0 0
    %2700 = vmatprep.subr.bf16.mxu0 0
    %2701 = vmatpush1.bf16.msra.mxu0 0
    %2702 = vmatprep.subr.bf16.mxu0 0
    %2703 = vmatpush1.bf16.msra.mxu0 0
    %2704 = vmatprep.mubr.bf16.mxu0 0
    %2705 = vmatmul.mubr.bf16.gmra.mrb[0].mxu0 %v2670
    %v2706 = vpop.f32.mrb[0].mxu0
    %v2707 = vadd.f32 %v2655, %v2706
    %v2708 = vpop.f32.mrb[0].mxu0
    %v2709 = vpop.f32.mrb[0].mxu0
    %v2710 = vpop.f32.mrb[0].mxu0
    %2711 = vdwg.mxu0
    %v2714 = vrot.slane %v1579, 7
    %v2715 = vsel %vm1662, %v2714, %v1578
    %v2717 = vadd.f32 %v2707, %v2715
    %v2718 = vld [vmem:[%s41] sm:$0x1]
    %v2719 = vld [vmem:[%s43] sm:$0x1]
    %vm2720 = vcmask 254976
    %v2721 = vsel %vm2720, %v2717, 0.0
    %2722 = vadd.xlane.f32.xlu0 %v2721
    %v2723 = vpop.xlane.xlu0 %2722
    %v2724 = vmul.f32 %v2723, %v220
    %v2725 = vsub.f32 %v2717, %v2724
    %v2726 = vmul.f32 %v2725, %v2725
    %v2727 = vsel %vm2720, %v2726, 0.0
    %2728 = vadd.xlane.f32.xlu0 %v2727
    %v2729 = vpop.xlane.xlu0 %2728
    %v2730 = vmul.f32 %v2729, %v220
    %v2731 = vadd.f32 %v2730, 1e-12
    %v2732 = vrsqrt.pop %v2731
    %v2733 = vmul.f32 %v2725, %v2732
    %v2735 = vlaneseq
    %v2736 = vshrl.u32 %v2735, 7
    %v2737 = vsub.s32 0, %v2736
    %v2738 = vrot.slane %v2718, %v2737
    %v2740 = vmul.f32 %v2733, %v2738
    %v2742 = vlaneseq
    %v2743 = vshrl.u32 %v2742, 7
    %v2744 = vsub.s32 0, %v2743
    %v2745 = vrot.slane %v2719, %v2744
    %v2747 = vadd.f32 %v2740, %v2745
    %v2748 = vld [vmem:[%s45] sm:$0xf]
    %v2749 = vld [vmem:[%s45 + $0x4] sm:$0xf]
    %v2750 = vld [vmem:[%s45 + $0x8] sm:$0xf]
    %v2751 = vld [vmem:[%s45 + $0xc] sm:$0xf]
    %v2752 = vld [vmem:[%s47] sm:$0x1]
    %v2753 = vld [vmem:[%s49] sm:$0xf]
    %v2754 = vld [vmem:[%s49 + $0x4] sm:$0xf]
    %v2755 = vld [vmem:[%s49 + $0x8] sm:$0xf]
    %v2756 = vld [vmem:[%s49 + $0xc] sm:$0xf]
    %v2757 = vld [vmem:[%s49 + $0x10] sm:$0xf]
    %v2758 = vld [vmem:[%s49 + $0x14] sm:$0xf]
    %v2759 = vld [vmem:[%s49 + $0x18] sm:$0xf]
    %v2760 = vld [vmem:[%s49 + $0x1c] sm:$0xf]
    %v2761 = vld [vmem:[%s51] sm:$0x1]
    %v2762 = vld [vmem:[%s53] sm:$0x1]
    %v2763 = vld [vmem:[%s55] sm:$0x1]
    %v2764 = vpack.c.bf16 %v2747, %v2747
    %v2766 = vlaneseq
    %v2767 = vshrl.u32 %v2766, 7
    %v2768 = vsub.s32 0, %v2767
    %v2769 = vrot.slane %v2752, %v2768
    %v2775 = vunpack.c.l.b16 %v2748
    %v2776 = vunpack.c.l.b16 %v2749
    %v2777 = vunpack.c.l.b16 %v2750
    %v2778 = vunpack.c.l.b16 %v2751
    %v2779 = vpack.c.b16 %v2776, %v2775
    %v2780 = vpack.c.b16 %v2778, %v2777
    %v2784 = vsel %vm213, %v2764, 0
    %2786 = vmatprep.subr.bf16.mxu0 0
    %2787 = vmatpush1.bf16.msra.mxu0 %v2779
    %2788 = vmatprep.subr.bf16.mxu0 0
    %2789 = vmatpush1.bf16.msra.mxu0 %v2780
    %2790 = vmatprep.subr.bf16.mxu0 0
    %2791 = vmatpush1.bf16.msra.mxu0 0
    %2792 = vmatprep.subr.bf16.mxu0 0
    %2793 = vmatpush1.bf16.msra.mxu0 0
    %2794 = vmatprep.subr.bf16.mxu0 0
    %2795 = vmatpush1.bf16.msra.mxu0 0
    %2796 = vmatprep.subr.bf16.mxu0 0
    %2797 = vmatpush1.bf16.msra.mxu0 0
    %2798 = vmatprep.subr.bf16.mxu0 0
    %2799 = vmatpush1.bf16.msra.mxu0 0
    %2800 = vmatprep.subr.bf16.mxu0 0
    %2801 = vmatpush1.bf16.msra.mxu0 0
    %2802 = vmatprep.subr.bf16.mxu0 0
    %2803 = vmatpush1.bf16.msra.mxu0 0
    %2804 = vmatprep.subr.bf16.mxu0 0
    %2805 = vmatpush1.bf16.msra.mxu0 0
    %2806 = vmatprep.subr.bf16.mxu0 0
    %2807 = vmatpush1.bf16.msra.mxu0 0
    %2808 = vmatprep.subr.bf16.mxu0 0
    %2809 = vmatpush1.bf16.msra.mxu0 0
    %2810 = vmatprep.subr.bf16.mxu0 0
    %2811 = vmatpush1.bf16.msra.mxu0 0
    %2812 = vmatprep.subr.bf16.mxu0 0
    %2813 = vmatpush1.bf16.msra.mxu0 0
    %2814 = vmatprep.subr.bf16.mxu0 0
    %2815 = vmatpush1.bf16.msra.mxu0 0
    %2816 = vmatprep.subr.bf16.mxu0 0
    %2817 = vmatpush1.bf16.msra.mxu0 0
    %2818 = vmatprep.mubr.bf16.mxu0 0
    %2819 = vmatmul.mubr.bf16.gmra.mrb[0].mxu0 %v2784
    %v2820 = vpop.f32.mrb[0].mxu0
    %v2821 = vadd.f32 %v2769, %v2820
    %v2822 = vpop.f32.mrb[0].mxu0
    %v2823 = vpop.f32.mrb[0].mxu0
    %v2824 = vpop.f32.mrb[0].mxu0
    %2825 = vdwg.mxu0
    %v2826 = vmul.f32 %v2821, %v2821
    %v2827 = vmul.f32 %v2821, %v2826
    %v2828 = vmul.f32 %v2827, 0.044715
    %v2829 = vadd.f32 %v2821, %v2828
    %v2830 = vmul.f32 %v2829, 0.7978846
    %v2831 = vtanh.pop %v2830
    %v2832 = vadd.f32 %v2831, 1.0
    %v2833 = vmul.f32 %v2832, 0.5
    %v2834 = vmul.f32 %v2821, %v2833
    %v2835 = vpack.c.bf16 %v2834, %v2834
    %v2837 = vlaneseq
    %v2838 = vshrl.u32 %v2837, 7
    %v2839 = vsub.s32 0, %v2838
    %v2840 = vrot.slane %v2761, %v2839
    %v2850 = vunpack.c.l.b16 %v2753
    %v2851 = vunpack.c.l.b16 %v2754
    %v2852 = vunpack.c.l.b16 %v2755
    %v2853 = vunpack.c.l.b16 %v2756
    %v2854 = vunpack.c.l.b16 %v2757
    %v2855 = vunpack.c.l.b16 %v2758
    %v2856 = vunpack.c.l.b16 %v2759
    %v2857 = vunpack.c.l.b16 %v2760
    %v2858 = vpack.c.b16 %v2851, %v2850
    %v2859 = vpack.c.b16 %v2853, %v2852
    %v2860 = vpack.c.b16 %v2855, %v2854
    %v2861 = vpack.c.b16 %v2857, %v2856
    %v2867 = vsel %vm1491, %v2835, 0
    %2869 = vmatprep.subr.bf16.mxu0 0
    %2870 = vmatpush1.bf16.msra.mxu0 %v2858
    %2871 = vmatprep.subr.bf16.mxu0 0
    %2872 = vmatpush1.bf16.msra.mxu0 %v2859
    %2873 = vmatprep.subr.bf16.mxu0 0
    %2874 = vmatpush1.bf16.msra.mxu0 %v2860
    %2875 = vmatprep.subr.bf16.mxu0 0
    %2876 = vmatpush1.bf16.msra.mxu0 %v2861
    %2877 = vmatprep.subr.bf16.mxu0 0
    %2878 = vmatpush1.bf16.msra.mxu0 0
    %2879 = vmatprep.subr.bf16.mxu0 0
    %2880 = vmatpush1.bf16.msra.mxu0 0
    %2881 = vmatprep.subr.bf16.mxu0 0
    %2882 = vmatpush1.bf16.msra.mxu0 0
    %2883 = vmatprep.subr.bf16.mxu0 0
    %2884 = vmatpush1.bf16.msra.mxu0 0
    %2885 = vmatprep.subr.bf16.mxu0 0
    %2886 = vmatpush1.bf16.msra.mxu0 0
    %2887 = vmatprep.subr.bf16.mxu0 0
    %2888 = vmatpush1.bf16.msra.mxu0 0
    %2889 = vmatprep.subr.bf16.mxu0 0
    %2890 = vmatpush1.bf16.msra.mxu0 0
    %2891 = vmatprep.subr.bf16.mxu0 0
    %2892 = vmatpush1.bf16.msra.mxu0 0
    %2893 = vmatprep.subr.bf16.mxu0 0
    %2894 = vmatpush1.bf16.msra.mxu0 0
    %2895 = vmatprep.subr.bf16.mxu0 0
    %2896 = vmatpush1.bf16.msra.mxu0 0
    %2897 = vmatprep.subr.bf16.mxu0 0
    %2898 = vmatpush1.bf16.msra.mxu0 0
    %2899 = vmatprep.subr.bf16.mxu0 0
    %2900 = vmatpush1.bf16.msra.mxu0 0
    %2901 = vmatprep.mubr.bf16.mxu0 0
    %2902 = vmatmul.mubr.bf16.gmra.mrb[0].mxu0 %v2867
    %v2903 = vpop.f32.mrb[0].mxu0
    %v2904 = vadd.f32 %v2840, %v2903
    %v2905 = vpop.f32.mrb[0].mxu0
    %v2906 = vpop.f32.mrb[0].mxu0
    %v2907 = vpop.f32.mrb[0].mxu0
    %2908 = vdwg.mxu0
    %v2909 = vadd.f32 %v2904, %v2747
    %v2910 = vsel %vm2720, %v2909, 0.0
    %2911 = vadd.xlane.f32.xlu0 %v2910
    %v2912 = vpop.xlane.xlu0 %2911
    %v2913 = vmul.f32 %v2912, %v220
    %v2914 = vsub.f32 %v2909, %v2913
    %v2915 = vmul.f32 %v2914, %v2914
    %v2916 = vsel %vm2720, %v2915, 0.0
    %2917 = vadd.xlane.f32.xlu0 %v2916
    %v2918 = vpop.xlane.xlu0 %2917
    %v2919 = vmul.f32 %v2918, %v220
    %v2920 = vadd.f32 %v2919, 1e-12
    %v2921 = vrsqrt.pop %v2920
    %v2922 = vmul.f32 %v2914, %v2921
    %v2924 = vlaneseq
    %v2925 = vshrl.u32 %v2924, 7
    %v2926 = vsub.s32 0, %v2925
    %v2927 = vrot.slane %v2762, %v2926
    %v2929 = vmul.f32 %v2922, %v2927
    %v2931 = vlaneseq
    %v2932 = vshrl.u32 %v2931, 7
    %v2933 = vsub.s32 0, %v2932
    %v2934 = vrot.slane %v2763, %v2933
    %v2936 = vadd.f32 %v2929, %v2934
    %v2937 = vld [vmem:[%s57] sm:$0xf]
    %v2938 = vld [vmem:[%s57 + $0x4] sm:$0xf]
    %v2939 = vld [vmem:[%s57 + $0x8] sm:$0xf]
    %v2940 = vld [vmem:[%s57 + $0xc] sm:$0xf]
    %v2941 = vpack.c.bf16 %v2936, %v2936
    %v2942 = vld [vmem:[%s59] sm:$0x1]
    %v2944 = vlaneseq
    %v2945 = vshrl.u32 %v2944, 7
    %v2946 = vsub.s32 0, %v2945
    %v2947 = vrot.slane %v2942, %v2946
    %v2953 = vunpack.c.l.b16 %v2937
    %v2954 = vunpack.c.l.b16 %v2938
    %v2955 = vunpack.c.l.b16 %v2939
    %v2956 = vunpack.c.l.b16 %v2940
    %v2957 = vpack.c.b16 %v2954, %v2953
    %v2958 = vpack.c.b16 %v2956, %v2955
    %v2962 = vsel %vm213, %v2941, 0
    %2964 = vmatprep.subr.bf16.mxu0 0
    %2965 = vmatpush1.bf16.msra.mxu0 %v2957
    %2966 = vmatprep.subr.bf16.mxu0 0
    %2967 = vmatpush1.bf16.msra.mxu0 %v2958
    %2968 = vmatprep.subr.bf16.mxu0 0
    %2969 = vmatpush1.bf16.msra.mxu0 0
    %2970 = vmatprep.subr.bf16.mxu0 0
    %2971 = vmatpush1.bf16.msra.mxu0 0
    %2972 = vmatprep.subr.bf16.mxu0 0
    %2973 = vmatpush1.bf16.msra.mxu0 0
    %2974 = vmatprep.subr.bf16.mxu0 0
    %2975 = vmatpush1.bf16.msra.mxu0 0
    %2976 = vmatprep.subr.bf16.mxu0 0
    %2977 = vmatpush1.bf16.msra.mxu0 0
    %2978 = vmatprep.subr.bf16.mxu0 0
    %2979 = vmatpush1.bf16.msra.mxu0 0
    %2980 = vmatprep.subr.bf16.mxu0 0
    %2981 = vmatpush1.bf16.msra.mxu0 0
    %2982 = vmatprep.subr.bf16.mxu0 0
    %2983 = vmatpush1.bf16.msra.mxu0 0
    %2984 = vmatprep.subr.bf16.mxu0 0
    %2985 = vmatpush1.bf16.msra.mxu0 0
    %2986 = vmatprep.subr.bf16.mxu0 0
    %2987 = vmatpush1.bf16.msra.mxu0 0
    %2988 = vmatprep.subr.bf16.mxu0 0
    %2989 = vmatpush1.bf16.msra.mxu0 0
    %2990 = vmatprep.subr.bf16.mxu0 0
    %2991 = vmatpush1.bf16.msra.mxu0 0
    %2992 = vmatprep.subr.bf16.mxu0 0
    %2993 = vmatpush1.bf16.msra.mxu0 0
    %2994 = vmatprep.subr.bf16.mxu0 0
    %2995 = vmatpush1.bf16.msra.mxu0 0
    %2996 = vmatprep.mubr.bf16.mxu0 0
    %2997 = vmatmul.mubr.bf16.gmra.mrb[0].mxu0 %v2962
    %v2998 = vpop.f32.mrb[0].mxu0
    %v2999 = vadd.f32 %v2947, %v2998
    %v3000 = vpop.f32.mrb[0].mxu0
    %v3001 = vpop.f32.mrb[0].mxu0
    %v3002 = vpop.f32.mrb[0].mxu0
    %3003 = vdwg.mxu0
    %v3004 = vmax.f32 %v2999, 0.0
    %v3005 = vld [vmem:[%s61] sm:$0xf]
    %v3006 = vld [vmem:[%s61 + $0x4] sm:$0xf]
    %v3007 = vpack.c.bf16 %v3004, %v3004
    %v3008 = vld [vmem:[%s63] sm:$0x1]
    %v3010 = vlaneseq
    %v3011 = vshrl.u32 %v3010, 7
    %v3012 = vsub.s32 0, %v3011
    %v3013 = vrot.slane %v3008, %v3012
    %v3017 = vunpack.c.l.b16 %v3005
    %v3018 = vunpack.c.l.b16 %v3006
    %v3019 = vpack.c.b16 %v3018, %v3017
    %v3022 = vsel %vm1243, %v3007, 0
    %3024 = vmatprep.subr.bf16.mxu0 0
    %3025 = vmatpush1.bf16.msra.mxu0 %v3019
    %3026 = vmatprep.subr.bf16.mxu0 0
    %3027 = vmatpush1.bf16.msra.mxu0 0
    %3028 = vmatprep.subr.bf16.mxu0 0
    %3029 = vmatpush1.bf16.msra.mxu0 0
    %3030 = vmatprep.subr.bf16.mxu0 0
    %3031 = vmatpush1.bf16.msra.mxu0 0
    %3032 = vmatprep.subr.bf16.mxu0 0
    %3033 = vmatpush1.bf16.msra.mxu0 0
    %3034 = vmatprep.subr.bf16.mxu0 0
    %3035 = vmatpush1.bf16.msra.mxu0 0
    %3036 = vmatprep.subr.bf16.mxu0 0
    %3037 = vmatpush1.bf16.msra.mxu0 0
    %3038 = vmatprep.subr.bf16.mxu0 0
    %3039 = vmatpush1.bf16.msra.mxu0 0
    %3040 = vmatprep.subr.bf16.mxu0 0
    %3041 = vmatpush1.bf16.msra.mxu0 0
    %3042 = vmatprep.subr.bf16.mxu0 0
    %3043 = vmatpush1.bf16.msra.mxu0 0
    %3044 = vmatprep.subr.bf16.mxu0 0
    %3045 = vmatpush1.bf16.msra.mxu0 0
    %3046 = vmatprep.subr.bf16.mxu0 0
    %3047 = vmatpush1.bf16.msra.mxu0 0
    %3048 = vmatprep.subr.bf16.mxu0 0
    %3049 = vmatpush1.bf16.msra.mxu0 0
    %3050 = vmatprep.subr.bf16.mxu0 0
    %3051 = vmatpush1.bf16.msra.mxu0 0
    %3052 = vmatprep.subr.bf16.mxu0 0
    %3053 = vmatpush1.bf16.msra.mxu0 0
    %3054 = vmatprep.subr.bf16.mxu0 0
    %3055 = vmatpush1.bf16.msra.mxu0 0
    %3056 = vmatprep.mubr.bf16.mxu0 0
    %3057 = vmatmul.mubr.bf16.gmra.mrb[0].mxu0 %v3022
    %v3058 = vpop.f32.mrb[0].mxu0
    %v3059 = vadd.f32 %v3013, %v3058
    %v3060 = vpop.f32.mrb[0].mxu0
    %v3061 = vpop.f32.mrb[0].mxu0
    %v3062 = vpop.f32.mrb[0].mxu0
    %3063 = vdwg.mxu0
    %vm3064 = vcmask 41984
    %v3065 = vsel %vm3064, %v3059, -inf
    %3066 = vmax.xlane.f32.xlu0 %v3065
    %v3067 = vpop.xlane.xlu0 %3066
    %v3068 = vsub.f32 %v3059, %v3067
    %v3069 = vmul.f32 %v3068, 1.442695
    %v3070 = vpow.pop %v3069
    %v3071 = vsel %vm3064, %v3070, 0.0
    %3072 = vadd.xlane.f32.xlu0 %v3071
    %v3073 = vpop.xlane.xlu0 %3072
    %v3074 = vrcp.pop %v3073
    %v3075 = vmul.f32 %v3070, %v3074
    %3076 = vst.msk [vmem:[#allocation10] sm:$0x3] %vm3064, %v3075
    // Predicated region
    $region146: #{tpu_custom_call.1} parent=1 // pred_check
      _
    $region147: #{tpu_custom_call.1} parent=1 // pred_check_branch
      %3078 = sbr.rel (0) target = $region149
    $region148: #{tpu_custom_call.1} parent=1 // pred_region
      %s3080 = ssub.s32 32, 32
      %3081 = vsyncadd [#allocation4], %s3080
      %s3083 = sshll.u32 [#allocation10], 4
      %s3084 = int_to_ptr.vmem [resolvable:$true] %s3083
      %3086 = dma.vmem_to_hbm [thread:$0]  %s3084, 32, %s65, [#allocation4]
    $region149: #{tpu_custom_call.1} parent=1 // pred_fallthru
      _
    // Predicated region
    $region150: #{tpu_custom_call.1} parent=1 // pred_check
      _
    $region151: #{tpu_custom_call.1} parent=1 // pred_check_branch
      %3088 = sbr.rel (0) target = $region153
    $region152: #{tpu_custom_call.1} parent=1 // pred_region
      %3089 = dma.done [#allocation4], 32
    $region153: #{tpu_custom_call.1} parent=1 // pred_fallthru
      _
    %3090 = vsyncpa [#allocation3], 1
    %3091 = vsyncpa [#allocation6], 1
    %3092 = vsyncpa [#allocation9], 1
    %3093 = vsyncpa [#allocation4], 1

</llo_original>
